<compile_context>
chip_gen: v7x
topology: tpu7x:2x2x1
jax: 0.10.0
libtpu: 0.0.40
codegen_flags: <defaults>
</compile_context>

<pallas_src>
import numpy as np
import jax
import jax.numpy as jnp
from jax import lax
from jax.experimental import pallas as pl
from jax.experimental.pallas import tpu as pltpu


def _round_up(x, m):
    return ((x + m - 1) // m) * m


# ---------------------------------------------------------------------------
# Kernel. Grid = (batch_blocks [parallel], vocab_tiles [arbitrary]).
# The LSTM recurrence runs once per batch block (at v == 0) into persistent VMEM
# scratch; every grid step then does one lane-dense (T*Bb, Hp) @ (Hp, tV) projection.
# ---------------------------------------------------------------------------
def decoder_rnn_kernel(x_ref,      # (Tt, bB, E)   f32   time-major inputs (features ++ embeddings)
                       mask_ref,   # (Tt, bB, 1)   f32   1.0 where t < length+1 else 0.0
                       wih_ref,    # (E, 4Hp)      bf16  input->gates (gate order i,f,g,o; lane-padded)
                       whh_ref,    # (Hp, 4Hp)     bf16  hidden->gates
                       bg_ref,     # (1, 4Hp)      f32   b_ih + b_hh (folded)
                       wout_ref,   # (Hp, tV)      bf16  output projection tile
                       bout_ref,   # (1, tV)       f32   output bias tile
                       out_ref,    # (Tt, bB, tV)  f32   logits tile
                       xg_ref,     # (Tt, bB, 4Hp) f32   scratch: x @ W_ih + b (kept f32 for gate math)
                       h_ref):     # (Tt, bB, Hp)  bf16  scratch: masked per-step hidden states
    T, Bb, E = x_ref.shape
    Hp = whh_ref.shape[0]

    # ---- recurrence: only for the first vocab tile of this batch block --------------
    @pl.when(pl.program_id(1) == 0)
    def _recurrence():
        # Hoisted input->gates GEMM (off the serial path): bf16 operands, f32 accumulate.
        x2d = x_ref[...].reshape(T * Bb, E).astype(jnp.bfloat16)
        xg = jnp.dot(x2d, wih_ref[...], preferred_element_type=jnp.float32) + bg_ref[...]
        xg_ref[...] = xg.reshape(T, Bb, 4 * Hp)

        whh = whh_ref[...]                                    # bf16, resident for the whole loop

        def step(t, carry):
            h, c = carry                                      # f32 (Bb, Hp)
            gates = xg_ref[t] + jnp.dot(h.astype(jnp.bfloat16), whh,
                                        preferred_element_type=jnp.float32)
            # Hp is a multiple of 128 -> each gate slice is a whole-vreg view.
            i_g = jax.nn.sigmoid(gates[:, 0 * Hp:1 * Hp])
            f_g = jax.nn.sigmoid(gates[:, 1 * Hp:2 * Hp])
            g_g = jnp.tanh(gates[:, 2 * Hp:3 * Hp])
            o_g = jax.nn.sigmoid(gates[:, 3 * Hp:4 * Hp])
            c_new = f_g * c + i_g * g_g
            h_new = o_g * jnp.tanh(c_new)
            # Length mask folded into the store (off the carry path); carry stays unmasked.
            h_ref[t] = (h_new * mask_ref[t]).astype(jnp.bfloat16)
            return h_new, c_new

        h0 = jnp.zeros((Bb, Hp), jnp.float32)
        c0 = jnp.zeros((Bb, Hp), jnp.float32)
        lax.fori_loop(0, T, step, (h0, c0), unroll=(True if T <= 16 else 4))

    # ---- batched output projection for this (batch block, vocab tile) ---------------
    hs = h_ref[...].reshape(T * Bb, Hp)                       # bf16 MXU operand
    logits = jnp.dot(hs, wout_ref[...], preferred_element_type=jnp.float32) + bout_ref[...]
    out_ref[...] = logits.reshape(T, Bb, -1).astype(out_ref.dtype)


# ---------------------------------------------------------------------------
# One-time parameter packing: pad per-gate width to 128 lanes, cast MXU weights to bf16.
# Zero-padding keeps the math exact (padded hidden units stay identically 0).
# ---------------------------------------------------------------------------
def pack_decoder_params(params):
    H = params["w_hh_t"].shape[0]
    E = params["w_ih_t"].shape[0]
    Hp = _round_up(H, 128)

    def pad_gates(w, rows):                       # (rows, 4H) -> (rows, 4Hp)
        w4 = w.reshape(rows, 4, H)
        w4 = jnp.pad(w4, ((0, 0), (0, 0), (0, Hp - H)))
        return w4.reshape(rows, 4 * Hp)

    wih = pad_gates(params["w_ih_t"], E).astype(jnp.bfloat16)
    whh = pad_gates(params["w_hh_t"], H)
    whh = jnp.pad(whh, ((0, Hp - H), (0, 0))).astype(jnp.bfloat16)
    bg = pad_gates(params["b_g"], 1).astype(jnp.float32)
    wout = jnp.pad(params["w_out_t"], ((0, Hp - H), (0, 0))).astype(jnp.bfloat16)
    bout = params["b_out"].astype(jnp.float32)
    return {"embed": params["embed"], "w_ih_t": wih, "w_hh_t": whh, "b_g": bg,
            "w_out_t": wout, "b_out": bout}


def _pick_v_tile(V):
    """Generation-aware vocab-tile width (lane-dense, divides V when V % 128 == 0)."""
    try:
        vmem_cap = pltpu.get_tpu_info().vmem_capacity_bytes
    except Exception:
        vmem_cap = 64 << 20                       # v7x-safe default
    tv = 2048 if vmem_cap >= (96 << 20) else 1024
    tv = min(V, max(128, _round_up(tv, 128)))
    while tv > 128 and V % tv:
        tv -= 128
    if V % tv:
        tv = V
    return tv


def decoder_rnn_forward_padded(packed, features, captions, lengths, *, tile_v=None):
    """Returns (B, T+1, V) logits; padded timesteps (t >= length+1) emit the bias only."""
    B, T = captions.shape
    Tt = T + 1
    E = packed["w_ih_t"].shape[0]
    Hp = packed["w_hh_t"].shape[0]
    V = packed["w_out_t"].shape[1]

    # Embedding gather + image-feature concat in plain JAX (no Pallas win at these sizes).
    emb = packed["embed"][captions]                                   # (B, T, E)
    x = jnp.concatenate([features[:, None, :], emb], axis=1)          # (B, Tt, E)
    x_tm = jnp.transpose(x, (1, 0, 2)).astype(jnp.float32)            # (Tt, B, E)

    # Batch blocking: pad to full sublane tiles; 2 parallel blocks (v7x) when >= 16 rows.
    if B > 8:
        Bp, n_b = _round_up(B, 16), 2
    else:
        Bp, n_b = 8, 1
    bB = Bp // n_b
    if Bp != B:
        x_tm = jnp.pad(x_tm, ((0, 0), (0, Bp - B), (0, 0)))

    # Length mask built on device (jit-friendly); padded rows get length 0.
    lengths = jnp.asarray(lengths, jnp.int32)
    lens_p1 = jnp.pad(lengths + 1, (0, Bp - B))
    t_idx = jnp.arange(Tt, dtype=jnp.int32)[:, None, None]
    mask = (t_idx < lens_p1[None, :, None]).astype(jnp.float32)       # (Tt, Bp, 1)

    tV = tile_v if tile_v is not None else _pick_v_tile(V)
    tV = min(V, max(128, _round_up(tV, 128)))
    while tV > 128 and V % tV:
        tV -= 128
    if V % tV:
        tV = V
    n_v = V // tV

    # Explicit scoped-VMEM budget: double-buffered blocks + persistent scratch + 25% headroom.
    def nbytes(shape, dtype):
        return int(np.prod(shape)) * jnp.dtype(dtype).itemsize

    block_bytes = 2 * (nbytes((Tt, bB, E), jnp.float32)
                       + nbytes((Tt, bB, 1), jnp.float32)
                       + nbytes((E, 4 * Hp), jnp.bfloat16)
                       + nbytes((Hp, 4 * Hp), jnp.bfloat16)
                       + nbytes((1, 4 * Hp), jnp.float32)
                       + nbytes((Hp, tV), jnp.bfloat16)
                       + nbytes((1, tV), jnp.float32)
                       + nbytes((Tt, bB, tV), jnp.float32))
    scratch_bytes = (nbytes((Tt, bB, 4 * Hp), jnp.float32)
                     + nbytes((Tt, bB, Hp), jnp.bfloat16))
    vmem_limit = int(min(100 << 20, max(32 << 20, int(1.25 * (block_bytes + scratch_bytes)))))

    grid_spec = pltpu.PrefetchScalarGridSpec(
        num_scalar_prefetch=0,
        grid=(n_b, n_v),
        in_specs=[
            pl.BlockSpec((Tt, bB, E), lambda b, v: (0, b, 0)),        # x
            pl.BlockSpec((Tt, bB, 1), lambda b, v: (0, b, 0)),        # mask
            pl.BlockSpec((E, 4 * Hp), lambda b, v: (0, 0)),           # W_ih
            pl.BlockSpec((Hp, 4 * Hp), lambda b, v: (0, 0)),          # W_hh
            pl.BlockSpec((1, 4 * Hp), lambda b, v: (0, 0)),           # b (gates)
            pl.BlockSpec((Hp, tV), lambda b, v: (0, v)),              # W_out tile
            pl.BlockSpec((1, tV), lambda b, v: (0, v)),               # b_out tile
        ],
        out_specs=pl.BlockSpec((Tt, bB, tV), lambda b, v: (0, b, v)),
        scratch_shapes=[pltpu.VMEM((Tt, bB, 4 * Hp), jnp.float32),    # xg (f32: gate math precision)
                        pltpu.VMEM((Tt, bB, Hp), jnp.bfloat16)],      # masked hidden states
    )

    out_tm = pl.pallas_call(
        decoder_rnn_kernel,
        out_shape=jax.ShapeDtypeStruct((Tt, Bp, V), jnp.float32),
        grid_spec=grid_spec,
        compiler_params=pltpu.CompilerParams(
            dimension_semantics=("parallel", "arbitrary"),
            vmem_limit_bytes=vmem_limit),
    )(x_tm, mask, packed["w_ih_t"], packed["w_hh_t"], packed["b_g"],
      packed["w_out_t"], packed["b_out"])

    out = jnp.transpose(out_tm, (1, 0, 2))                            # (Bp, Tt, V)
    return out[:B]


def decoder_rnn_forward(packed, features, captions, lengths, *, tile_v=None):
    """pad_packed_sequence semantics: slice to max(lengths)+1 timesteps (host-side)."""
    out = decoder_rnn_forward_padded(packed, features, captions, lengths, tile_v=tile_v)
    t_out = int(np.asarray(lengths).max()) + 1
    return out[:, :t_out]


# ---------------------------------------------------------------------------
# Pure-JAX reference with the SAME bf16-MXU / f32-gate numerics as the kernel
# (so the correctness check is tight). Relative to a pure-f32 PyTorch forward the
# bf16 MXU operands introduce ~1e-2-level differences by design.
# ---------------------------------------------------------------------------
def decoder_rnn_reference(params, features, captions, lengths):
    B, T = captions.shape
    H = params["w_hh_t"].shape[0]
    emb = params["embed"][captions]
    x = jnp.concatenate([features[:, None, :], emb], axis=1)
    x_tm = jnp.transpose(x, (1, 0, 2)).astype(jnp.bfloat16)           # (T+1, B, E)

    wih = params["w_ih_t"].astype(jnp.bfloat16)
    whh = params["w_hh_t"].astype(jnp.bfloat16)
    wout = params["w_out_t"].astype(jnp.bfloat16)

    def cell(carry, x_t):
        h, c = carry
        gates = (jnp.dot(x_t, wih, preferred_element_type=jnp.float32) + params["b_g"]
                 + jnp.dot(h.astype(jnp.bfloat16), whh, preferred_element_type=jnp.float32))
        i_g = jax.nn.sigmoid(gates[:, 0 * H:1 * H])
        f_g = jax.nn.sigmoid(gates[:, 1 * H:2 * H])
        g_g = jnp.tanh(gates[:, 2 * H:3 * H])
        o_g = jax.nn.sigmoid(gates[:, 3 * H:4 * H])
        c_new = f_g * c + i_g * g_g
        h_new = o_g * jnp.tanh(c_new)
        return (h_new, c_new), h_new

    h0 = jnp.zeros((B, H), jnp.float32)
    (_, _), hs = lax.scan(cell, (h0, h0), x_tm)                       # (T+1, B, H)
    lens_np = np.asarray(lengths)
    msk = jnp.arange(T + 1)[:, None, None] < (jnp.asarray(lens_np, jnp.int32) + 1)[None, :, None]
    hs = jnp.where(msk, hs, 0.0).astype(jnp.bfloat16)
    out = jnp.dot(hs.reshape(-1, H), wout, preferred_element_type=jnp.float32) + params["b_out"]
    out = jnp.transpose(out.reshape(T + 1, B, -1), (1, 0, 2))
    return out[:, :int(lens_np.max()) + 1]


def init_params(key, embed_size, hidden_size, vocab_size):
    ks = jax.random.split(key, 7)
    s = 1.0 / np.sqrt(hidden_size)
    return {
        "embed":   jax.random.normal(ks[0], (vocab_size, embed_size), jnp.float32),
        # LSTM weights pre-transposed for (B, E) @ (E, 4H); gate order i, f, g, o.
        "w_ih_t":  jax.random.uniform(ks[1], (embed_size, 4 * hidden_size), jnp.float32, -s, s),
        "w_hh_t":  jax.random.uniform(ks[2], (hidden_size, 4 * hidden_size), jnp.float32, -s, s),
        "b_g":     jax.random.uniform(ks[3], (1, 4 * hidden_size), jnp.float32, -s, s),  # b_ih + b_hh
        # Linear, pre-transposed for (B, H) @ (H, V).
        "w_out_t": jax.random.uniform(ks[4], (hidden_size, vocab_size), jnp.float32, -s, s),
        "b_out":   jax.random.uniform(ks[5], (1, vocab_size), jnp.float32, -s, s),
    }


if __name__ == "__main__":
    embed_size, hidden_size, vocab_size = 32, 32, 256
    B, T = 12, 8

    key = jax.random.PRNGKey(0)
    kp, kf, kc = jax.random.split(key, 3)
    params = init_params(kp, embed_size, hidden_size, vocab_size)
    packed = pack_decoder_params(params)     # one-time pad-to-128-lanes + bf16 cast

    features = jax.random.normal(kf, (B, embed_size), jnp.float32)
    captions = jax.random.randint(kc, (B, T), 0, vocab_size, jnp.int32)
    lengths = np.array([8, 5, 7, 3, 8, 2, 6, 4, 1, 8, 5, 7], dtype=np.int32)

    # tile_v=128 forces 2 vocab tiles; B=12 -> 2 parallel batch blocks of 8 rows each,
    # exercising the full grid (recurrence-under-when + persistent scratch) at toy size.
    out = decoder_rnn_forward(packed, features, captions, lengths, tile_v=128)
    out = jax.block_until_ready(out)

    ref = jax.block_until_ready(decoder_rnn_reference(params, features, captions, lengths))
    assert out.shape == (B, int(lengths.max()) + 1, vocab_size), out.shape
    np.testing.assert_allclose(np.asarray(out), np.asarray(ref), rtol=5e-3, atol=5e-3)

    print("KERNEL_OK")
</pallas_src>

<mosaic_0001>
module attributes {stable_mosaic.version = 11 : i64} {
  func.func @decoder_rnn_kernel(%arg0: i32, %arg1: i32, %arg2: memref<9x8x32xf32, #tpu.memory_space<vmem>>, %arg3: memref<9x8x1xf32, #tpu.memory_space<vmem>>, %arg4: memref<32x512xbf16, #tpu.memory_space<vmem>>, %arg5: memref<128x512xbf16, #tpu.memory_space<vmem>>, %arg6: memref<1x512xf32, #tpu.memory_space<vmem>>, %arg7: memref<128x128xbf16, #tpu.memory_space<vmem>>, %arg8: memref<1x128xf32, #tpu.memory_space<vmem>>, %arg9: memref<9x8x128xf32, #tpu.memory_space<vmem>>, %arg10: memref<9x8x512xf32, #tpu.memory_space<vmem>>, %arg11: memref<9x8x128xbf16, #tpu.memory_space<vmem>>) attributes {dimension_semantics = [#tpu.dimension_semantics<parallel>, #tpu.dimension_semantics<arbitrary>], iteration_bounds = array<i64: 2, 2>, scalar_prefetch = 0 : i64, scratch_operands = 2 : i64, tpu.core_type = #tpu.core_type<tc>, window_params = [{transform_indices = @transform_0, window_bounds = array<i64: 9, 8, 32>}, {transform_indices = @transform_1, window_bounds = array<i64: 9, 8, 1>}, {pipeline_mode = #tpu.pipeline_mode<synchronous>, transform_indices = @transform_2, window_bounds = array<i64: 32, 512>}, {pipeline_mode = #tpu.pipeline_mode<synchronous>, transform_indices = @transform_3, window_bounds = array<i64: 128, 512>}, {pipeline_mode = #tpu.pipeline_mode<synchronous>, transform_indices = @transform_4, window_bounds = array<i64: 1, 512>}, {transform_indices = @transform_5, window_bounds = array<i64: 128, 128>}, {transform_indices = @transform_6, window_bounds = array<i64: 1, 128>}, {transform_indices = @transform_7, window_bounds = array<i64: 9, 8, 128>}]} {
    %c0_i32 = arith.constant 0 : i32
    %0 = arith.cmpi eq, %arg1, %c0_i32 : i32
    %1 = arith.extui %0 : i1 to i32
    %c0_i32_0 = arith.constant 0 : i32
    %2 = arith.cmpi ne, %1, %c0_i32_0 : i32
    scf.if %2 {
      %c0_10 = arith.constant 0 : index
      %c0_11 = arith.constant 0 : index
      %c0_12 = arith.constant 0 : index
      %12 = vector.load %arg2[%c0_10, %c0_11, %c0_12] : memref<9x8x32xf32, #tpu.memory_space<vmem>>, vector<9x8x32xf32>
      %13 = vector.shape_cast %12 : vector<9x8x32xf32> to vector<72x32xf32>
      %14 = arith.truncf %13 : vector<72x32xf32> to vector<72x32xbf16>
      %c0_13 = arith.constant 0 : index
      %c0_14 = arith.constant 0 : index
      %15 = vector.load %arg4[%c0_13, %c0_14] : memref<32x512xbf16, #tpu.memory_space<vmem>>, vector<32x512xbf16>
      %cst_15 = arith.constant dense<0.000000e+00> : vector<72x512xf32>
      %16 = tpu.matmul %14, %15, %cst_15 {dimension_numbers = #tpu.dot_dimension_numbers<[1], [0], [0], [1], [0, 0, 1, 1], [], []>} : vector<72x32xbf16>, vector<32x512xbf16>, vector<72x512xf32> -> vector<72x512xf32>
      %c0_16 = arith.constant 0 : index
      %c0_17 = arith.constant 0 : index
      %17 = vector.load %arg6[%c0_16, %c0_17] : memref<1x512xf32, #tpu.memory_space<vmem>>, vector<1x512xf32>
      %18 = vector.broadcast %17 : vector<1x512xf32> to vector<72x512xf32>
      %19 = arith.addf %16, %18 : vector<72x512xf32>
      %20 = vector.shape_cast %19 : vector<72x512xf32> to vector<9x8x512xf32>
      %c0_18 = arith.constant 0 : index
      %c0_19 = arith.constant 0 : index
      %c0_20 = arith.constant 0 : index
      %21 = vector.load %arg10[%c0_18, %c0_19, %c0_20] : memref<9x8x512xf32, #tpu.memory_space<vmem>>, vector<9x8x512xf32>
      tpu.vector_store %arg10[%c0_18, %c0_19, %c0_20], %20 {strides = array<i32>} : memref<9x8x512xf32, #tpu.memory_space<vmem>>, vector<9x8x512xf32>,
      %c0_21 = arith.constant 0 : index
      %c0_22 = arith.constant 0 : index
      %22 = vector.load %arg5[%c0_21, %c0_22] : memref<128x512xbf16, #tpu.memory_space<vmem>>, vector<128x512xbf16>
      %cst_23 = arith.constant 0.000000e+00 : f32
      %23 = vector.broadcast %cst_23 : f32 to vector<8x128xf32>
      %cst_24 = arith.constant 0.000000e+00 : f32
      %24 = vector.broadcast %cst_24 : f32 to vector<8x128xf32>
      %c0_i32_25 = arith.constant 0 : i32
      %25 = arith.index_cast %c0_i32_25 : i32 to index
      %c0_26 = arith.constant 0 : index
      %c0_27 = arith.constant 0 : index
      %26 = vector.load %arg10[%25, %c0_26, %c0_27] : memref<9x8x512xf32, #tpu.memory_space<vmem>>, vector<1x8x512xf32>
      %27 = vector.shape_cast %26 : vector<1x8x512xf32> to vector<8x512xf32>
      %28 = arith.truncf %23 : vector<8x128xf32> to vector<8x128xbf16>
      %cst_28 = arith.constant dense<0.000000e+00> : vector<8x512xf32>
      %29 = tpu.matmul %28, %22, %cst_28 {dimension_numbers = #tpu.dot_dimension_numbers<[1], [0], [0], [1], [0, 0, 1, 1], [], []>} : vector<8x128xbf16>, vector<128x512xbf16>, vector<8x512xf32> -> vector<8x512xf32>
      %30 = arith.addf %27, %29 : vector<8x512xf32>
      %31 = vector.extract_strided_slice %30 {offsets = [0, 0], sizes = [8, 128], strides = [1, 1]} : vector<8x512xf32> to vector<8x128xf32>
      %32 = arith.negf %31 : vector<8x128xf32>
      %33 = math.exp %32 : vector<8x128xf32>
      %cst_29 = arith.constant 1.000000e+00 : f32
      %34 = vector.broadcast %cst_29 : f32 to vector<8x128xf32>
      %35 = arith.addf %34, %33 : vector<8x128xf32>
      %36 = arith.divf %34, %35 : vector<8x128xf32>
      %37 = vector.extract_strided_slice %30 {offsets = [0, 128], sizes = [8, 128], strides = [1, 1]} : vector<8x512xf32> to vector<8x128xf32>
      %38 = arith.negf %37 : vector<8x128xf32>
      %39 = math.exp %38 : vector<8x128xf32>
      %cst_30 = arith.constant 1.000000e+00 : f32
      %40 = vector.broadcast %cst_30 : f32 to vector<8x128xf32>
      %41 = arith.addf %40, %39 : vector<8x128xf32>
      %42 = arith.divf %40, %41 : vector<8x128xf32>
      %43 = vector.extract_strided_slice %30 {offsets = [0, 256], sizes = [8, 128], strides = [1, 1]} : vector<8x512xf32> to vector<8x128xf32>
      %44 = math.tanh %43 : vector<8x128xf32>
      %45 = vector.extract_strided_slice %30 {offsets = [0, 384], sizes = [8, 128], strides = [1, 1]} : vector<8x512xf32> to vector<8x128xf32>
      %46 = arith.negf %45 : vector<8x128xf32>
      %47 = math.exp %46 : vector<8x128xf32>
      %cst_31 = arith.constant 1.000000e+00 : f32
      %48 = vector.broadcast %cst_31 : f32 to vector<8x128xf32>
      %49 = arith.addf %48, %47 : vector<8x128xf32>
      %50 = arith.divf %48, %49 : vector<8x128xf32>
      %51 = arith.mulf %42, %24 : vector<8x128xf32>
      %52 = arith.mulf %36, %44 : vector<8x128xf32>
      %53 = arith.addf %51, %52 : vector<8x128xf32>
      %54 = math.tanh %53 : vector<8x128xf32>
      %55 = arith.mulf %50, %54 : vector<8x128xf32>
      %56 = arith.index_cast %c0_i32_25 : i32 to index
      %c0_32 = arith.constant 0 : index
      %c0_33 = arith.constant 0 : index
      %57 = vector.load %arg3[%56, %c0_32, %c0_33] : memref<9x8x1xf32, #tpu.memory_space<vmem>>, vector<1x8x1xf32>
      %58 = vector.shape_cast %57 : vector<1x8x1xf32> to vector<8x1xf32>
      %59 = vector.broadcast %58 : vector<8x1xf32> to vector<8x128xf32>
      %60 = arith.mulf %55, %59 : vector<8x128xf32>
      %61 = arith.truncf %60 : vector<8x128xf32> to vector<8x128xbf16>
      %62 = arith.index_cast %c0_i32_25 : i32 to index
      %c0_34 = arith.constant 0 : index
      %c0_35 = arith.constant 0 : index
      %63 = vector.load %arg11[%62, %c0_34, %c0_35] : memref<9x8x128xbf16, #tpu.memory_space<vmem>>, vector<1x8x128xbf16>
      %64 = vector.shape_cast %63 : vector<1x8x128xbf16> to vector<8x128xbf16>
      %65 = vector.shape_cast %61 : vector<8x128xbf16> to vector<1x8x128xbf16>
      tpu.vector_store %arg11[%62, %c0_34, %c0_35], %65 {strides = array<i32>} : memref<9x8x128xbf16, #tpu.memory_space<vmem>>, vector<1x8x128xbf16>,
      %c1_i32 = arith.constant 1 : i32
      %66 = arith.index_cast %c1_i32 : i32 to index
      %c0_36 = arith.constant 0 : index
      %c0_37 = arith.constant 0 : index
      %67 = vector.load %arg10[%66, %c0_36, %c0_37] : memref<9x8x512xf32, #tpu.memory_space<vmem>>, vector<1x8x512xf32>
      %68 = vector.shape_cast %67 : vector<1x8x512xf32> to vector<8x512xf32>
      %69 = arith.truncf %55 : vector<8x128xf32> to vector<8x128xbf16>
      %cst_38 = arith.constant dense<0.000000e+00> : vector<8x512xf32>
      %70 = tpu.matmul %69, %22, %cst_38 {dimension_numbers = #tpu.dot_dimension_numbers<[1], [0], [0], [1], [0, 0, 1, 1], [], []>} : vector<8x128xbf16>, vector<128x512xbf16>, vector<8x512xf32> -> vector<8x512xf32>
      %71 = arith.addf %68, %70 : vector<8x512xf32>
      %72 = vector.extract_strided_slice %71 {offsets = [0, 0], sizes = [8, 128], strides = [1, 1]} : vector<8x512xf32> to vector<8x128xf32>
      %73 = arith.negf %72 : vector<8x128xf32>
      %74 = math.exp %73 : vector<8x128xf32>
      %cst_39 = arith.constant 1.000000e+00 : f32
      %75 = vector.broadcast %cst_39 : f32 to vector<8x128xf32>
      %76 = arith.addf %75, %74 : vector<8x128xf32>
      %77 = arith.divf %75, %76 : vector<8x128xf32>
      %78 = vector.extract_strided_slice %71 {offsets = [0, 128], sizes = [8, 128], strides = [1, 1]} : vector<8x512xf32> to vector<8x128xf32>
      %79 = arith.negf %78 : vector<8x128xf32>
      %80 = math.exp %79 : vector<8x128xf32>
      %cst_40 = arith.constant 1.000000e+00 : f32
      %81 = vector.broadcast %cst_40 : f32 to vector<8x128xf32>
      %82 = arith.addf %81, %80 : vector<8x128xf32>
      %83 = arith.divf %81, %82 : vector<8x128xf32>
      %84 = vector.extract_strided_slice %71 {offsets = [0, 256], sizes = [8, 128], strides = [1, 1]} : vector<8x512xf32> to vector<8x128xf32>
      %85 = math.tanh %84 : vector<8x128xf32>
      %86 = vector.extract_strided_slice %71 {offsets = [0, 384], sizes = [8, 128], strides = [1, 1]} : vector<8x512xf32> to vector<8x128xf32>
      %87 = arith.negf %86 : vector<8x128xf32>
      %88 = math.exp %87 : vector<8x128xf32>
      %cst_41 = arith.constant 1.000000e+00 : f32
      %89 = vector.broadcast %cst_41 : f32 to vector<8x128xf32>
      %90 = arith.addf %89, %88 : vector<8x128xf32>
      %91 = arith.divf %89, %90 : vector<8x128xf32>
      %92 = arith.mulf %83, %53 : vector<8x128xf32>
      %93 = arith.mulf %77, %85 : vector<8x128xf32>
      %94 = arith.addf %92, %93 : vector<8x128xf32>
      %95 = math.tanh %94 : vector<8x128xf32>
      %96 = arith.mulf %91, %95 : vector<8x128xf32>
      %97 = arith.index_cast %c1_i32 : i32 to index
      %c0_42 = arith.constant 0 : index
      %c0_43 = arith.constant 0 : index
      %98 = vector.load %arg3[%97, %c0_42, %c0_43] : memref<9x8x1xf32, #tpu.memory_space<vmem>>, vector<1x8x1xf32>
      %99 = vector.shape_cast %98 : vector<1x8x1xf32> to vector<8x1xf32>
      %100 = vector.broadcast %99 : vector<8x1xf32> to vector<8x128xf32>
      %101 = arith.mulf %96, %100 : vector<8x128xf32>
      %102 = arith.truncf %101 : vector<8x128xf32> to vector<8x128xbf16>
      %103 = arith.index_cast %c1_i32 : i32 to index
      %c0_44 = arith.constant 0 : index
      %c0_45 = arith.constant 0 : index
      %104 = vector.load %arg11[%103, %c0_44, %c0_45] : memref<9x8x128xbf16, #tpu.memory_space<vmem>>, vector<1x8x128xbf16>
      %105 = vector.shape_cast %104 : vector<1x8x128xbf16> to vector<8x128xbf16>
      %106 = vector.shape_cast %102 : vector<8x128xbf16> to vector<1x8x128xbf16>
      tpu.vector_store %arg11[%103, %c0_44, %c0_45], %106 {strides = array<i32>} : memref<9x8x128xbf16, #tpu.memory_space<vmem>>, vector<1x8x128xbf16>,
      %c2_i32 = arith.constant 2 : i32
      %107 = arith.index_cast %c2_i32 : i32 to index
      %c0_46 = arith.constant 0 : index
      %c0_47 = arith.constant 0 : index
      %108 = vector.load %arg10[%107, %c0_46, %c0_47] : memref<9x8x512xf32, #tpu.memory_space<vmem>>, vector<1x8x512xf32>
      %109 = vector.shape_cast %108 : vector<1x8x512xf32> to vector<8x512xf32>
      %110 = arith.truncf %96 : vector<8x128xf32> to vector<8x128xbf16>
      %cst_48 = arith.constant dense<0.000000e+00> : vector<8x512xf32>
      %111 = tpu.matmul %110, %22, %cst_48 {dimension_numbers = #tpu.dot_dimension_numbers<[1], [0], [0], [1], [0, 0, 1, 1], [], []>} : vector<8x128xbf16>, vector<128x512xbf16>, vector<8x512xf32> -> vector<8x512xf32>
      %112 = arith.addf %109, %111 : vector<8x512xf32>
      %113 = vector.extract_strided_slice %112 {offsets = [0, 0], sizes = [8, 128], strides = [1, 1]} : vector<8x512xf32> to vector<8x128xf32>
      %114 = arith.negf %113 : vector<8x128xf32>
      %115 = math.exp %114 : vector<8x128xf32>
      %cst_49 = arith.constant 1.000000e+00 : f32
      %116 = vector.broadcast %cst_49 : f32 to vector<8x128xf32>
      %117 = arith.addf %116, %115 : vector<8x128xf32>
      %118 = arith.divf %116, %117 : vector<8x128xf32>
      %119 = vector.extract_strided_slice %112 {offsets = [0, 128], sizes = [8, 128], strides = [1, 1]} : vector<8x512xf32> to vector<8x128xf32>
      %120 = arith.negf %119 : vector<8x128xf32>
      %121 = math.exp %120 : vector<8x128xf32>
      %cst_50 = arith.constant 1.000000e+00 : f32
      %122 = vector.broadcast %cst_50 : f32 to vector<8x128xf32>
      %123 = arith.addf %122, %121 : vector<8x128xf32>
      %124 = arith.divf %122, %123 : vector<8x128xf32>
      %125 = vector.extract_strided_slice %112 {offsets = [0, 256], sizes = [8, 128], strides = [1, 1]} : vector<8x512xf32> to vector<8x128xf32>
      %126 = math.tanh %125 : vector<8x128xf32>
      %127 = vector.extract_strided_slice %112 {offsets = [0, 384], sizes = [8, 128], strides = [1, 1]} : vector<8x512xf32> to vector<8x128xf32>
      %128 = arith.negf %127 : vector<8x128xf32>
      %129 = math.exp %128 : vector<8x128xf32>
      %cst_51 = arith.constant 1.000000e+00 : f32
      %130 = vector.broadcast %cst_51 : f32 to vector<8x128xf32>
      %131 = arith.addf %130, %129 : vector<8x128xf32>
      %132 = arith.divf %130, %131 : vector<8x128xf32>
      %133 = arith.mulf %124, %94 : vector<8x128xf32>
      %134 = arith.mulf %118, %126 : vector<8x128xf32>
      %135 = arith.addf %133, %134 : vector<8x128xf32>
      %136 = math.tanh %135 : vector<8x128xf32>
      %137 = arith.mulf %132, %136 : vector<8x128xf32>
      %138 = arith.index_cast %c2_i32 : i32 to index
      %c0_52 = arith.constant 0 : index
      %c0_53 = arith.constant 0 : index
      %139 = vector.load %arg3[%138, %c0_52, %c0_53] : memref<9x8x1xf32, #tpu.memory_space<vmem>>, vector<1x8x1xf32>
      %140 = vector.shape_cast %139 : vector<1x8x1xf32> to vector<8x1xf32>
      %141 = vector.broadcast %140 : vector<8x1xf32> to vector<8x128xf32>
      %142 = arith.mulf %137, %141 : vector<8x128xf32>
      %143 = arith.truncf %142 : vector<8x128xf32> to vector<8x128xbf16>
      %144 = arith.index_cast %c2_i32 : i32 to index
      %c0_54 = arith.constant 0 : index
      %c0_55 = arith.constant 0 : index
      %145 = vector.load %arg11[%144, %c0_54, %c0_55] : memref<9x8x128xbf16, #tpu.memory_space<vmem>>, vector<1x8x128xbf16>
      %146 = vector.shape_cast %145 : vector<1x8x128xbf16> to vector<8x128xbf16>
      %147 = vector.shape_cast %143 : vector<8x128xbf16> to vector<1x8x128xbf16>
      tpu.vector_store %arg11[%144, %c0_54, %c0_55], %147 {strides = array<i32>} : memref<9x8x128xbf16, #tpu.memory_space<vmem>>, vector<1x8x128xbf16>,
      %c3_i32 = arith.constant 3 : i32
      %148 = arith.index_cast %c3_i32 : i32 to index
      %c0_56 = arith.constant 0 : index
      %c0_57 = arith.constant 0 : index
      %149 = vector.load %arg10[%148, %c0_56, %c0_57] : memref<9x8x512xf32, #tpu.memory_space<vmem>>, vector<1x8x512xf32>
      %150 = vector.shape_cast %149 : vector<1x8x512xf32> to vector<8x512xf32>
      %151 = arith.truncf %137 : vector<8x128xf32> to vector<8x128xbf16>
      %cst_58 = arith.constant dense<0.000000e+00> : vector<8x512xf32>
      %152 = tpu.matmul %151, %22, %cst_58 {dimension_numbers = #tpu.dot_dimension_numbers<[1], [0], [0], [1], [0, 0, 1, 1], [], []>} : vector<8x128xbf16>, vector<128x512xbf16>, vector<8x512xf32> -> vector<8x512xf32>
      %153 = arith.addf %150, %152 : vector<8x512xf32>
      %154 = vector.extract_strided_slice %153 {offsets = [0, 0], sizes = [8, 128], strides = [1, 1]} : vector<8x512xf32> to vector<8x128xf32>
      %155 = arith.negf %154 : vector<8x128xf32>
      %156 = math.exp %155 : vector<8x128xf32>
      %cst_59 = arith.constant 1.000000e+00 : f32
      %157 = vector.broadcast %cst_59 : f32 to vector<8x128xf32>
      %158 = arith.addf %157, %156 : vector<8x128xf32>
      %159 = arith.divf %157, %158 : vector<8x128xf32>
      %160 = vector.extract_strided_slice %153 {offsets = [0, 128], sizes = [8, 128], strides = [1, 1]} : vector<8x512xf32> to vector<8x128xf32>
      %161 = arith.negf %160 : vector<8x128xf32>
      %162 = math.exp %161 : vector<8x128xf32>
      %cst_60 = arith.constant 1.000000e+00 : f32
      %163 = vector.broadcast %cst_60 : f32 to vector<8x128xf32>
      %164 = arith.addf %163, %162 : vector<8x128xf32>
      %165 = arith.divf %163, %164 : vector<8x128xf32>
      %166 = vector.extract_strided_slice %153 {offsets = [0, 256], sizes = [8, 128], strides = [1, 1]} : vector<8x512xf32> to vector<8x128xf32>
      %167 = math.tanh %166 : vector<8x128xf32>
      %168 = vector.extract_strided_slice %153 {offsets = [0, 384], sizes = [8, 128], strides = [1, 1]} : vector<8x512xf32> to vector<8x128xf32>
      %169 = arith.negf %168 : vector<8x128xf32>
      %170 = math.exp %169 : vector<8x128xf32>
      %cst_61 = arith.constant 1.000000e+00 : f32
      %171 = vector.broadcast %cst_61 : f32 to vector<8x128xf32>
      %172 = arith.addf %171, %170 : vector<8x128xf32>
      %173 = arith.divf %171, %172 : vector<8x128xf32>
      %174 = arith.mulf %165, %135 : vector<8x128xf32>
      %175 = arith.mulf %159, %167 : vector<8x128xf32>
      %176 = arith.addf %174, %175 : vector<8x128xf32>
      %177 = math.tanh %176 : vector<8x128xf32>
      %178 = arith.mulf %173, %177 : vector<8x128xf32>
      %179 = arith.index_cast %c3_i32 : i32 to index
      %c0_62 = arith.constant 0 : index
      %c0_63 = arith.constant 0 : index
      %180 = vector.load %arg3[%179, %c0_62, %c0_63] : memref<9x8x1xf32, #tpu.memory_space<vmem>>, vector<1x8x1xf32>
      %181 = vector.shape_cast %180 : vector<1x8x1xf32> to vector<8x1xf32>
      %182 = vector.broadcast %181 : vector<8x1xf32> to vector<8x128xf32>
      %183 = arith.mulf %178, %182 : vector<8x128xf32>
      %184 = arith.truncf %183 : vector<8x128xf32> to vector<8x128xbf16>
      %185 = arith.index_cast %c3_i32 : i32 to index
      %c0_64 = arith.constant 0 : index
      %c0_65 = arith.constant 0 : index
      %186 = vector.load %arg11[%185, %c0_64, %c0_65] : memref<9x8x128xbf16, #tpu.memory_space<vmem>>, vector<1x8x128xbf16>
      %187 = vector.shape_cast %186 : vector<1x8x128xbf16> to vector<8x128xbf16>
      %188 = vector.shape_cast %184 : vector<8x128xbf16> to vector<1x8x128xbf16>
      tpu.vector_store %arg11[%185, %c0_64, %c0_65], %188 {strides = array<i32>} : memref<9x8x128xbf16, #tpu.memory_space<vmem>>, vector<1x8x128xbf16>,
      %c4_i32 = arith.constant 4 : i32
      %189 = arith.index_cast %c4_i32 : i32 to index
      %c0_66 = arith.constant 0 : index
      %c0_67 = arith.constant 0 : index
      %190 = vector.load %arg10[%189, %c0_66, %c0_67] : memref<9x8x512xf32, #tpu.memory_space<vmem>>, vector<1x8x512xf32>
      %191 = vector.shape_cast %190 : vector<1x8x512xf32> to vector<8x512xf32>
      %192 = arith.truncf %178 : vector<8x128xf32> to vector<8x128xbf16>
      %cst_68 = arith.constant dense<0.000000e+00> : vector<8x512xf32>
      %193 = tpu.matmul %192, %22, %cst_68 {dimension_numbers = #tpu.dot_dimension_numbers<[1], [0], [0], [1], [0, 0, 1, 1], [], []>} : vector<8x128xbf16>, vector<128x512xbf16>, vector<8x512xf32> -> vector<8x512xf32>
      %194 = arith.addf %191, %193 : vector<8x512xf32>
      %195 = vector.extract_strided_slice %194 {offsets = [0, 0], sizes = [8, 128], strides = [1, 1]} : vector<8x512xf32> to vector<8x128xf32>
      %196 = arith.negf %195 : vector<8x128xf32>
      %197 = math.exp %196 : vector<8x128xf32>
      %cst_69 = arith.constant 1.000000e+00 : f32
      %198 = vector.broadcast %cst_69 : f32 to vector<8x128xf32>
      %199 = arith.addf %198, %197 : vector<8x128xf32>
      %200 = arith.divf %198, %199 : vector<8x128xf32>
      %201 = vector.extract_strided_slice %194 {offsets = [0, 128], sizes = [8, 128], strides = [1, 1]} : vector<8x512xf32> to vector<8x128xf32>
      %202 = arith.negf %201 : vector<8x128xf32>
      %203 = math.exp %202 : vector<8x128xf32>
      %cst_70 = arith.constant 1.000000e+00 : f32
      %204 = vector.broadcast %cst_70 : f32 to vector<8x128xf32>
      %205 = arith.addf %204, %203 : vector<8x128xf32>
      %206 = arith.divf %204, %205 : vector<8x128xf32>
      %207 = vector.extract_strided_slice %194 {offsets = [0, 256], sizes = [8, 128], strides = [1, 1]} : vector<8x512xf32> to vector<8x128xf32>
      %208 = math.tanh %207 : vector<8x128xf32>
      %209 = vector.extract_strided_slice %194 {offsets = [0, 384], sizes = [8, 128], strides = [1, 1]} : vector<8x512xf32> to vector<8x128xf32>
      %210 = arith.negf %209 : vector<8x128xf32>
      %211 = math.exp %210 : vector<8x128xf32>
      %cst_71 = arith.constant 1.000000e+00 : f32
      %212 = vector.broadcast %cst_71 : f32 to vector<8x128xf32>
      %213 = arith.addf %212, %211 : vector<8x128xf32>
      %214 = arith.divf %212, %213 : vector<8x128xf32>
      %215 = arith.mulf %206, %176 : vector<8x128xf32>
      %216 = arith.mulf %200, %208 : vector<8x128xf32>
      %217 = arith.addf %215, %216 : vector<8x128xf32>
      %218 = math.tanh %217 : vector<8x128xf32>
      %219 = arith.mulf %214, %218 : vector<8x128xf32>
      %220 = arith.index_cast %c4_i32 : i32 to index
      %c0_72 = arith.constant 0 : index
      %c0_73 = arith.constant 0 : index
      %221 = vector.load %arg3[%220, %c0_72, %c0_73] : memref<9x8x1xf32, #tpu.memory_space<vmem>>, vector<1x8x1xf32>
      %222 = vector.shape_cast %221 : vector<1x8x1xf32> to vector<8x1xf32>
      %223 = vector.broadcast %222 : vector<8x1xf32> to vector<8x128xf32>
      %224 = arith.mulf %219, %223 : vector<8x128xf32>
      %225 = arith.truncf %224 : vector<8x128xf32> to vector<8x128xbf16>
      %226 = arith.index_cast %c4_i32 : i32 to index
      %c0_74 = arith.constant 0 : index
      %c0_75 = arith.constant 0 : index
      %227 = vector.load %arg11[%226, %c0_74, %c0_75] : memref<9x8x128xbf16, #tpu.memory_space<vmem>>, vector<1x8x128xbf16>
      %228 = vector.shape_cast %227 : vector<1x8x128xbf16> to vector<8x128xbf16>
      %229 = vector.shape_cast %225 : vector<8x128xbf16> to vector<1x8x128xbf16>
      tpu.vector_store %arg11[%226, %c0_74, %c0_75], %229 {strides = array<i32>} : memref<9x8x128xbf16, #tpu.memory_space<vmem>>, vector<1x8x128xbf16>,
      %c5_i32 = arith.constant 5 : i32
      %230 = arith.index_cast %c5_i32 : i32 to index
      %c0_76 = arith.constant 0 : index
      %c0_77 = arith.constant 0 : index
      %231 = vector.load %arg10[%230, %c0_76, %c0_77] : memref<9x8x512xf32, #tpu.memory_space<vmem>>, vector<1x8x512xf32>
      %232 = vector.shape_cast %231 : vector<1x8x512xf32> to vector<8x512xf32>
      %233 = arith.truncf %219 : vector<8x128xf32> to vector<8x128xbf16>
      %cst_78 = arith.constant dense<0.000000e+00> : vector<8x512xf32>
      %234 = tpu.matmul %233, %22, %cst_78 {dimension_numbers = #tpu.dot_dimension_numbers<[1], [0], [0], [1], [0, 0, 1, 1], [], []>} : vector<8x128xbf16>, vector<128x512xbf16>, vector<8x512xf32> -> vector<8x512xf32>
      %235 = arith.addf %232, %234 : vector<8x512xf32>
      %236 = vector.extract_strided_slice %235 {offsets = [0, 0], sizes = [8, 128], strides = [1, 1]} : vector<8x512xf32> to vector<8x128xf32>
      %237 = arith.negf %236 : vector<8x128xf32>
      %238 = math.exp %237 : vector<8x128xf32>
      %cst_79 = arith.constant 1.000000e+00 : f32
      %239 = vector.broadcast %cst_79 : f32 to vector<8x128xf32>
      %240 = arith.addf %239, %238 : vector<8x128xf32>
      %241 = arith.divf %239, %240 : vector<8x128xf32>
      %242 = vector.extract_strided_slice %235 {offsets = [0, 128], sizes = [8, 128], strides = [1, 1]} : vector<8x512xf32> to vector<8x128xf32>
      %243 = arith.negf %242 : vector<8x128xf32>
      %244 = math.exp %243 : vector<8x128xf32>
      %cst_80 = arith.constant 1.000000e+00 : f32
      %245 = vector.broadcast %cst_80 : f32 to vector<8x128xf32>
      %246 = arith.addf %245, %244 : vector<8x128xf32>
      %247 = arith.divf %245, %246 : vector<8x128xf32>
      %248 = vector.extract_strided_slice %235 {offsets = [0, 256], sizes = [8, 128], strides = [1, 1]} : vector<8x512xf32> to vector<8x128xf32>
      %249 = math.tanh %248 : vector<8x128xf32>
      %250 = vector.extract_strided_slice %235 {offsets = [0, 384], sizes = [8, 128], strides = [1, 1]} : vector<8x512xf32> to vector<8x128xf32>
      %251 = arith.negf %250 : vector<8x128xf32>
      %252 = math.exp %251 : vector<8x128xf32>
      %cst_81 = arith.constant 1.000000e+00 : f32
      %253 = vector.broadcast %cst_81 : f32 to vector<8x128xf32>
      %254 = arith.addf %253, %252 : vector<8x128xf32>
      %255 = arith.divf %253, %254 : vector<8x128xf32>
      %256 = arith.mulf %247, %217 : vector<8x128xf32>
      %257 = arith.mulf %241, %249 : vector<8x128xf32>
      %258 = arith.addf %256, %257 : vector<8x128xf32>
      %259 = math.tanh %258 : vector<8x128xf32>
      %260 = arith.mulf %255, %259 : vector<8x128xf32>
      %261 = arith.index_cast %c5_i32 : i32 to index
      %c0_82 = arith.constant 0 : index
      %c0_83 = arith.constant 0 : index
      %262 = vector.load %arg3[%261, %c0_82, %c0_83] : memref<9x8x1xf32, #tpu.memory_space<vmem>>, vector<1x8x1xf32>
      %263 = vector.shape_cast %262 : vector<1x8x1xf32> to vector<8x1xf32>
      %264 = vector.broadcast %263 : vector<8x1xf32> to vector<8x128xf32>
      %265 = arith.mulf %260, %264 : vector<8x128xf32>
      %266 = arith.truncf %265 : vector<8x128xf32> to vector<8x128xbf16>
      %267 = arith.index_cast %c5_i32 : i32 to index
      %c0_84 = arith.constant 0 : index
      %c0_85 = arith.constant 0 : index
      %268 = vector.load %arg11[%267, %c0_84, %c0_85] : memref<9x8x128xbf16, #tpu.memory_space<vmem>>, vector<1x8x128xbf16>
      %269 = vector.shape_cast %268 : vector<1x8x128xbf16> to vector<8x128xbf16>
      %270 = vector.shape_cast %266 : vector<8x128xbf16> to vector<1x8x128xbf16>
      tpu.vector_store %arg11[%267, %c0_84, %c0_85], %270 {strides = array<i32>} : memref<9x8x128xbf16, #tpu.memory_space<vmem>>, vector<1x8x128xbf16>,
      %c6_i32 = arith.constant 6 : i32
      %271 = arith.index_cast %c6_i32 : i32 to index
      %c0_86 = arith.constant 0 : index
      %c0_87 = arith.constant 0 : index
      %272 = vector.load %arg10[%271, %c0_86, %c0_87] : memref<9x8x512xf32, #tpu.memory_space<vmem>>, vector<1x8x512xf32>
      %273 = vector.shape_cast %272 : vector<1x8x512xf32> to vector<8x512xf32>
      %274 = arith.truncf %260 : vector<8x128xf32> to vector<8x128xbf16>
      %cst_88 = arith.constant dense<0.000000e+00> : vector<8x512xf32>
      %275 = tpu.matmul %274, %22, %cst_88 {dimension_numbers = #tpu.dot_dimension_numbers<[1], [0], [0], [1], [0, 0, 1, 1], [], []>} : vector<8x128xbf16>, vector<128x512xbf16>, vector<8x512xf32> -> vector<8x512xf32>
      %276 = arith.addf %273, %275 : vector<8x512xf32>
      %277 = vector.extract_strided_slice %276 {offsets = [0, 0], sizes = [8, 128], strides = [1, 1]} : vector<8x512xf32> to vector<8x128xf32>
      %278 = arith.negf %277 : vector<8x128xf32>
      %279 = math.exp %278 : vector<8x128xf32>
      %cst_89 = arith.constant 1.000000e+00 : f32
      %280 = vector.broadcast %cst_89 : f32 to vector<8x128xf32>
      %281 = arith.addf %280, %279 : vector<8x128xf32>
      %282 = arith.divf %280, %281 : vector<8x128xf32>
      %283 = vector.extract_strided_slice %276 {offsets = [0, 128], sizes = [8, 128], strides = [1, 1]} : vector<8x512xf32> to vector<8x128xf32>
      %284 = arith.negf %283 : vector<8x128xf32>
      %285 = math.exp %284 : vector<8x128xf32>
      %cst_90 = arith.constant 1.000000e+00 : f32
      %286 = vector.broadcast %cst_90 : f32 to vector<8x128xf32>
      %287 = arith.addf %286, %285 : vector<8x128xf32>
      %288 = arith.divf %286, %287 : vector<8x128xf32>
      %289 = vector.extract_strided_slice %276 {offsets = [0, 256], sizes = [8, 128], strides = [1, 1]} : vector<8x512xf32> to vector<8x128xf32>
      %290 = math.tanh %289 : vector<8x128xf32>
      %291 = vector.extract_strided_slice %276 {offsets = [0, 384], sizes = [8, 128], strides = [1, 1]} : vector<8x512xf32> to vector<8x128xf32>
      %292 = arith.negf %291 : vector<8x128xf32>
      %293 = math.exp %292 : vector<8x128xf32>
      %cst_91 = arith.constant 1.000000e+00 : f32
      %294 = vector.broadcast %cst_91 : f32 to vector<8x128xf32>
      %295 = arith.addf %294, %293 : vector<8x128xf32>
      %296 = arith.divf %294, %295 : vector<8x128xf32>
      %297 = arith.mulf %288, %258 : vector<8x128xf32>
      %298 = arith.mulf %282, %290 : vector<8x128xf32>
      %299 = arith.addf %297, %298 : vector<8x128xf32>
      %300 = math.tanh %299 : vector<8x128xf32>
      %301 = arith.mulf %296, %300 : vector<8x128xf32>
      %302 = arith.index_cast %c6_i32 : i32 to index
      %c0_92 = arith.constant 0 : index
      %c0_93 = arith.constant 0 : index
      %303 = vector.load %arg3[%302, %c0_92, %c0_93] : memref<9x8x1xf32, #tpu.memory_space<vmem>>, vector<1x8x1xf32>
      %304 = vector.shape_cast %303 : vector<1x8x1xf32> to vector<8x1xf32>
      %305 = vector.broadcast %304 : vector<8x1xf32> to vector<8x128xf32>
      %306 = arith.mulf %301, %305 : vector<8x128xf32>
      %307 = arith.truncf %306 : vector<8x128xf32> to vector<8x128xbf16>
      %308 = arith.index_cast %c6_i32 : i32 to index
      %c0_94 = arith.constant 0 : index
      %c0_95 = arith.constant 0 : index
      %309 = vector.load %arg11[%308, %c0_94, %c0_95] : memref<9x8x128xbf16, #tpu.memory_space<vmem>>, vector<1x8x128xbf16>
      %310 = vector.shape_cast %309 : vector<1x8x128xbf16> to vector<8x128xbf16>
      %311 = vector.shape_cast %307 : vector<8x128xbf16> to vector<1x8x128xbf16>
      tpu.vector_store %arg11[%308, %c0_94, %c0_95], %311 {strides = array<i32>} : memref<9x8x128xbf16, #tpu.memory_space<vmem>>, vector<1x8x128xbf16>,
      %c7_i32 = arith.constant 7 : i32
      %312 = arith.index_cast %c7_i32 : i32 to index
      %c0_96 = arith.constant 0 : index
      %c0_97 = arith.constant 0 : index
      %313 = vector.load %arg10[%312, %c0_96, %c0_97] : memref<9x8x512xf32, #tpu.memory_space<vmem>>, vector<1x8x512xf32>
      %314 = vector.shape_cast %313 : vector<1x8x512xf32> to vector<8x512xf32>
      %315 = arith.truncf %301 : vector<8x128xf32> to vector<8x128xbf16>
      %cst_98 = arith.constant dense<0.000000e+00> : vector<8x512xf32>
      %316 = tpu.matmul %315, %22, %cst_98 {dimension_numbers = #tpu.dot_dimension_numbers<[1], [0], [0], [1], [0, 0, 1, 1], [], []>} : vector<8x128xbf16>, vector<128x512xbf16>, vector<8x512xf32> -> vector<8x512xf32>
      %317 = arith.addf %314, %316 : vector<8x512xf32>
      %318 = vector.extract_strided_slice %317 {offsets = [0, 0], sizes = [8, 128], strides = [1, 1]} : vector<8x512xf32> to vector<8x128xf32>
      %319 = arith.negf %318 : vector<8x128xf32>
      %320 = math.exp %319 : vector<8x128xf32>
      %cst_99 = arith.constant 1.000000e+00 : f32
      %321 = vector.broadcast %cst_99 : f32 to vector<8x128xf32>
      %322 = arith.addf %321, %320 : vector<8x128xf32>
      %323 = arith.divf %321, %322 : vector<8x128xf32>
      %324 = vector.extract_strided_slice %317 {offsets = [0, 128], sizes = [8, 128], strides = [1, 1]} : vector<8x512xf32> to vector<8x128xf32>
      %325 = arith.negf %324 : vector<8x128xf32>
      %326 = math.exp %325 : vector<8x128xf32>
      %cst_100 = arith.constant 1.000000e+00 : f32
      %327 = vector.broadcast %cst_100 : f32 to vector<8x128xf32>
      %328 = arith.addf %327, %326 : vector<8x128xf32>
      %329 = arith.divf %327, %328 : vector<8x128xf32>
      %330 = vector.extract_strided_slice %317 {offsets = [0, 256], sizes = [8, 128], strides = [1, 1]} : vector<8x512xf32> to vector<8x128xf32>
      %331 = math.tanh %330 : vector<8x128xf32>
      %332 = vector.extract_strided_slice %317 {offsets = [0, 384], sizes = [8, 128], strides = [1, 1]} : vector<8x512xf32> to vector<8x128xf32>
      %333 = arith.negf %332 : vector<8x128xf32>
      %334 = math.exp %333 : vector<8x128xf32>
      %cst_101 = arith.constant 1.000000e+00 : f32
      %335 = vector.broadcast %cst_101 : f32 to vector<8x128xf32>
      %336 = arith.addf %335, %334 : vector<8x128xf32>
      %337 = arith.divf %335, %336 : vector<8x128xf32>
      %338 = arith.mulf %329, %299 : vector<8x128xf32>
      %339 = arith.mulf %323, %331 : vector<8x128xf32>
      %340 = arith.addf %338, %339 : vector<8x128xf32>
      %341 = math.tanh %340 : vector<8x128xf32>
      %342 = arith.mulf %337, %341 : vector<8x128xf32>
      %343 = arith.index_cast %c7_i32 : i32 to index
      %c0_102 = arith.constant 0 : index
      %c0_103 = arith.constant 0 : index
      %344 = vector.load %arg3[%343, %c0_102, %c0_103] : memref<9x8x1xf32, #tpu.memory_space<vmem>>, vector<1x8x1xf32>
      %345 = vector.shape_cast %344 : vector<1x8x1xf32> to vector<8x1xf32>
      %346 = vector.broadcast %345 : vector<8x1xf32> to vector<8x128xf32>
      %347 = arith.mulf %342, %346 : vector<8x128xf32>
      %348 = arith.truncf %347 : vector<8x128xf32> to vector<8x128xbf16>
      %349 = arith.index_cast %c7_i32 : i32 to index
      %c0_104 = arith.constant 0 : index
      %c0_105 = arith.constant 0 : index
      %350 = vector.load %arg11[%349, %c0_104, %c0_105] : memref<9x8x128xbf16, #tpu.memory_space<vmem>>, vector<1x8x128xbf16>
      %351 = vector.shape_cast %350 : vector<1x8x128xbf16> to vector<8x128xbf16>
      %352 = vector.shape_cast %348 : vector<8x128xbf16> to vector<1x8x128xbf16>
      tpu.vector_store %arg11[%349, %c0_104, %c0_105], %352 {strides = array<i32>} : memref<9x8x128xbf16, #tpu.memory_space<vmem>>, vector<1x8x128xbf16>,
      %c8_i32 = arith.constant 8 : i32
      %353 = arith.index_cast %c8_i32 : i32 to index
      %c0_106 = arith.constant 0 : index
      %c0_107 = arith.constant 0 : index
      %354 = vector.load %arg10[%353, %c0_106, %c0_107] : memref<9x8x512xf32, #tpu.memory_space<vmem>>, vector<1x8x512xf32>
      %355 = vector.shape_cast %354 : vector<1x8x512xf32> to vector<8x512xf32>
      %356 = arith.truncf %342 : vector<8x128xf32> to vector<8x128xbf16>
      %cst_108 = arith.constant dense<0.000000e+00> : vector<8x512xf32>
      %357 = tpu.matmul %356, %22, %cst_108 {dimension_numbers = #tpu.dot_dimension_numbers<[1], [0], [0], [1], [0, 0, 1, 1], [], []>} : vector<8x128xbf16>, vector<128x512xbf16>, vector<8x512xf32> -> vector<8x512xf32>
      %358 = arith.addf %355, %357 : vector<8x512xf32>
      %359 = vector.extract_strided_slice %358 {offsets = [0, 0], sizes = [8, 128], strides = [1, 1]} : vector<8x512xf32> to vector<8x128xf32>
      %360 = arith.negf %359 : vector<8x128xf32>
      %361 = math.exp %360 : vector<8x128xf32>
      %cst_109 = arith.constant 1.000000e+00 : f32
      %362 = vector.broadcast %cst_109 : f32 to vector<8x128xf32>
      %363 = arith.addf %362, %361 : vector<8x128xf32>
      %364 = arith.divf %362, %363 : vector<8x128xf32>
      %365 = vector.extract_strided_slice %358 {offsets = [0, 128], sizes = [8, 128], strides = [1, 1]} : vector<8x512xf32> to vector<8x128xf32>
      %366 = arith.negf %365 : vector<8x128xf32>
      %367 = math.exp %366 : vector<8x128xf32>
      %cst_110 = arith.constant 1.000000e+00 : f32
      %368 = vector.broadcast %cst_110 : f32 to vector<8x128xf32>
      %369 = arith.addf %368, %367 : vector<8x128xf32>
      %370 = arith.divf %368, %369 : vector<8x128xf32>
      %371 = vector.extract_strided_slice %358 {offsets = [0, 256], sizes = [8, 128], strides = [1, 1]} : vector<8x512xf32> to vector<8x128xf32>
      %372 = math.tanh %371 : vector<8x128xf32>
      %373 = vector.extract_strided_slice %358 {offsets = [0, 384], sizes = [8, 128], strides = [1, 1]} : vector<8x512xf32> to vector<8x128xf32>
      %374 = arith.negf %373 : vector<8x128xf32>
      %375 = math.exp %374 : vector<8x128xf32>
      %cst_111 = arith.constant 1.000000e+00 : f32
      %376 = vector.broadcast %cst_111 : f32 to vector<8x128xf32>
      %377 = arith.addf %376, %375 : vector<8x128xf32>
      %378 = arith.divf %376, %377 : vector<8x128xf32>
      %379 = arith.mulf %370, %340 : vector<8x128xf32>
      %380 = arith.mulf %364, %372 : vector<8x128xf32>
      %381 = arith.addf %379, %380 : vector<8x128xf32>
      %382 = math.tanh %381 : vector<8x128xf32>
      %383 = arith.mulf %378, %382 : vector<8x128xf32>
      %384 = arith.index_cast %c8_i32 : i32 to index
      %c0_112 = arith.constant 0 : index
      %c0_113 = arith.constant 0 : index
      %385 = vector.load %arg3[%384, %c0_112, %c0_113] : memref<9x8x1xf32, #tpu.memory_space<vmem>>, vector<1x8x1xf32>
      %386 = vector.shape_cast %385 : vector<1x8x1xf32> to vector<8x1xf32>
      %387 = vector.broadcast %386 : vector<8x1xf32> to vector<8x128xf32>
      %388 = arith.mulf %383, %387 : vector<8x128xf32>
      %389 = arith.truncf %388 : vector<8x128xf32> to vector<8x128xbf16>
      %390 = arith.index_cast %c8_i32 : i32 to index
      %c0_114 = arith.constant 0 : index
      %c0_115 = arith.constant 0 : index
      %391 = vector.load %arg11[%390, %c0_114, %c0_115] : memref<9x8x128xbf16, #tpu.memory_space<vmem>>, vector<1x8x128xbf16>
      %392 = vector.shape_cast %391 : vector<1x8x128xbf16> to vector<8x128xbf16>
      %393 = vector.shape_cast %389 : vector<8x128xbf16> to vector<1x8x128xbf16>
      tpu.vector_store %arg11[%390, %c0_114, %c0_115], %393 {strides = array<i32>} : memref<9x8x128xbf16, #tpu.memory_space<vmem>>, vector<1x8x128xbf16>,
      %c9_i32 = arith.constant 9 : i32
    } else {
    }
    %c0 = arith.constant 0 : index
    %c0_1 = arith.constant 0 : index
    %c0_2 = arith.constant 0 : index
    %3 = vector.load %arg11[%c0, %c0_1, %c0_2] : memref<9x8x128xbf16, #tpu.memory_space<vmem>>, vector<9x8x128xbf16>
    %4 = vector.shape_cast %3 : vector<9x8x128xbf16> to vector<72x128xbf16>
    %c0_3 = arith.constant 0 : index
    %c0_4 = arith.constant 0 : index
    %5 = vector.load %arg7[%c0_3, %c0_4] : memref<128x128xbf16, #tpu.memory_space<vmem>>, vector<128x128xbf16>
    %cst = arith.constant dense<0.000000e+00> : vector<72x128xf32>
    %6 = tpu.matmul %4, %5, %cst {dimension_numbers = #tpu.dot_dimension_numbers<[1], [0], [0], [1], [0, 0, 1, 1], [], []>} : vector<72x128xbf16>, vector<128x128xbf16>, vector<72x128xf32> -> vector<72x128xf32>
    %c0_5 = arith.constant 0 : index
    %c0_6 = arith.constant 0 : index
    %7 = vector.load %arg8[%c0_5, %c0_6] : memref<1x128xf32, #tpu.memory_space<vmem>>, vector<1x128xf32>
    %8 = vector.broadcast %7 : vector<1x128xf32> to vector<72x128xf32>
    %9 = arith.addf %6, %8 : vector<72x128xf32>
    %10 = vector.shape_cast %9 : vector<72x128xf32> to vector<9x8x128xf32>
    %c0_7 = arith.constant 0 : index
    %c0_8 = arith.constant 0 : index
    %c0_9 = arith.constant 0 : index
    %11 = vector.load %arg9[%c0_7, %c0_8, %c0_9] : memref<9x8x128xf32, #tpu.memory_space<vmem>>, vector<9x8x128xf32>
    tpu.vector_store %arg9[%c0_7, %c0_8, %c0_9], %10 {strides = array<i32>} : memref<9x8x128xf32, #tpu.memory_space<vmem>>, vector<9x8x128xf32>,
    return
  }
  func.func @transform_0(%arg0: i32, %arg1: i32) -> (i32, i32, i32) {
    %c0_i32 = arith.constant 0 : i32
    %c0_i32_0 = arith.constant 0 : i32
    %c0_i32_1 = arith.constant 0 : i32
    return %c0_i32, %arg0, %c0_i32_0 : i32, i32, i32
  }
  func.func @transform_1(%arg0: i32, %arg1: i32) -> (i32, i32, i32) {
    %c0_i32 = arith.constant 0 : i32
    %c0_i32_0 = arith.constant 0 : i32
    %c0_i32_1 = arith.constant 0 : i32
    return %c0_i32, %arg0, %c0_i32_0 : i32, i32, i32
  }
  func.func @transform_2(%arg0: i32, %arg1: i32) -> (i32, i32) {
    %c0_i32 = arith.constant 0 : i32
    %c0_i32_0 = arith.constant 0 : i32
    %c0_i32_1 = arith.constant 0 : i32
    return %c0_i32, %c0_i32_0 : i32, i32
  }
  func.func @transform_3(%arg0: i32, %arg1: i32) -> (i32, i32) {
    %c0_i32 = arith.constant 0 : i32
    %c0_i32_0 = arith.constant 0 : i32
    %c0_i32_1 = arith.constant 0 : i32
    return %c0_i32, %c0_i32_0 : i32, i32
  }
  func.func @transform_4(%arg0: i32, %arg1: i32) -> (i32, i32) {
    %c0_i32 = arith.constant 0 : i32
    %c0_i32_0 = arith.constant 0 : i32
    %c0_i32_1 = arith.constant 0 : i32
    return %c0_i32, %c0_i32_0 : i32, i32
  }
  func.func @transform_5(%arg0: i32, %arg1: i32) -> (i32, i32) {
    %c0_i32 = arith.constant 0 : i32
    %c0_i32_0 = arith.constant 0 : i32
    return %c0_i32, %arg1 : i32, i32
  }
  func.func @transform_6(%arg0: i32, %arg1: i32) -> (i32, i32) {
    %c0_i32 = arith.constant 0 : i32
    %c0_i32_0 = arith.constant 0 : i32
    return %c0_i32, %arg1 : i32, i32
  }
  func.func @transform_7(%arg0: i32, %arg1: i32) -> (i32, i32, i32) {
    %c0_i32 = arith.constant 0 : i32
    %c0_i32_0 = arith.constant 0 : i32
    return %c0_i32, %arg0, %arg1 : i32, i32, i32
  }
}

</mosaic_0001>

<llo_original>
// kernel: tpu_custom_call.1
$region0: #{tpu_custom_call.1}
  #allocation0 [shape = 'u32[]', space=smem, size = 0x4, offset = 0x4, fixed_abs, tag = 'smem constant byte address 0x4 - core index']
  #allocation1 [shape = 'u32[144,128]{1,0:T(1,128)}', space=vmem, size = 0x12000, scoped, tag = 'internal scratch']
  #allocation2 [shape = 'f32[9,8,512]{2,1,0:T(8,128)}', space=vmem, size = 0x24000, scoped, tag = 'scratch operand']
  #allocation3 [shape = 'bf16[9,8,128]{2,1,0:T(8,128)(2,1)}', space=vmem, size = 0x4800, scoped, tag = 'scratch operand']
  %s0 = inlined_call_operand.vmem [shape: f32[9,16,32], index: 0, kind: input, shape index: {}]
  %s1 = inlined_call_operand.vmem [shape: f32[9,16,1], index: 1, kind: input, shape index: {}]
  %s2 = inlined_call_operand.hbm [shape: bf16[32,512], index: 2, kind: input, shape index: {}]
  %s3 = inlined_call_operand.hbm [shape: bf16[128,512], index: 3, kind: input, shape index: {}]
  %s4 = inlined_call_operand.vmem [shape: f32[1,512], index: 4, kind: input, shape index: {}]
  %s5 = inlined_call_operand.hbm [shape: bf16[128,256], index: 5, kind: input, shape index: {}]
  %s6 = inlined_call_operand.vmem [shape: f32[1,256], index: 6, kind: input, shape index: {}]
  %s7 = inlined_call_operand.hbm [shape: f32[9,16,256], index: 7, kind: output, shape index: {}]
  %s8 = sld [smem:[#allocation0]]
  $region153: #{tpu_custom_call.1} parent=0
    _
  %s10 = ssub.s32 1, %s8
  %s11 = scalar_select 0, %s10, %s8
  $region1: #{tpu_custom_call.1} parent=0
    #allocation4 [shape = 'u8[73728]{0}', space=vmem, size = 0x12000, scoped, tag = 'input window, operand 0']
    #allocation5 [shape = 'u8[73728]{0}', space=vmem, size = 0x12000, scoped, tag = 'input window, operand 1']
    #allocation6 [shape = 'u8[32768]{0}', space=vmem, size = 0x8000, scoped, tag = 'input window, operand 2, single buffered']
    #allocation7 [shape = 's32[2]{0}', space=sflag, size = 0x8, scoped, tag = 'scoped memory for tpu_custom_call.1']
    #allocation8 [shape = 's32[2]{0}', space=sflag, size = 0x8, scoped, tag = 'scoped memory for tpu_custom_call.1']
    #allocation9 [shape = 'u8[131072]{0}', space=vmem, size = 0x20000, scoped, tag = 'input window, operand 3, single buffered']
    #allocation10 [shape = 's32[1]{0}', space=sflag, size = 0x4, scoped, tag = 'scoped memory for tpu_custom_call.1']
    #allocation11 [shape = 'u8[65536]{0}', space=vmem, size = 0x10000, scoped, tag = 'input window, operand 5']
    #allocation12 [shape = 'u8[73728]{0}', space=vmem, size = 0x12000, scoped, tag = 'output window, operand 0']
    %12 = vsyncpa [#allocation7], 0
    %13 = vsyncpa [#allocation10], 0
    %14 = vsyncpa [#allocation8], 0
    %s15 = scalar_lea.sflag [#allocation8], 1
    %16 = vsyncpa %s15, 0
    loop: start=0, step=1, limit=6
    $region2: #{tpu_custom_call.1} parent=1 // loop_pre_header
      _
    $region3: #{tpu_custom_call.1} parent=1 // loop_header
      %s18 = sphi 0, %s22
      %p19 = scmp.ge.s32.totalorder %s18, 6
      %s25 = sphi 0, %s37
      %s26 = sphi 0, %s33
      %s27 = sphi 0, %s25
      %s28 = sphi 0, %s26
      %s29 = sphi 0, %s27
      %s30 = sphi 0, %s28
      %s40 = sphi 0, %s42
      %s43 = sphi 0, %s40
      %s44 = sphi 0, %s43
      %s60 = sphi 0, %s44
      %s66 = sphi 0, %s68
      %s69 = sphi 0, %s66
      %s70 = sphi 0, %s69
      %s86 = sphi 0, %s70
      %s90 = sphi 0, %s90
      %s92 = sphi 0, %s90
      %s93 = sphi 0, %s92
      %s107 = sphi 0, %s93
      %s111 = sphi 0, %s111
      %s113 = sphi 0, %s111
      %s114 = sphi 0, %s113
      %s128 = sphi 0, %s114
      %s132 = sphi 0, %s132
      %s134 = sphi 0, %s132
      %s135 = sphi 0, %s134
      %s149 = sphi 0, %s135
      %s155 = sphi 0, %s157
      %s158 = sphi 0, %s155
      %s159 = sphi 0, %s158
      %s175 = sphi 0, %s159
      %s181 = sphi 0, %s183
      %s184 = sphi 0, %s181
      %s185 = sphi 0, %s184
      %s201 = sphi 0, %s185
      %s209 = sphi 0, %s211
      %s212 = sphi 0, %s209
      %s213 = sphi 0, %s212
      %s229 = sphi 0, %s213
    $region4: #{tpu_custom_call.1} parent=1 // loop_header_branch
      %21 = sbr.rel (%p19) target = $region8
    $region5: #{tpu_custom_call.1} parent=1 // loop_body
      %s23 = ssub.s32 %s18, 1
      %s24 = ssub.s32 %s18, 2
      %s31 = sadd.s32 1, %s26
      %p32 = scmp.ge.s32.totalorder %s31, 2
      %s33 = scalar_select %p32, 0, %s31
      %s34 = sadd.s32 1, %s25
      %s35 = scalar_select %p32, %s34, %s25
      %p36 = scmp.ge.s32.totalorder %s35, 2
      %s37 = scalar_select %p36, 0, %s35
      %s38 = ssub.s32 %s25, %s37
      %p39 = scmp.eq.s32.totalorder %s38, 0
      %s41 = sadd.s32 %s40, 1
      %s42 = scalar_select %p39, %s40, %s41
      %p45 = pneg %p39
      %p46 = scmp.eq.s32.totalorder %s18, 3
      %p47 = por %p45, %p46
      %p48 = scmp.ne.s32.totalorder %s40, %s43
      %p49 = scmp.eq.s32.totalorder %s18, 0
      %p50 = por %p48, %p49
      %p51 = scmp.ne.s32.totalorder %s40, %s43
      %p52 = scmp.eq.s32.totalorder %s23, 3
      %p53 = por %p51, %p52
      %p54 = scmp.ne.s32.totalorder %s43, %s44
      %p55 = scmp.eq.s32.totalorder %s23, 0
      %p56 = por %p54, %p55
      %p57 = scmp.ne.s32.totalorder %s43, %s44
      %p58 = scmp.eq.s32.totalorder %s24, 3
      %p59 = por %p57, %p58
      %p61 = scmp.ne.s32.totalorder %s44, %s60
      %p62 = scmp.eq.s32.totalorder %s24, 0
      %p63 = por %p61, %p62
      %s64 = ssub.s32 %s25, %s37
      %p65 = scmp.eq.s32.totalorder %s64, 0
      %s67 = sadd.s32 %s66, 1
      %s68 = scalar_select %p65, %s66, %s67
      %p71 = pneg %p65
      %p72 = scmp.eq.s32.totalorder %s18, 3
      %p73 = por %p71, %p72
      %p74 = scmp.ne.s32.totalorder %s66, %s69
      %p75 = scmp.eq.s32.totalorder %s18, 0
      %p76 = por %p74, %p75
      %p77 = scmp.ne.s32.totalorder %s66, %s69
      %p78 = scmp.eq.s32.totalorder %s23, 3
      %p79 = por %p77, %p78
      %p80 = scmp.ne.s32.totalorder %s69, %s70
      %p81 = scmp.eq.s32.totalorder %s23, 0
      %p82 = por %p80, %p81
      %p83 = scmp.ne.s32.totalorder %s69, %s70
      %p84 = scmp.eq.s32.totalorder %s24, 3
      %p85 = por %p83, %p84
      %p87 = scmp.ne.s32.totalorder %s70, %s86
      %p88 = scmp.eq.s32.totalorder %s24, 0
      %p89 = por %p87, %p88
      %s91 = sadd.s32 %s90, 1
      %p94 = scmp.eq.s32.totalorder %s18, 3
      %p95 = scmp.ne.s32.totalorder %s90, %s92
      %p96 = scmp.eq.s32.totalorder %s18, 0
      %p97 = por %p95, %p96
      %p98 = scmp.ne.s32.totalorder %s90, %s92
      %p99 = scmp.eq.s32.totalorder %s23, 3
      %p100 = por %p98, %p99
      %p101 = scmp.ne.s32.totalorder %s92, %s93
      %p102 = scmp.eq.s32.totalorder %s23, 0
      %p103 = por %p101, %p102
      %p104 = scmp.ne.s32.totalorder %s92, %s93
      %p105 = scmp.eq.s32.totalorder %s24, 3
      %p106 = por %p104, %p105
      %p108 = scmp.ne.s32.totalorder %s93, %s107
      %p109 = scmp.eq.s32.totalorder %s24, 0
      %p110 = por %p108, %p109
      %s112 = sadd.s32 %s111, 1
      %p115 = scmp.eq.s32.totalorder %s18, 3
      %p116 = scmp.ne.s32.totalorder %s111, %s113
      %p117 = scmp.eq.s32.totalorder %s18, 0
      %p118 = por %p116, %p117
      %p119 = scmp.ne.s32.totalorder %s111, %s113
      %p120 = scmp.eq.s32.totalorder %s23, 3
      %p121 = por %p119, %p120
      %p122 = scmp.ne.s32.totalorder %s113, %s114
      %p123 = scmp.eq.s32.totalorder %s23, 0
      %p124 = por %p122, %p123
      %p125 = scmp.ne.s32.totalorder %s113, %s114
      %p126 = scmp.eq.s32.totalorder %s24, 3
      %p127 = por %p125, %p126
      %p129 = scmp.ne.s32.totalorder %s114, %s128
      %p130 = scmp.eq.s32.totalorder %s24, 0
      %p131 = por %p129, %p130
      %s133 = sadd.s32 %s132, 1
      %p136 = scmp.eq.s32.totalorder %s18, 3
      %p137 = scmp.ne.s32.totalorder %s132, %s134
      %p138 = scmp.eq.s32.totalorder %s18, 0
      %p139 = por %p137, %p138
      %p140 = scmp.ne.s32.totalorder %s132, %s134
      %p141 = scmp.eq.s32.totalorder %s23, 3
      %p142 = por %p140, %p141
      %p143 = scmp.ne.s32.totalorder %s134, %s135
      %p144 = scmp.eq.s32.totalorder %s23, 0
      %p145 = por %p143, %p144
      %p146 = scmp.ne.s32.totalorder %s134, %s135
      %p147 = scmp.eq.s32.totalorder %s24, 3
      %p148 = por %p146, %p147
      %p150 = scmp.ne.s32.totalorder %s135, %s149
      %p151 = scmp.eq.s32.totalorder %s24, 0
      %p152 = por %p150, %p151
      %s153 = ssub.s32 %s26, %s33
      %p154 = scmp.eq.s32.totalorder %s153, 0
      %s156 = sadd.s32 %s155, 1
      %s157 = scalar_select %p154, %s155, %s156
      %p160 = pneg %p154
      %p161 = scmp.eq.s32.totalorder %s18, 3
      %p162 = por %p160, %p161
      %p163 = scmp.ne.s32.totalorder %s155, %s158
      %p164 = scmp.eq.s32.totalorder %s18, 0
      %p165 = por %p163, %p164
      %p166 = scmp.ne.s32.totalorder %s155, %s158
      %p167 = scmp.eq.s32.totalorder %s23, 3
      %p168 = por %p166, %p167
      %p169 = scmp.ne.s32.totalorder %s158, %s159
      %p170 = scmp.eq.s32.totalorder %s23, 0
      %p171 = por %p169, %p170
      %p172 = scmp.ne.s32.totalorder %s158, %s159
      %p173 = scmp.eq.s32.totalorder %s24, 3
      %p174 = por %p172, %p173
      %p176 = scmp.ne.s32.totalorder %s159, %s175
      %p177 = scmp.eq.s32.totalorder %s24, 0
      %p178 = por %p176, %p177
      %s179 = ssub.s32 %s26, %s33
      %p180 = scmp.eq.s32.totalorder %s179, 0
      %s182 = sadd.s32 %s181, 1
      %s183 = scalar_select %p180, %s181, %s182
      %p186 = pneg %p180
      %p187 = scmp.eq.s32.totalorder %s18, 3
      %p188 = por %p186, %p187
      %p189 = scmp.ne.s32.totalorder %s181, %s184
      %p190 = scmp.eq.s32.totalorder %s18, 0
      %p191 = por %p189, %p190
      %p192 = scmp.ne.s32.totalorder %s181, %s184
      %p193 = scmp.eq.s32.totalorder %s23, 3
      %p194 = por %p192, %p193
      %p195 = scmp.ne.s32.totalorder %s184, %s185
      %p196 = scmp.eq.s32.totalorder %s23, 0
      %p197 = por %p195, %p196
      %p198 = scmp.ne.s32.totalorder %s184, %s185
      %p199 = scmp.eq.s32.totalorder %s24, 3
      %p200 = por %p198, %p199
      %p202 = scmp.ne.s32.totalorder %s185, %s201
      %p203 = scmp.eq.s32.totalorder %s24, 0
      %p204 = por %p202, %p203
      %s205 = ssub.s32 %s25, %s37
      %s206 = ssub.s32 %s26, %s33
      %s207 = sor.u32 %s205, %s206
      %p208 = scmp.eq.s32.totalorder %s207, 0
      %s210 = sadd.s32 %s209, 1
      %s211 = scalar_select %p208, %s209, %s210
      %p214 = pneg %p208
      %p215 = scmp.eq.s32.totalorder %s18, 3
      %p216 = por %p214, %p215
      %p217 = scmp.ne.s32.totalorder %s209, %s212
      %p218 = scmp.eq.s32.totalorder %s18, 0
      %p219 = por %p217, %p218
      %p220 = scmp.ne.s32.totalorder %s209, %s212
      %p221 = scmp.eq.s32.totalorder %s23, 3
      %p222 = por %p220, %p221
      %p223 = scmp.ne.s32.totalorder %s212, %s213
      %p224 = scmp.eq.s32.totalorder %s23, 0
      %p225 = por %p223, %p224
      %p226 = scmp.ne.s32.totalorder %s212, %s213
      %p227 = scmp.eq.s32.totalorder %s24, 3
      %p228 = por %p226, %p227
      %p230 = scmp.ne.s32.totalorder %s213, %s229
      %p231 = scmp.eq.s32.totalorder %s24, 0
      %p232 = por %p230, %p231
      %p233 = scmp.le.s32.totalorder 1, %s18
      %p234 = scmp.lt.s32.totalorder %s18, 5
      %p235 = pnand %p233, %p234
      %p236 = pneg %p235
      // Predicated region
      $region9: #{tpu_custom_call.1} parent=5 // pred_check
        _
      $region10: #{tpu_custom_call.1} parent=5 // pred_check_branch
        %238 = sbr.rel (%p235) target = $region12
      $region11: #{tpu_custom_call.1} parent=5 // pred_region
        %s239 = ssub.s32 %s18, 1
        // Predicated region
        $region13: #{tpu_custom_call.1} parent=11 // pred_check
          %p240 = pneg %p103
        $region14: #{tpu_custom_call.1} parent=11 // pred_check_branch
          %242 = sbr.rel (%p240) target = $region16
        $region15: #{tpu_custom_call.1} parent=11 // pred_region
          %s244 = ssub.s32 1024, 1024
          %245 = vsyncadd [#allocation7], %s244
          %s246 = sshll.u32 [#allocation6], 4
          %s247 = int_to_ptr.vmem [resolvable:$true] %s246
          %252 = dma.hbm_to_vmem [thread:$0]  %s2, 1024, %s247, [#allocation7], 256, 256, 16
        $region16: #{tpu_custom_call.1} parent=11 // pred_fallthru
          _
        // Predicated region
        $region17: #{tpu_custom_call.1} parent=11 // pred_check
          %p253 = pneg %p124
        $region18: #{tpu_custom_call.1} parent=11 // pred_check_branch
          %255 = sbr.rel (%p253) target = $region20
        $region19: #{tpu_custom_call.1} parent=11 // pred_region
          %s257 = ssub.s32 4096, 4096
          %258 = vsyncadd [#allocation10], %s257
          %s259 = sshll.u32 [#allocation9], 4
          %s260 = int_to_ptr.vmem [resolvable:$true] %s259
          %265 = dma.hbm_to_vmem [thread:$0]  %s3, 4096, %s260, [#allocation10], 256, 256, 16
        $region20: #{tpu_custom_call.1} parent=11 // pred_fallthru
          _
        // Predicated region
        $region21: #{tpu_custom_call.1} parent=11 // pred_check
          %p266 = pneg %p145
        $region22: #{tpu_custom_call.1} parent=11 // pred_check_branch
          %268 = sbr.rel (%p266) target = $region24
        $region23: #{tpu_custom_call.1} parent=11 // pred_region
          _
        $region24: #{tpu_custom_call.1} parent=11 // pred_fallthru
          _
      $region12: #{tpu_custom_call.1} parent=5 // pred_fallthru
        _
      %p269 = scmp.lt.s32.totalorder %s18, 4
      // Predicated region
      $region25: #{tpu_custom_call.1} parent=5 // pred_check
        %p270 = pneg %p269
      $region26: #{tpu_custom_call.1} parent=5 // pred_check_branch
        %272 = sbr.rel (%p270) target = $region28
      $region27: #{tpu_custom_call.1} parent=5 // pred_region
        // Predicated region
        $region29: #{tpu_custom_call.1} parent=27 // pred_check
          %p273 = pneg %p50
        $region30: #{tpu_custom_call.1} parent=27 // pred_check_branch
          %275 = sbr.rel (%p273) target = $region32
        $region31: #{tpu_custom_call.1} parent=27 // pred_region
          %s276 = sand.u32 %s40, 1
          %s277 = sand.u32 %s40, 1
          %s278 = smul.addr %s277, 72
          %s279 = scalar_lea.vmem [#allocation4], %s278
          %s280 = smul.addr %s25, 8
          %s281 = scalar_lea.vmem %s0, %s280
          // Predicated region
          $region33: #{tpu_custom_call.1} parent=31 // pred_check
            _
          $region34: #{tpu_custom_call.1} parent=31 // pred_check_branch
            %283 = sbr.rel (0) target = $region36
          $region35: #{tpu_custom_call.1} parent=31 // pred_region
            // Predicated region
            $region37: #{tpu_custom_call.1} parent=35 // pred_check
              _
            $region38: #{tpu_custom_call.1} parent=35 // pred_check_branch
              %285 = sbr.rel (0) target = $region40
            $region39: #{tpu_custom_call.1} parent=35 // pred_region
              // Predicated region
              $region52: #{tpu_custom_call.1} parent=39 // pred_check
                _
              $region53: #{tpu_custom_call.1} parent=39 // pred_check_branch
                %316 = sbr.rel (0) target = $region55
              $region54: #{tpu_custom_call.1} parent=39 // pred_region
                loop: start=0, step=1, limit=1
                $region56: #{tpu_custom_call.1} parent=54 // loop_pre_header
                  _
                $region57: #{tpu_custom_call.1} parent=54 // loop_header
                  %s318 = sphi 0, %s322
                  %p319 = scmp.ge.s32.totalorder %s318, 1
                  %s323 = sphi %s281, %s281
                  %s324 = sphi %s279, %s279
                $region58: #{tpu_custom_call.1} parent=54 // loop_header_branch
                  %321 = sbr.rel (%p319) target = $region62
                $region59: #{tpu_custom_call.1} parent=54 // loop_body
                  %v325 = vld [vmem:[%s323] sm:$0xff]
                  %326 = vst [vmem:[%s324] sm:$0xff] %v325
                  %v327 = vld [vmem:[%s323 + $0x10] sm:$0xff]
                  %328 = vst [vmem:[%s324 + $0x8] sm:$0xff] %v327
                  %v329 = vld [vmem:[%s323 + $0x20] sm:$0xff]
                  %330 = vst [vmem:[%s324 + $0x10] sm:$0xff] %v329
                  %v331 = vld [vmem:[%s323 + $0x30] sm:$0xff]
                  %332 = vst [vmem:[%s324 + $0x18] sm:$0xff] %v331
                  %v333 = vld [vmem:[%s323 + $0x40] sm:$0xff]
                  %334 = vst [vmem:[%s324 + $0x20] sm:$0xff] %v333
                  %v335 = vld [vmem:[%s323 + $0x50] sm:$0xff]
                  %336 = vst [vmem:[%s324 + $0x28] sm:$0xff] %v335
                  %v337 = vld [vmem:[%s323 + $0x60] sm:$0xff]
                  %338 = vst [vmem:[%s324 + $0x30] sm:$0xff] %v337
                  %v339 = vld [vmem:[%s323 + $0x70] sm:$0xff]
                  %340 = vst [vmem:[%s324 + $0x38] sm:$0xff] %v339
                  %v341 = vld [vmem:[%s323 + $0x80] sm:$0xff]
                  %342 = vst [vmem:[%s324 + $0x40] sm:$0xff] %v341
                $region60: #{tpu_custom_call.1} parent=54 // loop_footer
                  %s322 = sadd.s32 1, %s318
                $region61: #{tpu_custom_call.1} parent=54 // loop_footer_branch
                  %317 = sbr.rel target = $region57
                $region62: #{tpu_custom_call.1} parent=54 // loop_exit
                  _
              $region55: #{tpu_custom_call.1} parent=39 // pred_fallthru
                _
              // Predicated region
              $region63: #{tpu_custom_call.1} parent=39 // pred_check
                _
              $region64: #{tpu_custom_call.1} parent=39 // pred_check_branch
                %344 = sbr.rel target = $region66
              $region65: #{tpu_custom_call.1} parent=39 // pred_region
                _
              $region66: #{tpu_custom_call.1} parent=39 // pred_fallthru
                _
            $region40: #{tpu_custom_call.1} parent=35 // pred_fallthru
              _
            // Predicated region
            $region41: #{tpu_custom_call.1} parent=35 // pred_check
              _
            $region42: #{tpu_custom_call.1} parent=35 // pred_check_branch
              %287 = sbr.rel target = $region44
            $region43: #{tpu_custom_call.1} parent=35 // pred_region
              loop: start=0, step=1, limit=1
              $region45: #{tpu_custom_call.1} parent=43 // loop_pre_header
                _
              $region46: #{tpu_custom_call.1} parent=43 // loop_header
                %s290 = sphi 0, %s294
                %p291 = scmp.ge.s32.totalorder %s290, 1
                %s295 = sphi %s281, %s281
                %s296 = sphi %s279, %s279
              $region47: #{tpu_custom_call.1} parent=43 // loop_header_branch
                %293 = sbr.rel (%p291) target = $region51
              $region48: #{tpu_custom_call.1} parent=43 // loop_body
                %v297 = vld [vmem:[%s295] sm:$0xff]
                %298 = vst [vmem:[%s296] sm:$0xff] %v297
                %v299 = vld [vmem:[%s295 + $0x10] sm:$0xff]
                %300 = vst [vmem:[%s296 + $0x8] sm:$0xff] %v299
                %v301 = vld [vmem:[%s295 + $0x20] sm:$0xff]
                %302 = vst [vmem:[%s296 + $0x10] sm:$0xff] %v301
                %v303 = vld [vmem:[%s295 + $0x30] sm:$0xff]
                %304 = vst [vmem:[%s296 + $0x18] sm:$0xff] %v303
                %v305 = vld [vmem:[%s295 + $0x40] sm:$0xff]
                %306 = vst [vmem:[%s296 + $0x20] sm:$0xff] %v305
                %v307 = vld [vmem:[%s295 + $0x50] sm:$0xff]
                %308 = vst [vmem:[%s296 + $0x28] sm:$0xff] %v307
                %v309 = vld [vmem:[%s295 + $0x60] sm:$0xff]
                %310 = vst [vmem:[%s296 + $0x30] sm:$0xff] %v309
                %v311 = vld [vmem:[%s295 + $0x70] sm:$0xff]
                %312 = vst [vmem:[%s296 + $0x38] sm:$0xff] %v311
                %v313 = vld [vmem:[%s295 + $0x80] sm:$0xff]
                %314 = vst [vmem:[%s296 + $0x40] sm:$0xff] %v313
              $region49: #{tpu_custom_call.1} parent=43 // loop_footer
                %s294 = sadd.s32 1, %s290
              $region50: #{tpu_custom_call.1} parent=43 // loop_footer_branch
                %289 = sbr.rel target = $region46
              $region51: #{tpu_custom_call.1} parent=43 // loop_exit
                _
            $region44: #{tpu_custom_call.1} parent=35 // pred_fallthru
              _
          $region36: #{tpu_custom_call.1} parent=31 // pred_fallthru
            _
          %345 = vnop
        $region32: #{tpu_custom_call.1} parent=27 // pred_fallthru
          _
        // Predicated region
        $region67: #{tpu_custom_call.1} parent=27 // pred_check
          %p346 = pneg %p76
        $region68: #{tpu_custom_call.1} parent=27 // pred_check_branch
          %348 = sbr.rel (%p346) target = $region70
        $region69: #{tpu_custom_call.1} parent=27 // pred_region
          %s349 = sand.u32 %s66, 1
          %s350 = sand.u32 %s66, 1
          %s351 = smul.addr %s350, 72
          %s352 = scalar_lea.vmem [#allocation5], %s351
          %s353 = smul.addr %s25, 8
          %s354 = scalar_lea.vmem %s1, %s353
          // Predicated region
          $region71: #{tpu_custom_call.1} parent=69 // pred_check
            _
          $region72: #{tpu_custom_call.1} parent=69 // pred_check_branch
            %356 = sbr.rel (0) target = $region74
          $region73: #{tpu_custom_call.1} parent=69 // pred_region
            // Predicated region
            $region75: #{tpu_custom_call.1} parent=73 // pred_check
              _
            $region76: #{tpu_custom_call.1} parent=73 // pred_check_branch
              %358 = sbr.rel (0) target = $region78
            $region77: #{tpu_custom_call.1} parent=73 // pred_region
              // Predicated region
              $region90: #{tpu_custom_call.1} parent=77 // pred_check
                _
              $region91: #{tpu_custom_call.1} parent=77 // pred_check_branch
                %389 = sbr.rel (0) target = $region93
              $region92: #{tpu_custom_call.1} parent=77 // pred_region
                loop: start=0, step=1, limit=1
                $region94: #{tpu_custom_call.1} parent=92 // loop_pre_header
                  _
                $region95: #{tpu_custom_call.1} parent=92 // loop_header
                  %s391 = sphi 0, %s395
                  %p392 = scmp.ge.s32.totalorder %s391, 1
                  %s396 = sphi %s354, %s354
                  %s397 = sphi %s352, %s352
                $region96: #{tpu_custom_call.1} parent=92 // loop_header_branch
                  %394 = sbr.rel (%p392) target = $region100
                $region97: #{tpu_custom_call.1} parent=92 // loop_body
                  %v398 = vld [vmem:[%s396] sm:$0xff]
                  %399 = vst [vmem:[%s397] sm:$0xff] %v398
                  %v400 = vld [vmem:[%s396 + $0x10] sm:$0xff]
                  %401 = vst [vmem:[%s397 + $0x8] sm:$0xff] %v400
                  %v402 = vld [vmem:[%s396 + $0x20] sm:$0xff]
                  %403 = vst [vmem:[%s397 + $0x10] sm:$0xff] %v402
                  %v404 = vld [vmem:[%s396 + $0x30] sm:$0xff]
                  %405 = vst [vmem:[%s397 + $0x18] sm:$0xff] %v404
                  %v406 = vld [vmem:[%s396 + $0x40] sm:$0xff]
                  %407 = vst [vmem:[%s397 + $0x20] sm:$0xff] %v406
                  %v408 = vld [vmem:[%s396 + $0x50] sm:$0xff]
                  %409 = vst [vmem:[%s397 + $0x28] sm:$0xff] %v408
                  %v410 = vld [vmem:[%s396 + $0x60] sm:$0xff]
                  %411 = vst [vmem:[%s397 + $0x30] sm:$0xff] %v410
                  %v412 = vld [vmem:[%s396 + $0x70] sm:$0xff]
                  %413 = vst [vmem:[%s397 + $0x38] sm:$0xff] %v412
                  %v414 = vld [vmem:[%s396 + $0x80] sm:$0xff]
                  %415 = vst [vmem:[%s397 + $0x40] sm:$0xff] %v414
                $region98: #{tpu_custom_call.1} parent=92 // loop_footer
                  %s395 = sadd.s32 1, %s391
                $region99: #{tpu_custom_call.1} parent=92 // loop_footer_branch
                  %390 = sbr.rel target = $region95
                $region100: #{tpu_custom_call.1} parent=92 // loop_exit
                  _
              $region93: #{tpu_custom_call.1} parent=77 // pred_fallthru
                _
              // Predicated region
              $region101: #{tpu_custom_call.1} parent=77 // pred_check
                _
              $region102: #{tpu_custom_call.1} parent=77 // pred_check_branch
                %417 = sbr.rel target = $region104
              $region103: #{tpu_custom_call.1} parent=77 // pred_region
                _
              $region104: #{tpu_custom_call.1} parent=77 // pred_fallthru
                _
            $region78: #{tpu_custom_call.1} parent=73 // pred_fallthru
              _
            // Predicated region
            $region79: #{tpu_custom_call.1} parent=73 // pred_check
              _
            $region80: #{tpu_custom_call.1} parent=73 // pred_check_branch
              %360 = sbr.rel target = $region82
            $region81: #{tpu_custom_call.1} parent=73 // pred_region
              loop: start=0, step=1, limit=1
              $region83: #{tpu_custom_call.1} parent=81 // loop_pre_header
                _
              $region84: #{tpu_custom_call.1} parent=81 // loop_header
                %s363 = sphi 0, %s367
                %p364 = scmp.ge.s32.totalorder %s363, 1
                %s368 = sphi %s354, %s354
                %s369 = sphi %s352, %s352
              $region85: #{tpu_custom_call.1} parent=81 // loop_header_branch
                %366 = sbr.rel (%p364) target = $region89
              $region86: #{tpu_custom_call.1} parent=81 // loop_body
                %v370 = vld [vmem:[%s368] sm:$0xff]
                %371 = vst [vmem:[%s369] sm:$0xff] %v370
                %v372 = vld [vmem:[%s368 + $0x10] sm:$0xff]
                %373 = vst [vmem:[%s369 + $0x8] sm:$0xff] %v372
                %v374 = vld [vmem:[%s368 + $0x20] sm:$0xff]
                %375 = vst [vmem:[%s369 + $0x10] sm:$0xff] %v374
                %v376 = vld [vmem:[%s368 + $0x30] sm:$0xff]
                %377 = vst [vmem:[%s369 + $0x18] sm:$0xff] %v376
                %v378 = vld [vmem:[%s368 + $0x40] sm:$0xff]
                %379 = vst [vmem:[%s369 + $0x20] sm:$0xff] %v378
                %v380 = vld [vmem:[%s368 + $0x50] sm:$0xff]
                %381 = vst [vmem:[%s369 + $0x28] sm:$0xff] %v380
                %v382 = vld [vmem:[%s368 + $0x60] sm:$0xff]
                %383 = vst [vmem:[%s369 + $0x30] sm:$0xff] %v382
                %v384 = vld [vmem:[%s368 + $0x70] sm:$0xff]
                %385 = vst [vmem:[%s369 + $0x38] sm:$0xff] %v384
                %v386 = vld [vmem:[%s368 + $0x80] sm:$0xff]
                %387 = vst [vmem:[%s369 + $0x40] sm:$0xff] %v386
              $region87: #{tpu_custom_call.1} parent=81 // loop_footer
                %s367 = sadd.s32 1, %s363
              $region88: #{tpu_custom_call.1} parent=81 // loop_footer_branch
                %362 = sbr.rel target = $region84
              $region89: #{tpu_custom_call.1} parent=81 // loop_exit
                _
            $region82: #{tpu_custom_call.1} parent=73 // pred_fallthru
              _
          $region74: #{tpu_custom_call.1} parent=69 // pred_fallthru
            _
          %418 = vnop
        $region70: #{tpu_custom_call.1} parent=27 // pred_fallthru
          _
        // Predicated region
        $region105: #{tpu_custom_call.1} parent=27 // pred_check
          %p419 = pneg %p165
        $region106: #{tpu_custom_call.1} parent=27 // pred_check_branch
          %421 = sbr.rel (%p419) target = $region108
        $region107: #{tpu_custom_call.1} parent=27 // pred_region
          %s422 = sand.u32 %s18, 1
          %s423 = scalar_lea.sflag [#allocation7], %s422
          %s424 = sand.u32 %s155, 1
          %s425 = smul.addr %s424, 64
          %s426 = scalar_lea.vmem [#allocation11], %s425
          %s428 = ssub.s32 1024, 1024
          %429 = vsyncadd %s423, %s428
          %s430 = smul.addr %s26, 64
          %s431 = scalar_lea.hbm %s5, %s430
          %s432 = sshll.u32 %s426, 4
          %s433 = int_to_ptr.vmem [resolvable:$true] %s432
          %438 = dma.hbm_to_vmem [thread:$0]  %s431, 1024, %s433, %s423, 128, 64, 4
        $region108: #{tpu_custom_call.1} parent=27 // pred_fallthru
          _
        // Predicated region
        $region109: #{tpu_custom_call.1} parent=27 // pred_check
          %p439 = pneg %p191
        $region110: #{tpu_custom_call.1} parent=27 // pred_check_branch
          %441 = sbr.rel (%p439) target = $region112
        $region111: #{tpu_custom_call.1} parent=27 // pred_region
          %p442 = scmp.lt.s32.totalorder %s26, 1
          %s443 = scalar_select %p442, %s26, 1
          %s444 = scalar_lea.vmem %s6, %s443
        $region112: #{tpu_custom_call.1} parent=27 // pred_fallthru
          _
      $region28: #{tpu_custom_call.1} parent=5 // pred_fallthru
        _
      %p445 = scmp.le.s32.totalorder 1, %s18
      %p446 = scmp.lt.s32.totalorder %s18, 5
      %p447 = pnand %p445, %p446
      %p448 = pneg %p447
      // Predicated region
      $region113: #{tpu_custom_call.1} parent=5 // pred_check
        _
      $region114: #{tpu_custom_call.1} parent=5 // pred_check_branch
        %450 = sbr.rel (%p447) target = $region116
      $region115: #{tpu_custom_call.1} parent=5 // pred_region
        %s451 = ssub.s32 %s18, 1
        %s452 = sand.u32 %s43, 1
        %s453 = sand.u32 %s43, 1
        %s454 = smul.addr %s453, 72
        %s455 = scalar_lea.vmem [#allocation4], %s454
        // Predicated region
        $region117: #{tpu_custom_call.1} parent=115 // pred_check
          %p456 = pneg %p56
        $region118: #{tpu_custom_call.1} parent=115 // pred_check_branch
          %458 = sbr.rel (%p456) target = $region120
        $region119: #{tpu_custom_call.1} parent=115 // pred_region
          _
        $region120: #{tpu_custom_call.1} parent=115 // pred_fallthru
          _
        %s459 = sand.u32 %s69, 1
        %s460 = sand.u32 %s69, 1
        %s461 = smul.addr %s460, 72
        %s462 = scalar_lea.vmem [#allocation5], %s461
        // Predicated region
        $region121: #{tpu_custom_call.1} parent=115 // pred_check
          %p463 = pneg %p82
        $region122: #{tpu_custom_call.1} parent=115 // pred_check_branch
          %465 = sbr.rel (%p463) target = $region124
        $region123: #{tpu_custom_call.1} parent=115 // pred_region
          _
        $region124: #{tpu_custom_call.1} parent=115 // pred_fallthru
          _
        // Predicated region
        $region125: #{tpu_custom_call.1} parent=115 // pred_check
          %p466 = pneg %p103
        $region126: #{tpu_custom_call.1} parent=115 // pred_check_branch
          %468 = sbr.rel (%p466) target = $region128
        $region127: #{tpu_custom_call.1} parent=115 // pred_region
          %469 = dma.done [#allocation7], 1024
        $region128: #{tpu_custom_call.1} parent=115 // pred_fallthru
          _
        // Predicated region
        $region129: #{tpu_custom_call.1} parent=115 // pred_check
          %p470 = pneg %p124
        $region130: #{tpu_custom_call.1} parent=115 // pred_check_branch
          %472 = sbr.rel (%p470) target = $region132
        $region131: #{tpu_custom_call.1} parent=115 // pred_region
          %473 = dma.done [#allocation10], 4096
        $region132: #{tpu_custom_call.1} parent=115 // pred_fallthru
          _
        %s474 = sand.u32 %s23, 1
        %s475 = scalar_lea.sflag [#allocation7], %s474
        %s476 = sand.u32 %s158, 1
        %s477 = smul.addr %s476, 64
        %s478 = scalar_lea.vmem [#allocation11], %s477
        // Predicated region
        $region133: #{tpu_custom_call.1} parent=115 // pred_check
          %p479 = pneg %p171
        $region134: #{tpu_custom_call.1} parent=115 // pred_check_branch
          %481 = sbr.rel (%p479) target = $region136
        $region135: #{tpu_custom_call.1} parent=115 // pred_region
          %482 = dma.done %s475, 1024
        $region136: #{tpu_custom_call.1} parent=115 // pred_fallthru
          _
        %s483 = sand.u32 %s43, 1
        %s484 = sand.u32 %s43, 1
        %s485 = smul.addr %s484, 72
        %s486 = scalar_lea.vmem [#allocation4], %s485
        %p487 = pneg %p56
        %p488 = pneg %p53
        %s489 = sand.u32 %s69, 1
        %s490 = sand.u32 %s69, 1
        %s491 = smul.addr %s490, 72
        %s492 = scalar_lea.vmem [#allocation5], %s491
        %p493 = pneg %p82
        %p494 = pneg %p79
        %p495 = pneg %p103
        %p496 = pneg %p100
        %p497 = pneg %p124
        %p498 = pneg %p121
        %p499 = pneg %p145
        %p500 = pneg %p142
        %s501 = sand.u32 %s23, 1
        %s502 = scalar_lea.sflag [#allocation7], %s501
        %s503 = sand.u32 %s158, 1
        %s504 = smul.addr %s503, 64
        %s505 = scalar_lea.vmem [#allocation11], %s504
        %p506 = pneg %p171
        %p507 = pneg %p168
        %p508 = scmp.lt.s32.totalorder %s28, 1
        %s509 = scalar_select %p508, %s28, 1
        %s510 = scalar_lea.vmem %s6, %s509
        %p511 = pneg %p197
        %p512 = pneg %p194
        %p513 = pneg %p225
        %p514 = pneg %p222
        %s515 = sand.u32 %s212, 1
        %s516 = scalar_lea.sflag [#allocation8], %s515
        %s517 = sand.u32 %s212, 1
        %s518 = smul.addr %s517, 72
        %s519 = scalar_lea.vmem [#allocation12], %s518
        %p520 = scmp.lt.s32.totalorder %s28, 1
        %s521 = scalar_select %p520, %s28, 1
        %s522 = scalar_lea.vmem %s6, %s521
        %p524 = scmp.eq.s32.totalorder %s28, 0
        // Predicated region
        $region137: #{tpu_custom_call.1} parent=115 // pred_check
          %p525 = pneg %p524
        $region138: #{tpu_custom_call.1} parent=115 // pred_check_branch
          %527 = sbr.rel (%p525) target = $region140
        $region139: #{tpu_custom_call.1} parent=115 // pred_region
          %v528 = vld [vmem:[%s455] sm:$0xff]
          %v529 = vld [vmem:[%s455 + $0x8] sm:$0xff]
          %v530 = vld [vmem:[%s455 + $0x10] sm:$0xff]
          %v531 = vld [vmem:[%s455 + $0x18] sm:$0xff]
          %v532 = vld [vmem:[%s455 + $0x20] sm:$0xff]
          %v533 = vld [vmem:[%s455 + $0x28] sm:$0xff]
          %v534 = vld [vmem:[%s455 + $0x30] sm:$0xff]
          %v535 = vld [vmem:[%s455 + $0x38] sm:$0xff]
          %v536 = vld [vmem:[%s455 + $0x40] sm:$0xff]
          %v537 = vpack.c.bf16 %v529, %v528
          %v538 = vpack.c.bf16 %v531, %v530
          %v539 = vpack.c.bf16 %v533, %v532
          %v540 = vpack.c.bf16 %v535, %v534
          %v541 = vpack.c.bf16 %v536, %v536
          %v542 = vld [vmem:[#allocation6] sm:$0xff]
          %v543 = vld [vmem:[#allocation6 + $0x8] sm:$0xff]
          %v544 = vld [vmem:[#allocation6 + $0x10] sm:$0xff]
          %v545 = vld [vmem:[#allocation6 + $0x18] sm:$0xff]
          %v546 = vld [vmem:[#allocation6 + $0x20] sm:$0xff]
          %v547 = vld [vmem:[#allocation6 + $0x28] sm:$0xff]
          %v548 = vld [vmem:[#allocation6 + $0x30] sm:$0xff]
          %v549 = vld [vmem:[#allocation6 + $0x38] sm:$0xff]
          %v550 = vld [vmem:[%s4] sm:$0xf]
          %v552 = vlaneseq
          %v553 = vshrl.u32 %v552, 7
          %v554 = vsub.s32 0, %v553
          %v555 = vrot.slane %v550, %v554
          %v556 = vlaneseq
          %v557 = vshrl.u32 %v556, 7
          %v558 = vsub.s32 1, %v557
          %v559 = vrot.slane %v550, %v558
          %v560 = vlaneseq
          %v561 = vshrl.u32 %v560, 7
          %v562 = vsub.s32 2, %v561
          %v563 = vrot.slane %v550, %v562
          %v564 = vlaneseq
          %v565 = vshrl.u32 %v564, 7
          %v566 = vsub.s32 3, %v565
          %v567 = vrot.slane %v550, %v566
          %v580 = vunpack.c.l.b16 %v542
          %v581 = vunpack.c.h.b16 %v542
          %v582 = vunpack.c.l.b16 %v543
          %v583 = vunpack.c.h.b16 %v543
          %v584 = vunpack.c.l.b16 %v544
          %v585 = vunpack.c.h.b16 %v544
          %v586 = vunpack.c.l.b16 %v545
          %v587 = vunpack.c.h.b16 %v545
          %v588 = vunpack.c.l.b16 %v546
          %v589 = vunpack.c.h.b16 %v546
          %v590 = vunpack.c.l.b16 %v547
          %v591 = vunpack.c.h.b16 %v547
          %v592 = vunpack.c.l.b16 %v548
          %v593 = vunpack.c.h.b16 %v548
          %v594 = vunpack.c.l.b16 %v549
          %v595 = vunpack.c.h.b16 %v549
          %v596 = vpack.c.b16 %v584, %v580
          %v597 = vpack.c.b16 %v585, %v581
          %v598 = vpack.c.b16 %v586, %v582
          %v599 = vpack.c.b16 %v587, %v583
          %v600 = vpack.c.b16 %v592, %v588
          %v601 = vpack.c.b16 %v593, %v589
          %v602 = vpack.c.b16 %v594, %v590
          %v603 = vpack.c.b16 %v595, %v591
          %vm612 = vcmask 261120
          %v614 = vsel %vm612, %v537, 0
          %v617 = vsel %vm612, %v538, 0
          %v620 = vsel %vm612, %v539, 0
          %v623 = vsel %vm612, %v540, 0
          %v626 = vsel %vm612, %v541, 0
          %628 = vmatprep.subr.bf16.mxu0 %v597
          %629 = vmatpush1.bf16.msra.mxu0 %v596
          %630 = vmatprep.subr.bf16.mxu0 %v601
          %631 = vmatpush1.bf16.msra.mxu0 %v600
          %632 = vmatprep.subr.bf16.mxu0 0
          %633 = vmatpush1.bf16.msra.mxu0 0
          %634 = vmatprep.subr.bf16.mxu0 0
          %635 = vmatpush1.bf16.msra.mxu0 0
          %636 = vmatprep.subr.bf16.mxu0 0
          %637 = vmatpush1.bf16.msra.mxu0 0
          %638 = vmatprep.subr.bf16.mxu0 0
          %639 = vmatpush1.bf16.msra.mxu0 0
          %640 = vmatprep.subr.bf16.mxu0 0
          %641 = vmatpush1.bf16.msra.mxu0 0
          %642 = vmatprep.subr.bf16.mxu0 0
          %643 = vmatpush1.bf16.msra.mxu0 0
          %644 = vmatprep.subr.bf16.mxu0 0
          %645 = vmatpush1.bf16.msra.mxu0 0
          %646 = vmatprep.subr.bf16.mxu0 0
          %647 = vmatpush1.bf16.msra.mxu0 0
          %648 = vmatprep.subr.bf16.mxu0 0
          %649 = vmatpush1.bf16.msra.mxu0 0
          %650 = vmatprep.subr.bf16.mxu0 0
          %651 = vmatpush1.bf16.msra.mxu0 0
          %652 = vmatprep.subr.bf16.mxu0 0
          %653 = vmatpush1.bf16.msra.mxu0 0
          %654 = vmatprep.subr.bf16.mxu0 0
          %655 = vmatpush1.bf16.msra.mxu0 0
          %656 = vmatprep.subr.bf16.mxu0 0
          %657 = vmatpush1.bf16.msra.mxu0 0
          %658 = vmatprep.subr.bf16.mxu0 0
          %659 = vmatpush1.bf16.msra.mxu0 0
          %660 = vmatprep.mubr.bf16.mxu0 0
          %661 = vmatmul.mubr.bf16.gmra.mrb[0].mxu0 %v614
          %v662 = vpop.f32.mrb[0].mxu0
          %v663 = vadd.f32 %v555, %v662
          %v664 = vpop.f32.mrb[0].mxu0
          %v665 = vadd.f32 %v559, %v664
          %v666 = vpop.f32.mrb[0].mxu0
          %v667 = vadd.f32 %v555, %v666
          %v668 = vpop.f32.mrb[0].mxu0
          %v669 = vadd.f32 %v559, %v668
          %670 = vmatprep.mubr.bf16.mxu0 0
          %671 = vmatmul.mubr.bf16.gmra.mrb[0].mxu0 %v617
          %v672 = vpop.f32.mrb[0].mxu0
          %v673 = vadd.f32 %v555, %v672
          %v674 = vpop.f32.mrb[0].mxu0
          %v675 = vadd.f32 %v559, %v674
          %v676 = vpop.f32.mrb[0].mxu0
          %v677 = vadd.f32 %v555, %v676
          %v678 = vpop.f32.mrb[0].mxu0
          %v679 = vadd.f32 %v559, %v678
          %680 = vmatprep.mubr.bf16.mxu0 0
          %681 = vmatmul.mubr.bf16.gmra.mrb[0].mxu0 %v620
          %v682 = vpop.f32.mrb[0].mxu0
          %v683 = vadd.f32 %v555, %v682
          %v684 = vpop.f32.mrb[0].mxu0
          %v685 = vadd.f32 %v559, %v684
          %v686 = vpop.f32.mrb[0].mxu0
          %v687 = vadd.f32 %v555, %v686
          %v688 = vpop.f32.mrb[0].mxu0
          %v689 = vadd.f32 %v559, %v688
          %690 = vmatprep.mubr.bf16.mxu0 0
          %691 = vmatmul.mubr.bf16.gmra.mrb[0].mxu0 %v623
          %v692 = vpop.f32.mrb[0].mxu0
          %v693 = vadd.f32 %v555, %v692
          %v694 = vpop.f32.mrb[0].mxu0
          %v695 = vadd.f32 %v559, %v694
          %v696 = vpop.f32.mrb[0].mxu0
          %v697 = vadd.f32 %v555, %v696
          %v698 = vpop.f32.mrb[0].mxu0
          %v699 = vadd.f32 %v559, %v698
          %700 = vmatprep.mubr.bf16.mxu0 0
          %701 = vmatmul.mubr.bf16.gmra.mrb[0].mxu0 %v626
          %v702 = vpop.f32.mrb[0].mxu0
          %v703 = vadd.f32 %v555, %v702
          %v704 = vpop.f32.mrb[0].mxu0
          %v705 = vadd.f32 %v559, %v704
          %v706 = vpop.f32.mrb[0].mxu0
          %v707 = vpop.f32.mrb[0].mxu0
          %708 = vdwg.mxu0
          %709 = vmatprep.subr.bf16.mxu0 %v599
          %710 = vmatpush1.bf16.msra.mxu0 %v598
          %711 = vmatprep.subr.bf16.mxu0 %v603
          %712 = vmatpush1.bf16.msra.mxu0 %v602
          %713 = vmatprep.subr.bf16.mxu0 0
          %714 = vmatpush1.bf16.msra.mxu0 0
          %715 = vmatprep.subr.bf16.mxu0 0
          %716 = vmatpush1.bf16.msra.mxu0 0
          %717 = vmatprep.subr.bf16.mxu0 0
          %718 = vmatpush1.bf16.msra.mxu0 0
          %719 = vmatprep.subr.bf16.mxu0 0
          %720 = vmatpush1.bf16.msra.mxu0 0
          %721 = vmatprep.subr.bf16.mxu0 0
          %722 = vmatpush1.bf16.msra.mxu0 0
          %723 = vmatprep.subr.bf16.mxu0 0
          %724 = vmatpush1.bf16.msra.mxu0 0
          %725 = vmatprep.subr.bf16.mxu0 0
          %726 = vmatpush1.bf16.msra.mxu0 0
          %727 = vmatprep.subr.bf16.mxu0 0
          %728 = vmatpush1.bf16.msra.mxu0 0
          %729 = vmatprep.subr.bf16.mxu0 0
          %730 = vmatpush1.bf16.msra.mxu0 0
          %731 = vmatprep.subr.bf16.mxu0 0
          %732 = vmatpush1.bf16.msra.mxu0 0
          %733 = vmatprep.subr.bf16.mxu0 0
          %734 = vmatpush1.bf16.msra.mxu0 0
          %735 = vmatprep.subr.bf16.mxu0 0
          %736 = vmatpush1.bf16.msra.mxu0 0
          %737 = vmatprep.subr.bf16.mxu0 0
          %738 = vmatpush1.bf16.msra.mxu0 0
          %739 = vmatprep.subr.bf16.mxu0 0
          %740 = vmatpush1.bf16.msra.mxu0 0
          %741 = vmatprep.mubr.bf16.mxu0 0
          %742 = vmatmul.mubr.bf16.gmra.mrb[0].mxu0 %v614
          %v743 = vpop.f32.mrb[0].mxu0
          %v744 = vadd.f32 %v563, %v743
          %v745 = vpop.f32.mrb[0].mxu0
          %v746 = vadd.f32 %v567, %v745
          %v747 = vpop.f32.mrb[0].mxu0
          %v748 = vadd.f32 %v563, %v747
          %v749 = vpop.f32.mrb[0].mxu0
          %v750 = vadd.f32 %v567, %v749
          %751 = vmatprep.mubr.bf16.mxu0 0
          %752 = vmatmul.mubr.bf16.gmra.mrb[0].mxu0 %v617
          %v753 = vpop.f32.mrb[0].mxu0
          %v754 = vadd.f32 %v563, %v753
          %v755 = vpop.f32.mrb[0].mxu0
          %v756 = vadd.f32 %v567, %v755
          %v757 = vpop.f32.mrb[0].mxu0
          %v758 = vadd.f32 %v563, %v757
          %v759 = vpop.f32.mrb[0].mxu0
          %v760 = vadd.f32 %v567, %v759
          %761 = vmatprep.mubr.bf16.mxu0 0
          %762 = vmatmul.mubr.bf16.gmra.mrb[0].mxu0 %v620
          %v763 = vpop.f32.mrb[0].mxu0
          %v764 = vadd.f32 %v563, %v763
          %v765 = vpop.f32.mrb[0].mxu0
          %v766 = vadd.f32 %v567, %v765
          %v767 = vpop.f32.mrb[0].mxu0
          %v768 = vadd.f32 %v563, %v767
          %v769 = vpop.f32.mrb[0].mxu0
          %v770 = vadd.f32 %v567, %v769
          %771 = vmatprep.mubr.bf16.mxu0 0
          %772 = vmatmul.mubr.bf16.gmra.mrb[0].mxu0 %v623
          %v773 = vpop.f32.mrb[0].mxu0
          %v774 = vadd.f32 %v563, %v773
          %v775 = vpop.f32.mrb[0].mxu0
          %v776 = vadd.f32 %v567, %v775
          %v777 = vpop.f32.mrb[0].mxu0
          %v778 = vadd.f32 %v563, %v777
          %v779 = vpop.f32.mrb[0].mxu0
          %v780 = vadd.f32 %v567, %v779
          %781 = vmatprep.mubr.bf16.mxu0 0
          %782 = vmatmul.mubr.bf16.gmra.mrb[0].mxu0 %v626
          %v783 = vpop.f32.mrb[0].mxu0
          %v784 = vadd.f32 %v563, %v783
          %v785 = vpop.f32.mrb[0].mxu0
          %v786 = vadd.f32 %v567, %v785
          %v787 = vpop.f32.mrb[0].mxu0
          %v788 = vpop.f32.mrb[0].mxu0
          %789 = vdwg.mxu0
          %790 = vst [vmem:[#allocation2] sm:$0xff] %v663
          %791 = vst [vmem:[#allocation2 + $0x8] sm:$0xff] %v665
          %792 = vst [vmem:[#allocation2 + $0x10] sm:$0xff] %v744
          %793 = vst [vmem:[#allocation2 + $0x18] sm:$0xff] %v746
          %794 = vst [vmem:[#allocation2 + $0x20] sm:$0xff] %v667
          %795 = vst [vmem:[#allocation2 + $0x28] sm:$0xff] %v669
          %796 = vst [vmem:[#allocation2 + $0x30] sm:$0xff] %v748
          %797 = vst [vmem:[#allocation2 + $0x38] sm:$0xff] %v750
          %798 = vst [vmem:[#allocation2 + $0x40] sm:$0xff] %v673
          %799 = vst [vmem:[#allocation2 + $0x48] sm:$0xff] %v675
          %800 = vst [vmem:[#allocation2 + $0x50] sm:$0xff] %v754
          %801 = vst [vmem:[#allocation2 + $0x58] sm:$0xff] %v756
          %802 = vst [vmem:[#allocation2 + $0x60] sm:$0xff] %v677
          %803 = vst [vmem:[#allocation2 + $0x68] sm:$0xff] %v679
          %804 = vst [vmem:[#allocation2 + $0x70] sm:$0xff] %v758
          %805 = vst [vmem:[#allocation2 + $0x78] sm:$0xff] %v760
          %806 = vst [vmem:[#allocation2 + $0x80] sm:$0xff] %v683
          %807 = vst [vmem:[#allocation2 + $0x88] sm:$0xff] %v685
          %808 = vst [vmem:[#allocation2 + $0x90] sm:$0xff] %v764
          %809 = vst [vmem:[#allocation2 + $0x98] sm:$0xff] %v766
          %810 = vst [vmem:[#allocation2 + $0xa0] sm:$0xff] %v687
          %811 = vst [vmem:[#allocation2 + $0xa8] sm:$0xff] %v689
          %812 = vst [vmem:[#allocation2 + $0xb0] sm:$0xff] %v768
          %813 = vst [vmem:[#allocation2 + $0xb8] sm:$0xff] %v770
          %814 = vst [vmem:[#allocation2 + $0xc0] sm:$0xff] %v693
          %815 = vst [vmem:[#allocation2 + $0xc8] sm:$0xff] %v695
          %816 = vst [vmem:[#allocation2 + $0xd0] sm:$0xff] %v774
          %817 = vst [vmem:[#allocation2 + $0xd8] sm:$0xff] %v776
          %818 = vst [vmem:[#allocation2 + $0xe0] sm:$0xff] %v697
          %819 = vst [vmem:[#allocation2 + $0xe8] sm:$0xff] %v699
          %820 = vst [vmem:[#allocation2 + $0xf0] sm:$0xff] %v778
          %821 = vst [vmem:[#allocation2 + $0xf8] sm:$0xff] %v780
          %822 = vst [vmem:[#allocation2 + $0x100] sm:$0xff] %v703
          %823 = vst [vmem:[#allocation2 + $0x108] sm:$0xff] %v705
          %824 = vst [vmem:[#allocation2 + $0x110] sm:$0xff] %v784
          %825 = vst [vmem:[#allocation2 + $0x118] sm:$0xff] %v786
          %v826 = vld [vmem:[#allocation9] sm:$0xff]
          %v827 = vld [vmem:[#allocation9 + $0x8] sm:$0xff]
          %v828 = vld [vmem:[#allocation9 + $0x10] sm:$0xff]
          %v829 = vld [vmem:[#allocation9 + $0x18] sm:$0xff]
          %v830 = vld [vmem:[#allocation9 + $0x20] sm:$0xff]
          %v831 = vld [vmem:[#allocation9 + $0x28] sm:$0xff]
          %v832 = vld [vmem:[#allocation9 + $0x30] sm:$0xff]
          %v833 = vld [vmem:[#allocation9 + $0x38] sm:$0xff]
          %v834 = vld [vmem:[#allocation9 + $0x40] sm:$0xff]
          %v835 = vld [vmem:[#allocation9 + $0x48] sm:$0xff]
          %v836 = vld [vmem:[#allocation9 + $0x50] sm:$0xff]
          %v837 = vld [vmem:[#allocation9 + $0x58] sm:$0xff]
          %v838 = vld [vmem:[#allocation9 + $0x60] sm:$0xff]
          %v839 = vld [vmem:[#allocation9 + $0x68] sm:$0xff]
          %v840 = vld [vmem:[#allocation9 + $0x70] sm:$0xff]
          %v841 = vld [vmem:[#allocation9 + $0x78] sm:$0xff]
          %v842 = vld [vmem:[#allocation9 + $0x80] sm:$0xff]
          %v843 = vld [vmem:[#allocation9 + $0x88] sm:$0xff]
          %v844 = vld [vmem:[#allocation9 + $0x90] sm:$0xff]
          %v845 = vld [vmem:[#allocation9 + $0x98] sm:$0xff]
          %v846 = vld [vmem:[#allocation9 + $0xa0] sm:$0xff]
          %v847 = vld [vmem:[#allocation9 + $0xa8] sm:$0xff]
          %v848 = vld [vmem:[#allocation9 + $0xb0] sm:$0xff]
          %v849 = vld [vmem:[#allocation9 + $0xb8] sm:$0xff]
          %v850 = vld [vmem:[#allocation9 + $0xc0] sm:$0xff]
          %v851 = vld [vmem:[#allocation9 + $0xc8] sm:$0xff]
          %v852 = vld [vmem:[#allocation9 + $0xd0] sm:$0xff]
          %v853 = vld [vmem:[#allocation9 + $0xd8] sm:$0xff]
          %v854 = vld [vmem:[#allocation9 + $0xe0] sm:$0xff]
          %v855 = vld [vmem:[#allocation9 + $0xe8] sm:$0xff]
          %v856 = vld [vmem:[#allocation9 + $0xf0] sm:$0xff]
          %v857 = vld [vmem:[#allocation9 + $0xf8] sm:$0xff]
          %v858 = vld [vmem:[#allocation2] sm:$0xff]
          %v859 = vld [vmem:[#allocation2 + $0x8] sm:$0xff]
          %v860 = vld [vmem:[#allocation2 + $0x10] sm:$0xff]
          %v861 = vld [vmem:[#allocation2 + $0x18] sm:$0xff]
          %v894 = vunpack.c.l.b16 %v826
          %v895 = vunpack.c.h.b16 %v826
          %v896 = vunpack.c.l.b16 %v827
          %v897 = vunpack.c.h.b16 %v827
          %v898 = vunpack.c.l.b16 %v828
          %v899 = vunpack.c.h.b16 %v828
          %v900 = vunpack.c.l.b16 %v829
          %v901 = vunpack.c.h.b16 %v829
          %v902 = vunpack.c.l.b16 %v830
          %v903 = vunpack.c.h.b16 %v830
          %v904 = vunpack.c.l.b16 %v831
          %v905 = vunpack.c.h.b16 %v831
          %v906 = vunpack.c.l.b16 %v832
          %v907 = vunpack.c.h.b16 %v832
          %v908 = vunpack.c.l.b16 %v833
          %v909 = vunpack.c.h.b16 %v833
          %v910 = vunpack.c.l.b16 %v834
          %v911 = vunpack.c.h.b16 %v834
          %v912 = vunpack.c.l.b16 %v835
          %v913 = vunpack.c.h.b16 %v835
          %v914 = vunpack.c.l.b16 %v836
          %v915 = vunpack.c.h.b16 %v836
          %v916 = vunpack.c.l.b16 %v837
          %v917 = vunpack.c.h.b16 %v837
          %v918 = vunpack.c.l.b16 %v838
          %v919 = vunpack.c.h.b16 %v838
          %v920 = vunpack.c.l.b16 %v839
          %v921 = vunpack.c.h.b16 %v839
          %v922 = vunpack.c.l.b16 %v840
          %v923 = vunpack.c.h.b16 %v840
          %v924 = vunpack.c.l.b16 %v841
          %v925 = vunpack.c.h.b16 %v841
          %v926 = vunpack.c.l.b16 %v842
          %v927 = vunpack.c.h.b16 %v842
          %v928 = vunpack.c.l.b16 %v843
          %v929 = vunpack.c.h.b16 %v843
          %v930 = vunpack.c.l.b16 %v844
          %v931 = vunpack.c.h.b16 %v844
          %v932 = vunpack.c.l.b16 %v845
          %v933 = vunpack.c.h.b16 %v845
          %v934 = vunpack.c.l.b16 %v846
          %v935 = vunpack.c.h.b16 %v846
          %v936 = vunpack.c.l.b16 %v847
          %v937 = vunpack.c.h.b16 %v847
          %v938 = vunpack.c.l.b16 %v848
          %v939 = vunpack.c.h.b16 %v848
          %v940 = vunpack.c.l.b16 %v849
          %v941 = vunpack.c.h.b16 %v849
          %v942 = vunpack.c.l.b16 %v850
          %v943 = vunpack.c.h.b16 %v850
          %v944 = vunpack.c.l.b16 %v851
          %v945 = vunpack.c.h.b16 %v851
          %v946 = vunpack.c.l.b16 %v852
          %v947 = vunpack.c.h.b16 %v852
          %v948 = vunpack.c.l.b16 %v853
          %v949 = vunpack.c.h.b16 %v853
          %v950 = vunpack.c.l.b16 %v854
          %v951 = vunpack.c.h.b16 %v854
          %v952 = vunpack.c.l.b16 %v855
          %v953 = vunpack.c.h.b16 %v855
          %v954 = vunpack.c.l.b16 %v856
          %v955 = vunpack.c.h.b16 %v856
          %v956 = vunpack.c.l.b16 %v857
          %v957 = vunpack.c.h.b16 %v857
          %v958 = vpack.c.b16 %v898, %v894
          %v959 = vpack.c.b16 %v899, %v895
          %v960 = vpack.c.b16 %v900, %v896
          %v961 = vpack.c.b16 %v901, %v897
          %v962 = vpack.c.b16 %v906, %v902
          %v963 = vpack.c.b16 %v907, %v903
          %v964 = vpack.c.b16 %v908, %v904
          %v965 = vpack.c.b16 %v909, %v905
          %v966 = vpack.c.b16 %v914, %v910
          %v967 = vpack.c.b16 %v915, %v911
          %v968 = vpack.c.b16 %v916, %v912
          %v969 = vpack.c.b16 %v917, %v913
          %v970 = vpack.c.b16 %v922, %v918
          %v971 = vpack.c.b16 %v923, %v919
          %v972 = vpack.c.b16 %v924, %v920
          %v973 = vpack.c.b16 %v925, %v921
          %v974 = vpack.c.b16 %v930, %v926
          %v975 = vpack.c.b16 %v931, %v927
          %v976 = vpack.c.b16 %v932, %v928
          %v977 = vpack.c.b16 %v933, %v929
          %v978 = vpack.c.b16 %v938, %v934
          %v979 = vpack.c.b16 %v939, %v935
          %v980 = vpack.c.b16 %v940, %v936
          %v981 = vpack.c.b16 %v941, %v937
          %v982 = vpack.c.b16 %v946, %v942
          %v983 = vpack.c.b16 %v947, %v943
          %v984 = vpack.c.b16 %v948, %v944
          %v985 = vpack.c.b16 %v949, %v945
          %v986 = vpack.c.b16 %v954, %v950
          %v987 = vpack.c.b16 %v955, %v951
          %v988 = vpack.c.b16 %v956, %v952
          %v989 = vpack.c.b16 %v957, %v953
          %1022 = vmatprep.subr.bf16.mxu0 %v959
          %1023 = vmatpush1.bf16.msra.mxu0 %v958
          %1024 = vmatprep.subr.bf16.mxu0 %v963
          %1025 = vmatpush1.bf16.msra.mxu0 %v962
          %1026 = vmatprep.subr.bf16.mxu0 %v967
          %1027 = vmatpush1.bf16.msra.mxu0 %v966
          %1028 = vmatprep.subr.bf16.mxu0 %v971
          %1029 = vmatpush1.bf16.msra.mxu0 %v970
          %1030 = vmatprep.subr.bf16.mxu0 %v975
          %1031 = vmatpush1.bf16.msra.mxu0 %v974
          %1032 = vmatprep.subr.bf16.mxu0 %v979
          %1033 = vmatpush1.bf16.msra.mxu0 %v978
          %1034 = vmatprep.subr.bf16.mxu0 %v983
          %1035 = vmatpush1.bf16.msra.mxu0 %v982
          %1036 = vmatprep.subr.bf16.mxu0 %v987
          %1037 = vmatpush1.bf16.msra.mxu0 %v986
          %1038 = vmatprep.subr.bf16.mxu0 0
          %1039 = vmatpush1.bf16.msra.mxu0 0
          %1040 = vmatprep.subr.bf16.mxu0 0
          %1041 = vmatpush1.bf16.msra.mxu0 0
          %1042 = vmatprep.subr.bf16.mxu0 0
          %1043 = vmatpush1.bf16.msra.mxu0 0
          %1044 = vmatprep.subr.bf16.mxu0 0
          %1045 = vmatpush1.bf16.msra.mxu0 0
          %1046 = vmatprep.subr.bf16.mxu0 0
          %1047 = vmatpush1.bf16.msra.mxu0 0
          %1048 = vmatprep.subr.bf16.mxu0 0
          %1049 = vmatpush1.bf16.msra.mxu0 0
          %1050 = vmatprep.subr.bf16.mxu0 0
          %1051 = vmatpush1.bf16.msra.mxu0 0
          %1052 = vmatprep.subr.bf16.mxu0 0
          %1053 = vmatpush1.bf16.msra.mxu0 0
          %1054 = vmatprep.mubr.bf16.mxu0 0
          %1055 = vmatmul.mubr.bf16.gmra.mrb[0].mxu0 0
          %v1056 = vpop.f32.mrb[0].mxu0
          %v1057 = vadd.f32 0.0, %v1056
          %v1058 = vpop.f32.mrb[0].mxu0
          %v1059 = vadd.f32 0.0, %v1058
          %v1060 = vpop.f32.mrb[0].mxu0
          %v1061 = vpop.f32.mrb[0].mxu0
          %1062 = vdwg.mxu0
          %1063 = vmatprep.subr.bf16.mxu0 %v961
          %1064 = vmatpush1.bf16.msra.mxu0 %v960
          %1065 = vmatprep.subr.bf16.mxu0 %v965
          %1066 = vmatpush1.bf16.msra.mxu0 %v964
          %1067 = vmatprep.subr.bf16.mxu0 %v969
          %1068 = vmatpush1.bf16.msra.mxu0 %v968
          %1069 = vmatprep.subr.bf16.mxu0 %v973
          %1070 = vmatpush1.bf16.msra.mxu0 %v972
          %1071 = vmatprep.subr.bf16.mxu0 %v977
          %1072 = vmatpush1.bf16.msra.mxu0 %v976
          %1073 = vmatprep.subr.bf16.mxu0 %v981
          %1074 = vmatpush1.bf16.msra.mxu0 %v980
          %1075 = vmatprep.subr.bf16.mxu0 %v985
          %1076 = vmatpush1.bf16.msra.mxu0 %v984
          %1077 = vmatprep.subr.bf16.mxu0 %v989
          %1078 = vmatpush1.bf16.msra.mxu0 %v988
          %1079 = vmatprep.subr.bf16.mxu0 0
          %1080 = vmatpush1.bf16.msra.mxu0 0
          %1081 = vmatprep.subr.bf16.mxu0 0
          %1082 = vmatpush1.bf16.msra.mxu0 0
          %1083 = vmatprep.subr.bf16.mxu0 0
          %1084 = vmatpush1.bf16.msra.mxu0 0
          %1085 = vmatprep.subr.bf16.mxu0 0
          %1086 = vmatpush1.bf16.msra.mxu0 0
          %1087 = vmatprep.subr.bf16.mxu0 0
          %1088 = vmatpush1.bf16.msra.mxu0 0
          %1089 = vmatprep.subr.bf16.mxu0 0
          %1090 = vmatpush1.bf16.msra.mxu0 0
          %1091 = vmatprep.subr.bf16.mxu0 0
          %1092 = vmatpush1.bf16.msra.mxu0 0
          %1093 = vmatprep.subr.bf16.mxu0 0
          %1094 = vmatpush1.bf16.msra.mxu0 0
          %1095 = vmatprep.mubr.bf16.mxu0 0
          %1096 = vmatmul.mubr.bf16.gmra.mrb[0].mxu0 0
          %v1097 = vpop.f32.mrb[0].mxu0
          %v1098 = vadd.f32 0.0, %v1097
          %v1099 = vpop.f32.mrb[0].mxu0
          %v1100 = vadd.f32 0.0, %v1099
          %v1101 = vpop.f32.mrb[0].mxu0
          %v1102 = vpop.f32.mrb[0].mxu0
          %1103 = vdwg.mxu0
          %v1104 = vadd.f32 %v858, %v1057
          %v1105 = vadd.f32 %v859, %v1059
          %v1106 = vadd.f32 %v860, %v1098
          %v1107 = vadd.f32 %v861, %v1100
          %v1108 = vxor.u32 %v1104, 2147483648
          %v1109 = vmul.f32 %v1108, 1.442695
          %v1110 = vpow.pop %v1109
          %v1111 = vadd.f32 %v1110, 1.0
          %v1112 = vrcp.pop %v1111
          %v1113 = vmul.f32 1.0, %v1112
          %v1114 = vxor.u32 %v1105, 2147483648
          %v1115 = vmul.f32 %v1114, 1.442695
          %v1116 = vpow.pop %v1115
          %v1117 = vadd.f32 %v1116, 1.0
          %v1118 = vrcp.pop %v1117
          %v1119 = vmul.f32 1.0, %v1118
          %v1120 = vtanh.pop %v1106
          %v1121 = vxor.u32 %v1107, 2147483648
          %v1122 = vmul.f32 %v1121, 1.442695
          %v1123 = vpow.pop %v1122
          %v1124 = vadd.f32 %v1123, 1.0
          %v1125 = vrcp.pop %v1124
          %v1126 = vmul.f32 1.0, %v1125
          %v1127 = vmul.f32 %v1119, 0.0
          %v1128 = vmul.f32 %v1113, %v1120
          %v1129 = vadd.f32 %v1127, %v1128
          %v1130 = vtanh.pop %v1129
          %v1131 = vmul.f32 %v1126, %v1130
          %v1132 = vld [vmem:[%s462] sm:$0xff]
          %1134 = vset.pattern.permute.xlu0 0
          %1135 = vperm.xlu0 %1134, %v1132
          %v1136 = vpop.permute.xlu0 %1135
          %v1138 = vmul.f32 %v1131, %v1136
          %v1139 = vpack.c.bf16 %v1138, %v1138
          %1140 = vst [vmem:[#allocation3] sm:$0xf] %v1139
          %s1141 = scalar_lea.vmem [#allocation2], 32
          %v1142 = vld [vmem:[%s1141] sm:$0xff]
          %v1143 = vld [vmem:[%s1141 + $0x8] sm:$0xff]
          %v1144 = vld [vmem:[%s1141 + $0x10] sm:$0xff]
          %v1145 = vld [vmem:[%s1141 + $0x18] sm:$0xff]
          %v1146 = vpack.c.bf16 %v1131, %v1131
          %1147 = vmatprep.subr.bf16.mxu0 %v959
          %1148 = vmatpush1.bf16.msra.mxu0 %v958
          %1149 = vmatprep.subr.bf16.mxu0 %v963
          %1150 = vmatpush1.bf16.msra.mxu0 %v962
          %1151 = vmatprep.subr.bf16.mxu0 %v967
          %1152 = vmatpush1.bf16.msra.mxu0 %v966
          %1153 = vmatprep.subr.bf16.mxu0 %v971
          %1154 = vmatpush1.bf16.msra.mxu0 %v970
          %1155 = vmatprep.subr.bf16.mxu0 %v975
          %1156 = vmatpush1.bf16.msra.mxu0 %v974
          %1157 = vmatprep.subr.bf16.mxu0 %v979
          %1158 = vmatpush1.bf16.msra.mxu0 %v978
          %1159 = vmatprep.subr.bf16.mxu0 %v983
          %1160 = vmatpush1.bf16.msra.mxu0 %v982
          %1161 = vmatprep.subr.bf16.mxu0 %v987
          %1162 = vmatpush1.bf16.msra.mxu0 %v986
          %1163 = vmatprep.subr.bf16.mxu0 0
          %1164 = vmatpush1.bf16.msra.mxu0 0
          %1165 = vmatprep.subr.bf16.mxu0 0
          %1166 = vmatpush1.bf16.msra.mxu0 0
          %1167 = vmatprep.subr.bf16.mxu0 0
          %1168 = vmatpush1.bf16.msra.mxu0 0
          %1169 = vmatprep.subr.bf16.mxu0 0
          %1170 = vmatpush1.bf16.msra.mxu0 0
          %1171 = vmatprep.subr.bf16.mxu0 0
          %1172 = vmatpush1.bf16.msra.mxu0 0
          %1173 = vmatprep.subr.bf16.mxu0 0
          %1174 = vmatpush1.bf16.msra.mxu0 0
          %1175 = vmatprep.subr.bf16.mxu0 0
          %1176 = vmatpush1.bf16.msra.mxu0 0
          %1177 = vmatprep.subr.bf16.mxu0 0
          %1178 = vmatpush1.bf16.msra.mxu0 0
          %1179 = vmatprep.mubr.bf16.mxu0 0
          %1180 = vmatmul.mubr.bf16.gmra.mrb[0].mxu0 %v1146
          %v1181 = vpop.f32.mrb[0].mxu0
          %v1182 = vadd.f32 0.0, %v1181
          %v1183 = vpop.f32.mrb[0].mxu0
          %v1184 = vadd.f32 0.0, %v1183
          %v1185 = vpop.f32.mrb[0].mxu0
          %v1186 = vpop.f32.mrb[0].mxu0
          %1187 = vdwg.mxu0
          %1188 = vmatprep.subr.bf16.mxu0 %v961
          %1189 = vmatpush1.bf16.msra.mxu0 %v960
          %1190 = vmatprep.subr.bf16.mxu0 %v965
          %1191 = vmatpush1.bf16.msra.mxu0 %v964
          %1192 = vmatprep.subr.bf16.mxu0 %v969
          %1193 = vmatpush1.bf16.msra.mxu0 %v968
          %1194 = vmatprep.subr.bf16.mxu0 %v973
          %1195 = vmatpush1.bf16.msra.mxu0 %v972
          %1196 = vmatprep.subr.bf16.mxu0 %v977
          %1197 = vmatpush1.bf16.msra.mxu0 %v976
          %1198 = vmatprep.subr.bf16.mxu0 %v981
          %1199 = vmatpush1.bf16.msra.mxu0 %v980
          %1200 = vmatprep.subr.bf16.mxu0 %v985
          %1201 = vmatpush1.bf16.msra.mxu0 %v984
          %1202 = vmatprep.subr.bf16.mxu0 %v989
          %1203 = vmatpush1.bf16.msra.mxu0 %v988
          %1204 = vmatprep.subr.bf16.mxu0 0
          %1205 = vmatpush1.bf16.msra.mxu0 0
          %1206 = vmatprep.subr.bf16.mxu0 0
          %1207 = vmatpush1.bf16.msra.mxu0 0
          %1208 = vmatprep.subr.bf16.mxu0 0
          %1209 = vmatpush1.bf16.msra.mxu0 0
          %1210 = vmatprep.subr.bf16.mxu0 0
          %1211 = vmatpush1.bf16.msra.mxu0 0
          %1212 = vmatprep.subr.bf16.mxu0 0
          %1213 = vmatpush1.bf16.msra.mxu0 0
          %1214 = vmatprep.subr.bf16.mxu0 0
          %1215 = vmatpush1.bf16.msra.mxu0 0
          %1216 = vmatprep.subr.bf16.mxu0 0
          %1217 = vmatpush1.bf16.msra.mxu0 0
          %1218 = vmatprep.subr.bf16.mxu0 0
          %1219 = vmatpush1.bf16.msra.mxu0 0
          %1220 = vmatprep.mubr.bf16.mxu0 0
          %1221 = vmatmul.mubr.bf16.gmra.mrb[0].mxu0 %v1146
          %v1222 = vpop.f32.mrb[0].mxu0
          %v1223 = vadd.f32 0.0, %v1222
          %v1224 = vpop.f32.mrb[0].mxu0
          %v1225 = vadd.f32 0.0, %v1224
          %v1226 = vpop.f32.mrb[0].mxu0
          %v1227 = vpop.f32.mrb[0].mxu0
          %1228 = vdwg.mxu0
          %v1229 = vadd.f32 %v1142, %v1182
          %v1230 = vadd.f32 %v1143, %v1184
          %v1231 = vadd.f32 %v1144, %v1223
          %v1232 = vadd.f32 %v1145, %v1225
          %v1233 = vxor.u32 %v1229, 2147483648
          %v1234 = vmul.f32 %v1233, 1.442695
          %v1235 = vpow.pop %v1234
          %v1236 = vadd.f32 %v1235, 1.0
          %v1237 = vrcp.pop %v1236
          %v1238 = vmul.f32 1.0, %v1237
          %v1239 = vxor.u32 %v1230, 2147483648
          %v1240 = vmul.f32 %v1239, 1.442695
          %v1241 = vpow.pop %v1240
          %v1242 = vadd.f32 %v1241, 1.0
          %v1243 = vrcp.pop %v1242
          %v1244 = vmul.f32 1.0, %v1243
          %v1245 = vtanh.pop %v1231
          %v1246 = vxor.u32 %v1232, 2147483648
          %v1247 = vmul.f32 %v1246, 1.442695
          %v1248 = vpow.pop %v1247
          %v1249 = vadd.f32 %v1248, 1.0
          %v1250 = vrcp.pop %v1249
          %v1251 = vmul.f32 1.0, %v1250
          %v1252 = vmul.f32 %v1244, %v1129
          %v1253 = vmul.f32 %v1238, %v1245
          %v1254 = vadd.f32 %v1252, %v1253
          %v1255 = vtanh.pop %v1254
          %v1256 = vmul.f32 %v1251, %v1255
          %s1257 = scalar_lea.vmem %s462, 8 [#allocation5]
          %v1258 = vld [vmem:[%s1257] sm:$0xff]
          %1260 = vset.pattern.permute.xlu0 0
          %1261 = vperm.xlu0 %1260, %v1258
          %v1262 = vpop.permute.xlu0 %1261
          %v1264 = vmul.f32 %v1256, %v1262
          %v1265 = vpack.c.bf16 %v1264, %v1264
          %s1266 = scalar_lea.vmem [#allocation3], 4
          %1267 = vst [vmem:[%s1266] sm:$0xf] %v1265
          %s1268 = scalar_lea.vmem [#allocation2], 64
          %v1269 = vld [vmem:[%s1268] sm:$0xff]
          %v1270 = vld [vmem:[%s1268 + $0x8] sm:$0xff]
          %v1271 = vld [vmem:[%s1268 + $0x10] sm:$0xff]
          %v1272 = vld [vmem:[%s1268 + $0x18] sm:$0xff]
          %v1273 = vpack.c.bf16 %v1256, %v1256
          %1274 = vmatprep.subr.bf16.mxu0 %v959
          %1275 = vmatpush1.bf16.msra.mxu0 %v958
          %1276 = vmatprep.subr.bf16.mxu0 %v963
          %1277 = vmatpush1.bf16.msra.mxu0 %v962
          %1278 = vmatprep.subr.bf16.mxu0 %v967
          %1279 = vmatpush1.bf16.msra.mxu0 %v966
          %1280 = vmatprep.subr.bf16.mxu0 %v971
          %1281 = vmatpush1.bf16.msra.mxu0 %v970
          %1282 = vmatprep.subr.bf16.mxu0 %v975
          %1283 = vmatpush1.bf16.msra.mxu0 %v974
          %1284 = vmatprep.subr.bf16.mxu0 %v979
          %1285 = vmatpush1.bf16.msra.mxu0 %v978
          %1286 = vmatprep.subr.bf16.mxu0 %v983
          %1287 = vmatpush1.bf16.msra.mxu0 %v982
          %1288 = vmatprep.subr.bf16.mxu0 %v987
          %1289 = vmatpush1.bf16.msra.mxu0 %v986
          %1290 = vmatprep.subr.bf16.mxu0 0
          %1291 = vmatpush1.bf16.msra.mxu0 0
          %1292 = vmatprep.subr.bf16.mxu0 0
          %1293 = vmatpush1.bf16.msra.mxu0 0
          %1294 = vmatprep.subr.bf16.mxu0 0
          %1295 = vmatpush1.bf16.msra.mxu0 0
          %1296 = vmatprep.subr.bf16.mxu0 0
          %1297 = vmatpush1.bf16.msra.mxu0 0
          %1298 = vmatprep.subr.bf16.mxu0 0
          %1299 = vmatpush1.bf16.msra.mxu0 0
          %1300 = vmatprep.subr.bf16.mxu0 0
          %1301 = vmatpush1.bf16.msra.mxu0 0
          %1302 = vmatprep.subr.bf16.mxu0 0
          %1303 = vmatpush1.bf16.msra.mxu0 0
          %1304 = vmatprep.subr.bf16.mxu0 0
          %1305 = vmatpush1.bf16.msra.mxu0 0
          %1306 = vmatprep.mubr.bf16.mxu0 0
          %1307 = vmatmul.mubr.bf16.gmra.mrb[0].mxu0 %v1273
          %v1308 = vpop.f32.mrb[0].mxu0
          %v1309 = vadd.f32 0.0, %v1308
          %v1310 = vpop.f32.mrb[0].mxu0
          %v1311 = vadd.f32 0.0, %v1310
          %v1312 = vpop.f32.mrb[0].mxu0
          %v1313 = vpop.f32.mrb[0].mxu0
          %1314 = vdwg.mxu0
          %1315 = vmatprep.subr.bf16.mxu0 %v961
          %1316 = vmatpush1.bf16.msra.mxu0 %v960
          %1317 = vmatprep.subr.bf16.mxu0 %v965
          %1318 = vmatpush1.bf16.msra.mxu0 %v964
          %1319 = vmatprep.subr.bf16.mxu0 %v969
          %1320 = vmatpush1.bf16.msra.mxu0 %v968
          %1321 = vmatprep.subr.bf16.mxu0 %v973
          %1322 = vmatpush1.bf16.msra.mxu0 %v972
          %1323 = vmatprep.subr.bf16.mxu0 %v977
          %1324 = vmatpush1.bf16.msra.mxu0 %v976
          %1325 = vmatprep.subr.bf16.mxu0 %v981
          %1326 = vmatpush1.bf16.msra.mxu0 %v980
          %1327 = vmatprep.subr.bf16.mxu0 %v985
          %1328 = vmatpush1.bf16.msra.mxu0 %v984
          %1329 = vmatprep.subr.bf16.mxu0 %v989
          %1330 = vmatpush1.bf16.msra.mxu0 %v988
          %1331 = vmatprep.subr.bf16.mxu0 0
          %1332 = vmatpush1.bf16.msra.mxu0 0
          %1333 = vmatprep.subr.bf16.mxu0 0
          %1334 = vmatpush1.bf16.msra.mxu0 0
          %1335 = vmatprep.subr.bf16.mxu0 0
          %1336 = vmatpush1.bf16.msra.mxu0 0
          %1337 = vmatprep.subr.bf16.mxu0 0
          %1338 = vmatpush1.bf16.msra.mxu0 0
          %1339 = vmatprep.subr.bf16.mxu0 0
          %1340 = vmatpush1.bf16.msra.mxu0 0
          %1341 = vmatprep.subr.bf16.mxu0 0
          %1342 = vmatpush1.bf16.msra.mxu0 0
          %1343 = vmatprep.subr.bf16.mxu0 0
          %1344 = vmatpush1.bf16.msra.mxu0 0
          %1345 = vmatprep.subr.bf16.mxu0 0
          %1346 = vmatpush1.bf16.msra.mxu0 0
          %1347 = vmatprep.mubr.bf16.mxu0 0
          %1348 = vmatmul.mubr.bf16.gmra.mrb[0].mxu0 %v1273
          %v1349 = vpop.f32.mrb[0].mxu0
          %v1350 = vadd.f32 0.0, %v1349
          %v1351 = vpop.f32.mrb[0].mxu0
          %v1352 = vadd.f32 0.0, %v1351
          %v1353 = vpop.f32.mrb[0].mxu0
          %v1354 = vpop.f32.mrb[0].mxu0
          %1355 = vdwg.mxu0
          %v1356 = vadd.f32 %v1269, %v1309
          %v1357 = vadd.f32 %v1270, %v1311
          %v1358 = vadd.f32 %v1271, %v1350
          %v1359 = vadd.f32 %v1272, %v1352
          %v1360 = vxor.u32 %v1356, 2147483648
          %v1361 = vmul.f32 %v1360, 1.442695
          %v1362 = vpow.pop %v1361
          %v1363 = vadd.f32 %v1362, 1.0
          %v1364 = vrcp.pop %v1363
          %v1365 = vmul.f32 1.0, %v1364
          %v1366 = vxor.u32 %v1357, 2147483648
          %v1367 = vmul.f32 %v1366, 1.442695
          %v1368 = vpow.pop %v1367
          %v1369 = vadd.f32 %v1368, 1.0
          %v1370 = vrcp.pop %v1369
          %v1371 = vmul.f32 1.0, %v1370
          %v1372 = vtanh.pop %v1358
          %v1373 = vxor.u32 %v1359, 2147483648
          %v1374 = vmul.f32 %v1373, 1.442695
          %v1375 = vpow.pop %v1374
          %v1376 = vadd.f32 %v1375, 1.0
          %v1377 = vrcp.pop %v1376
          %v1378 = vmul.f32 1.0, %v1377
          %v1379 = vmul.f32 %v1371, %v1254
          %v1380 = vmul.f32 %v1365, %v1372
          %v1381 = vadd.f32 %v1379, %v1380
          %v1382 = vtanh.pop %v1381
          %v1383 = vmul.f32 %v1378, %v1382
          %s1384 = scalar_lea.vmem %s462, 16 [#allocation5]
          %v1385 = vld [vmem:[%s1384] sm:$0xff]
          %1387 = vset.pattern.permute.xlu0 0
          %1388 = vperm.xlu0 %1387, %v1385
          %v1389 = vpop.permute.xlu0 %1388
          %v1391 = vmul.f32 %v1383, %v1389
          %v1392 = vpack.c.bf16 %v1391, %v1391
          %s1393 = scalar_lea.vmem [#allocation3], 8
          %1394 = vst [vmem:[%s1393] sm:$0xf] %v1392
          %s1395 = scalar_lea.vmem [#allocation2], 96
          %v1396 = vld [vmem:[%s1395] sm:$0xff]
          %v1397 = vld [vmem:[%s1395 + $0x8] sm:$0xff]
          %v1398 = vld [vmem:[%s1395 + $0x10] sm:$0xff]
          %v1399 = vld [vmem:[%s1395 + $0x18] sm:$0xff]
          %v1400 = vpack.c.bf16 %v1383, %v1383
          %1401 = vmatprep.subr.bf16.mxu0 %v959
          %1402 = vmatpush1.bf16.msra.mxu0 %v958
          %1403 = vmatprep.subr.bf16.mxu0 %v963
          %1404 = vmatpush1.bf16.msra.mxu0 %v962
          %1405 = vmatprep.subr.bf16.mxu0 %v967
          %1406 = vmatpush1.bf16.msra.mxu0 %v966
          %1407 = vmatprep.subr.bf16.mxu0 %v971
          %1408 = vmatpush1.bf16.msra.mxu0 %v970
          %1409 = vmatprep.subr.bf16.mxu0 %v975
          %1410 = vmatpush1.bf16.msra.mxu0 %v974
          %1411 = vmatprep.subr.bf16.mxu0 %v979
          %1412 = vmatpush1.bf16.msra.mxu0 %v978
          %1413 = vmatprep.subr.bf16.mxu0 %v983
          %1414 = vmatpush1.bf16.msra.mxu0 %v982
          %1415 = vmatprep.subr.bf16.mxu0 %v987
          %1416 = vmatpush1.bf16.msra.mxu0 %v986
          %1417 = vmatprep.subr.bf16.mxu0 0
          %1418 = vmatpush1.bf16.msra.mxu0 0
          %1419 = vmatprep.subr.bf16.mxu0 0
          %1420 = vmatpush1.bf16.msra.mxu0 0
          %1421 = vmatprep.subr.bf16.mxu0 0
          %1422 = vmatpush1.bf16.msra.mxu0 0
          %1423 = vmatprep.subr.bf16.mxu0 0
          %1424 = vmatpush1.bf16.msra.mxu0 0
          %1425 = vmatprep.subr.bf16.mxu0 0
          %1426 = vmatpush1.bf16.msra.mxu0 0
          %1427 = vmatprep.subr.bf16.mxu0 0
          %1428 = vmatpush1.bf16.msra.mxu0 0
          %1429 = vmatprep.subr.bf16.mxu0 0
          %1430 = vmatpush1.bf16.msra.mxu0 0
          %1431 = vmatprep.subr.bf16.mxu0 0
          %1432 = vmatpush1.bf16.msra.mxu0 0
          %1433 = vmatprep.mubr.bf16.mxu0 0
          %1434 = vmatmul.mubr.bf16.gmra.mrb[0].mxu0 %v1400
          %v1435 = vpop.f32.mrb[0].mxu0
          %v1436 = vadd.f32 0.0, %v1435
          %v1437 = vpop.f32.mrb[0].mxu0
          %v1438 = vadd.f32 0.0, %v1437
          %v1439 = vpop.f32.mrb[0].mxu0
          %v1440 = vpop.f32.mrb[0].mxu0
          %1441 = vdwg.mxu0
          %1442 = vmatprep.subr.bf16.mxu0 %v961
          %1443 = vmatpush1.bf16.msra.mxu0 %v960
          %1444 = vmatprep.subr.bf16.mxu0 %v965
          %1445 = vmatpush1.bf16.msra.mxu0 %v964
          %1446 = vmatprep.subr.bf16.mxu0 %v969
          %1447 = vmatpush1.bf16.msra.mxu0 %v968
          %1448 = vmatprep.subr.bf16.mxu0 %v973
          %1449 = vmatpush1.bf16.msra.mxu0 %v972
          %1450 = vmatprep.subr.bf16.mxu0 %v977
          %1451 = vmatpush1.bf16.msra.mxu0 %v976
          %1452 = vmatprep.subr.bf16.mxu0 %v981
          %1453 = vmatpush1.bf16.msra.mxu0 %v980
          %1454 = vmatprep.subr.bf16.mxu0 %v985
          %1455 = vmatpush1.bf16.msra.mxu0 %v984
          %1456 = vmatprep.subr.bf16.mxu0 %v989
          %1457 = vmatpush1.bf16.msra.mxu0 %v988
          %1458 = vmatprep.subr.bf16.mxu0 0
          %1459 = vmatpush1.bf16.msra.mxu0 0
          %1460 = vmatprep.subr.bf16.mxu0 0
          %1461 = vmatpush1.bf16.msra.mxu0 0
          %1462 = vmatprep.subr.bf16.mxu0 0
          %1463 = vmatpush1.bf16.msra.mxu0 0
          %1464 = vmatprep.subr.bf16.mxu0 0
          %1465 = vmatpush1.bf16.msra.mxu0 0
          %1466 = vmatprep.subr.bf16.mxu0 0
          %1467 = vmatpush1.bf16.msra.mxu0 0
          %1468 = vmatprep.subr.bf16.mxu0 0
          %1469 = vmatpush1.bf16.msra.mxu0 0
          %1470 = vmatprep.subr.bf16.mxu0 0
          %1471 = vmatpush1.bf16.msra.mxu0 0
          %1472 = vmatprep.subr.bf16.mxu0 0
          %1473 = vmatpush1.bf16.msra.mxu0 0
          %1474 = vmatprep.mubr.bf16.mxu0 0
          %1475 = vmatmul.mubr.bf16.gmra.mrb[0].mxu0 %v1400
          %v1476 = vpop.f32.mrb[0].mxu0
          %v1477 = vadd.f32 0.0, %v1476
          %v1478 = vpop.f32.mrb[0].mxu0
          %v1479 = vadd.f32 0.0, %v1478
          %v1480 = vpop.f32.mrb[0].mxu0
          %v1481 = vpop.f32.mrb[0].mxu0
          %1482 = vdwg.mxu0
          %v1483 = vadd.f32 %v1396, %v1436
          %v1484 = vadd.f32 %v1397, %v1438
          %v1485 = vadd.f32 %v1398, %v1477
          %v1486 = vadd.f32 %v1399, %v1479
          %v1487 = vxor.u32 %v1483, 2147483648
          %v1488 = vmul.f32 %v1487, 1.442695
          %v1489 = vpow.pop %v1488
          %v1490 = vadd.f32 %v1489, 1.0
          %v1491 = vrcp.pop %v1490
          %v1492 = vmul.f32 1.0, %v1491
          %v1493 = vxor.u32 %v1484, 2147483648
          %v1494 = vmul.f32 %v1493, 1.442695
          %v1495 = vpow.pop %v1494
          %v1496 = vadd.f32 %v1495, 1.0
          %v1497 = vrcp.pop %v1496
          %v1498 = vmul.f32 1.0, %v1497
          %v1499 = vtanh.pop %v1485
          %v1500 = vxor.u32 %v1486, 2147483648
          %v1501 = vmul.f32 %v1500, 1.442695
          %v1502 = vpow.pop %v1501
          %v1503 = vadd.f32 %v1502, 1.0
          %v1504 = vrcp.pop %v1503
          %v1505 = vmul.f32 1.0, %v1504
          %v1506 = vmul.f32 %v1498, %v1381
          %v1507 = vmul.f32 %v1492, %v1499
          %v1508 = vadd.f32 %v1506, %v1507
          %v1509 = vtanh.pop %v1508
          %v1510 = vmul.f32 %v1505, %v1509
          %s1511 = scalar_lea.vmem %s462, 24 [#allocation5]
          %v1512 = vld [vmem:[%s1511] sm:$0xff]
          %1514 = vset.pattern.permute.xlu0 0
          %1515 = vperm.xlu0 %1514, %v1512
          %v1516 = vpop.permute.xlu0 %1515
          %v1518 = vmul.f32 %v1510, %v1516
          %v1519 = vpack.c.bf16 %v1518, %v1518
          %s1520 = scalar_lea.vmem [#allocation3], 12
          %1521 = vst [vmem:[%s1520] sm:$0xf] %v1519
          %s1522 = scalar_lea.vmem [#allocation2], 128
          %v1523 = vld [vmem:[%s1522] sm:$0xff]
          %v1524 = vld [vmem:[%s1522 + $0x8] sm:$0xff]
          %v1525 = vld [vmem:[%s1522 + $0x10] sm:$0xff]
          %v1526 = vld [vmem:[%s1522 + $0x18] sm:$0xff]
          %v1527 = vpack.c.bf16 %v1510, %v1510
          %1528 = vmatprep.subr.bf16.mxu0 %v959
          %1529 = vmatpush1.bf16.msra.mxu0 %v958
          %1530 = vmatprep.subr.bf16.mxu0 %v963
          %1531 = vmatpush1.bf16.msra.mxu0 %v962
          %1532 = vmatprep.subr.bf16.mxu0 %v967
          %1533 = vmatpush1.bf16.msra.mxu0 %v966
          %1534 = vmatprep.subr.bf16.mxu0 %v971
          %1535 = vmatpush1.bf16.msra.mxu0 %v970
          %1536 = vmatprep.subr.bf16.mxu0 %v975
          %1537 = vmatpush1.bf16.msra.mxu0 %v974
          %1538 = vmatprep.subr.bf16.mxu0 %v979
          %1539 = vmatpush1.bf16.msra.mxu0 %v978
          %1540 = vmatprep.subr.bf16.mxu0 %v983
          %1541 = vmatpush1.bf16.msra.mxu0 %v982
          %1542 = vmatprep.subr.bf16.mxu0 %v987
          %1543 = vmatpush1.bf16.msra.mxu0 %v986
          %1544 = vmatprep.subr.bf16.mxu0 0
          %1545 = vmatpush1.bf16.msra.mxu0 0
          %1546 = vmatprep.subr.bf16.mxu0 0
          %1547 = vmatpush1.bf16.msra.mxu0 0
          %1548 = vmatprep.subr.bf16.mxu0 0
          %1549 = vmatpush1.bf16.msra.mxu0 0
          %1550 = vmatprep.subr.bf16.mxu0 0
          %1551 = vmatpush1.bf16.msra.mxu0 0
          %1552 = vmatprep.subr.bf16.mxu0 0
          %1553 = vmatpush1.bf16.msra.mxu0 0
          %1554 = vmatprep.subr.bf16.mxu0 0
          %1555 = vmatpush1.bf16.msra.mxu0 0
          %1556 = vmatprep.subr.bf16.mxu0 0
          %1557 = vmatpush1.bf16.msra.mxu0 0
          %1558 = vmatprep.subr.bf16.mxu0 0
          %1559 = vmatpush1.bf16.msra.mxu0 0
          %1560 = vmatprep.mubr.bf16.mxu0 0
          %1561 = vmatmul.mubr.bf16.gmra.mrb[0].mxu0 %v1527
          %v1562 = vpop.f32.mrb[0].mxu0
          %v1563 = vadd.f32 0.0, %v1562
          %v1564 = vpop.f32.mrb[0].mxu0
          %v1565 = vadd.f32 0.0, %v1564
          %v1566 = vpop.f32.mrb[0].mxu0
          %v1567 = vpop.f32.mrb[0].mxu0
          %1568 = vdwg.mxu0
          %1569 = vmatprep.subr.bf16.mxu0 %v961
          %1570 = vmatpush1.bf16.msra.mxu0 %v960
          %1571 = vmatprep.subr.bf16.mxu0 %v965
          %1572 = vmatpush1.bf16.msra.mxu0 %v964
          %1573 = vmatprep.subr.bf16.mxu0 %v969
          %1574 = vmatpush1.bf16.msra.mxu0 %v968
          %1575 = vmatprep.subr.bf16.mxu0 %v973
          %1576 = vmatpush1.bf16.msra.mxu0 %v972
          %1577 = vmatprep.subr.bf16.mxu0 %v977
          %1578 = vmatpush1.bf16.msra.mxu0 %v976
          %1579 = vmatprep.subr.bf16.mxu0 %v981
          %1580 = vmatpush1.bf16.msra.mxu0 %v980
          %1581 = vmatprep.subr.bf16.mxu0 %v985
          %1582 = vmatpush1.bf16.msra.mxu0 %v984
          %1583 = vmatprep.subr.bf16.mxu0 %v989
          %1584 = vmatpush1.bf16.msra.mxu0 %v988
          %1585 = vmatprep.subr.bf16.mxu0 0
          %1586 = vmatpush1.bf16.msra.mxu0 0
          %1587 = vmatprep.subr.bf16.mxu0 0
          %1588 = vmatpush1.bf16.msra.mxu0 0
          %1589 = vmatprep.subr.bf16.mxu0 0
          %1590 = vmatpush1.bf16.msra.mxu0 0
          %1591 = vmatprep.subr.bf16.mxu0 0
          %1592 = vmatpush1.bf16.msra.mxu0 0
          %1593 = vmatprep.subr.bf16.mxu0 0
          %1594 = vmatpush1.bf16.msra.mxu0 0
          %1595 = vmatprep.subr.bf16.mxu0 0
          %1596 = vmatpush1.bf16.msra.mxu0 0
          %1597 = vmatprep.subr.bf16.mxu0 0
          %1598 = vmatpush1.bf16.msra.mxu0 0
          %1599 = vmatprep.subr.bf16.mxu0 0
          %1600 = vmatpush1.bf16.msra.mxu0 0
          %1601 = vmatprep.mubr.bf16.mxu0 0
          %1602 = vmatmul.mubr.bf16.gmra.mrb[0].mxu0 %v1527
          %v1603 = vpop.f32.mrb[0].mxu0
          %v1604 = vadd.f32 0.0, %v1603
          %v1605 = vpop.f32.mrb[0].mxu0
          %v1606 = vadd.f32 0.0, %v1605
          %v1607 = vpop.f32.mrb[0].mxu0
          %v1608 = vpop.f32.mrb[0].mxu0
          %1609 = vdwg.mxu0
          %v1610 = vadd.f32 %v1523, %v1563
          %v1611 = vadd.f32 %v1524, %v1565
          %v1612 = vadd.f32 %v1525, %v1604
          %v1613 = vadd.f32 %v1526, %v1606
          %v1614 = vxor.u32 %v1610, 2147483648
          %v1615 = vmul.f32 %v1614, 1.442695
          %v1616 = vpow.pop %v1615
          %v1617 = vadd.f32 %v1616, 1.0
          %v1618 = vrcp.pop %v1617
          %v1619 = vmul.f32 1.0, %v1618
          %v1620 = vxor.u32 %v1611, 2147483648
          %v1621 = vmul.f32 %v1620, 1.442695
          %v1622 = vpow.pop %v1621
          %v1623 = vadd.f32 %v1622, 1.0
          %v1624 = vrcp.pop %v1623
          %v1625 = vmul.f32 1.0, %v1624
          %v1626 = vtanh.pop %v1612
          %v1627 = vxor.u32 %v1613, 2147483648
          %v1628 = vmul.f32 %v1627, 1.442695
          %v1629 = vpow.pop %v1628
          %v1630 = vadd.f32 %v1629, 1.0
          %v1631 = vrcp.pop %v1630
          %v1632 = vmul.f32 1.0, %v1631
          %v1633 = vmul.f32 %v1625, %v1508
          %v1634 = vmul.f32 %v1619, %v1626
          %v1635 = vadd.f32 %v1633, %v1634
          %v1636 = vtanh.pop %v1635
          %v1637 = vmul.f32 %v1632, %v1636
          %s1638 = scalar_lea.vmem %s462, 32 [#allocation5]
          %v1639 = vld [vmem:[%s1638] sm:$0xff]
          %1641 = vset.pattern.permute.xlu0 0
          %1642 = vperm.xlu0 %1641, %v1639
          %v1643 = vpop.permute.xlu0 %1642
          %v1645 = vmul.f32 %v1637, %v1643
          %v1646 = vpack.c.bf16 %v1645, %v1645
          %s1647 = scalar_lea.vmem [#allocation3], 16
          %1648 = vst [vmem:[%s1647] sm:$0xf] %v1646
          %s1649 = scalar_lea.vmem [#allocation2], 160
          %v1650 = vld [vmem:[%s1649] sm:$0xff]
          %v1651 = vld [vmem:[%s1649 + $0x8] sm:$0xff]
          %v1652 = vld [vmem:[%s1649 + $0x10] sm:$0xff]
          %v1653 = vld [vmem:[%s1649 + $0x18] sm:$0xff]
          %v1654 = vpack.c.bf16 %v1637, %v1637
          %1655 = vmatprep.subr.bf16.mxu0 %v959
          %1656 = vmatpush1.bf16.msra.mxu0 %v958
          %1657 = vmatprep.subr.bf16.mxu0 %v963
          %1658 = vmatpush1.bf16.msra.mxu0 %v962
          %1659 = vmatprep.subr.bf16.mxu0 %v967
          %1660 = vmatpush1.bf16.msra.mxu0 %v966
          %1661 = vmatprep.subr.bf16.mxu0 %v971
          %1662 = vmatpush1.bf16.msra.mxu0 %v970
          %1663 = vmatprep.subr.bf16.mxu0 %v975
          %1664 = vmatpush1.bf16.msra.mxu0 %v974
          %1665 = vmatprep.subr.bf16.mxu0 %v979
          %1666 = vmatpush1.bf16.msra.mxu0 %v978
          %1667 = vmatprep.subr.bf16.mxu0 %v983
          %1668 = vmatpush1.bf16.msra.mxu0 %v982
          %1669 = vmatprep.subr.bf16.mxu0 %v987
          %1670 = vmatpush1.bf16.msra.mxu0 %v986
          %1671 = vmatprep.subr.bf16.mxu0 0
          %1672 = vmatpush1.bf16.msra.mxu0 0
          %1673 = vmatprep.subr.bf16.mxu0 0
          %1674 = vmatpush1.bf16.msra.mxu0 0
          %1675 = vmatprep.subr.bf16.mxu0 0
          %1676 = vmatpush1.bf16.msra.mxu0 0
          %1677 = vmatprep.subr.bf16.mxu0 0
          %1678 = vmatpush1.bf16.msra.mxu0 0
          %1679 = vmatprep.subr.bf16.mxu0 0
          %1680 = vmatpush1.bf16.msra.mxu0 0
          %1681 = vmatprep.subr.bf16.mxu0 0
          %1682 = vmatpush1.bf16.msra.mxu0 0
          %1683 = vmatprep.subr.bf16.mxu0 0
          %1684 = vmatpush1.bf16.msra.mxu0 0
          %1685 = vmatprep.subr.bf16.mxu0 0
          %1686 = vmatpush1.bf16.msra.mxu0 0
          %1687 = vmatprep.mubr.bf16.mxu0 0
          %1688 = vmatmul.mubr.bf16.gmra.mrb[0].mxu0 %v1654
          %v1689 = vpop.f32.mrb[0].mxu0
          %v1690 = vadd.f32 0.0, %v1689
          %v1691 = vpop.f32.mrb[0].mxu0
          %v1692 = vadd.f32 0.0, %v1691
          %v1693 = vpop.f32.mrb[0].mxu0
          %v1694 = vpop.f32.mrb[0].mxu0
          %1695 = vdwg.mxu0
          %1696 = vmatprep.subr.bf16.mxu0 %v961
          %1697 = vmatpush1.bf16.msra.mxu0 %v960
          %1698 = vmatprep.subr.bf16.mxu0 %v965
          %1699 = vmatpush1.bf16.msra.mxu0 %v964
          %1700 = vmatprep.subr.bf16.mxu0 %v969
          %1701 = vmatpush1.bf16.msra.mxu0 %v968
          %1702 = vmatprep.subr.bf16.mxu0 %v973
          %1703 = vmatpush1.bf16.msra.mxu0 %v972
          %1704 = vmatprep.subr.bf16.mxu0 %v977
          %1705 = vmatpush1.bf16.msra.mxu0 %v976
          %1706 = vmatprep.subr.bf16.mxu0 %v981
          %1707 = vmatpush1.bf16.msra.mxu0 %v980
          %1708 = vmatprep.subr.bf16.mxu0 %v985
          %1709 = vmatpush1.bf16.msra.mxu0 %v984
          %1710 = vmatprep.subr.bf16.mxu0 %v989
          %1711 = vmatpush1.bf16.msra.mxu0 %v988
          %1712 = vmatprep.subr.bf16.mxu0 0
          %1713 = vmatpush1.bf16.msra.mxu0 0
          %1714 = vmatprep.subr.bf16.mxu0 0
          %1715 = vmatpush1.bf16.msra.mxu0 0
          %1716 = vmatprep.subr.bf16.mxu0 0
          %1717 = vmatpush1.bf16.msra.mxu0 0
          %1718 = vmatprep.subr.bf16.mxu0 0
          %1719 = vmatpush1.bf16.msra.mxu0 0
          %1720 = vmatprep.subr.bf16.mxu0 0
          %1721 = vmatpush1.bf16.msra.mxu0 0
          %1722 = vmatprep.subr.bf16.mxu0 0
          %1723 = vmatpush1.bf16.msra.mxu0 0
          %1724 = vmatprep.subr.bf16.mxu0 0
          %1725 = vmatpush1.bf16.msra.mxu0 0
          %1726 = vmatprep.subr.bf16.mxu0 0
          %1727 = vmatpush1.bf16.msra.mxu0 0
          %1728 = vmatprep.mubr.bf16.mxu0 0
          %1729 = vmatmul.mubr.bf16.gmra.mrb[0].mxu0 %v1654
          %v1730 = vpop.f32.mrb[0].mxu0
          %v1731 = vadd.f32 0.0, %v1730
          %v1732 = vpop.f32.mrb[0].mxu0
          %v1733 = vadd.f32 0.0, %v1732
          %v1734 = vpop.f32.mrb[0].mxu0
          %v1735 = vpop.f32.mrb[0].mxu0
          %1736 = vdwg.mxu0
          %v1737 = vadd.f32 %v1650, %v1690
          %v1738 = vadd.f32 %v1651, %v1692
          %v1739 = vadd.f32 %v1652, %v1731
          %v1740 = vadd.f32 %v1653, %v1733
          %v1741 = vxor.u32 %v1737, 2147483648
          %v1742 = vmul.f32 %v1741, 1.442695
          %v1743 = vpow.pop %v1742
          %v1744 = vadd.f32 %v1743, 1.0
          %v1745 = vrcp.pop %v1744
          %v1746 = vmul.f32 1.0, %v1745
          %v1747 = vxor.u32 %v1738, 2147483648
          %v1748 = vmul.f32 %v1747, 1.442695
          %v1749 = vpow.pop %v1748
          %v1750 = vadd.f32 %v1749, 1.0
          %v1751 = vrcp.pop %v1750
          %v1752 = vmul.f32 1.0, %v1751
          %v1753 = vtanh.pop %v1739
          %v1754 = vxor.u32 %v1740, 2147483648
          %v1755 = vmul.f32 %v1754, 1.442695
          %v1756 = vpow.pop %v1755
          %v1757 = vadd.f32 %v1756, 1.0
          %v1758 = vrcp.pop %v1757
          %v1759 = vmul.f32 1.0, %v1758
          %v1760 = vmul.f32 %v1752, %v1635
          %v1761 = vmul.f32 %v1746, %v1753
          %v1762 = vadd.f32 %v1760, %v1761
          %v1763 = vtanh.pop %v1762
          %v1764 = vmul.f32 %v1759, %v1763
          %s1765 = scalar_lea.vmem %s462, 40 [#allocation5]
          %v1766 = vld [vmem:[%s1765] sm:$0xff]
          %1768 = vset.pattern.permute.xlu0 0
          %1769 = vperm.xlu0 %1768, %v1766
          %v1770 = vpop.permute.xlu0 %1769
          %v1772 = vmul.f32 %v1764, %v1770
          %v1773 = vpack.c.bf16 %v1772, %v1772
          %s1774 = scalar_lea.vmem [#allocation3], 20
          %1775 = vst [vmem:[%s1774] sm:$0xf] %v1773
          %s1776 = scalar_lea.vmem [#allocation2], 192
          %v1777 = vld [vmem:[%s1776] sm:$0xff]
          %v1778 = vld [vmem:[%s1776 + $0x8] sm:$0xff]
          %v1779 = vld [vmem:[%s1776 + $0x10] sm:$0xff]
          %v1780 = vld [vmem:[%s1776 + $0x18] sm:$0xff]
          %v1781 = vpack.c.bf16 %v1764, %v1764
          %1782 = vmatprep.subr.bf16.mxu0 %v959
          %1783 = vmatpush1.bf16.msra.mxu0 %v958
          %1784 = vmatprep.subr.bf16.mxu0 %v963
          %1785 = vmatpush1.bf16.msra.mxu0 %v962
          %1786 = vmatprep.subr.bf16.mxu0 %v967
          %1787 = vmatpush1.bf16.msra.mxu0 %v966
          %1788 = vmatprep.subr.bf16.mxu0 %v971
          %1789 = vmatpush1.bf16.msra.mxu0 %v970
          %1790 = vmatprep.subr.bf16.mxu0 %v975
          %1791 = vmatpush1.bf16.msra.mxu0 %v974
          %1792 = vmatprep.subr.bf16.mxu0 %v979
          %1793 = vmatpush1.bf16.msra.mxu0 %v978
          %1794 = vmatprep.subr.bf16.mxu0 %v983
          %1795 = vmatpush1.bf16.msra.mxu0 %v982
          %1796 = vmatprep.subr.bf16.mxu0 %v987
          %1797 = vmatpush1.bf16.msra.mxu0 %v986
          %1798 = vmatprep.subr.bf16.mxu0 0
          %1799 = vmatpush1.bf16.msra.mxu0 0
          %1800 = vmatprep.subr.bf16.mxu0 0
          %1801 = vmatpush1.bf16.msra.mxu0 0
          %1802 = vmatprep.subr.bf16.mxu0 0
          %1803 = vmatpush1.bf16.msra.mxu0 0
          %1804 = vmatprep.subr.bf16.mxu0 0
          %1805 = vmatpush1.bf16.msra.mxu0 0
          %1806 = vmatprep.subr.bf16.mxu0 0
          %1807 = vmatpush1.bf16.msra.mxu0 0
          %1808 = vmatprep.subr.bf16.mxu0 0
          %1809 = vmatpush1.bf16.msra.mxu0 0
          %1810 = vmatprep.subr.bf16.mxu0 0
          %1811 = vmatpush1.bf16.msra.mxu0 0
          %1812 = vmatprep.subr.bf16.mxu0 0
          %1813 = vmatpush1.bf16.msra.mxu0 0
          %1814 = vmatprep.mubr.bf16.mxu0 0
          %1815 = vmatmul.mubr.bf16.gmra.mrb[0].mxu0 %v1781
          %v1816 = vpop.f32.mrb[0].mxu0
          %v1817 = vadd.f32 0.0, %v1816
          %v1818 = vpop.f32.mrb[0].mxu0
          %v1819 = vadd.f32 0.0, %v1818
          %v1820 = vpop.f32.mrb[0].mxu0
          %v1821 = vpop.f32.mrb[0].mxu0
          %1822 = vdwg.mxu0
          %1823 = vmatprep.subr.bf16.mxu0 %v961
          %1824 = vmatpush1.bf16.msra.mxu0 %v960
          %1825 = vmatprep.subr.bf16.mxu0 %v965
          %1826 = vmatpush1.bf16.msra.mxu0 %v964
          %1827 = vmatprep.subr.bf16.mxu0 %v969
          %1828 = vmatpush1.bf16.msra.mxu0 %v968
          %1829 = vmatprep.subr.bf16.mxu0 %v973
          %1830 = vmatpush1.bf16.msra.mxu0 %v972
          %1831 = vmatprep.subr.bf16.mxu0 %v977
          %1832 = vmatpush1.bf16.msra.mxu0 %v976
          %1833 = vmatprep.subr.bf16.mxu0 %v981
          %1834 = vmatpush1.bf16.msra.mxu0 %v980
          %1835 = vmatprep.subr.bf16.mxu0 %v985
          %1836 = vmatpush1.bf16.msra.mxu0 %v984
          %1837 = vmatprep.subr.bf16.mxu0 %v989
          %1838 = vmatpush1.bf16.msra.mxu0 %v988
          %1839 = vmatprep.subr.bf16.mxu0 0
          %1840 = vmatpush1.bf16.msra.mxu0 0
          %1841 = vmatprep.subr.bf16.mxu0 0
          %1842 = vmatpush1.bf16.msra.mxu0 0
          %1843 = vmatprep.subr.bf16.mxu0 0
          %1844 = vmatpush1.bf16.msra.mxu0 0
          %1845 = vmatprep.subr.bf16.mxu0 0
          %1846 = vmatpush1.bf16.msra.mxu0 0
          %1847 = vmatprep.subr.bf16.mxu0 0
          %1848 = vmatpush1.bf16.msra.mxu0 0
          %1849 = vmatprep.subr.bf16.mxu0 0
          %1850 = vmatpush1.bf16.msra.mxu0 0
          %1851 = vmatprep.subr.bf16.mxu0 0
          %1852 = vmatpush1.bf16.msra.mxu0 0
          %1853 = vmatprep.subr.bf16.mxu0 0
          %1854 = vmatpush1.bf16.msra.mxu0 0
          %1855 = vmatprep.mubr.bf16.mxu0 0
          %1856 = vmatmul.mubr.bf16.gmra.mrb[0].mxu0 %v1781
          %v1857 = vpop.f32.mrb[0].mxu0
          %v1858 = vadd.f32 0.0, %v1857
          %v1859 = vpop.f32.mrb[0].mxu0
          %v1860 = vadd.f32 0.0, %v1859
          %v1861 = vpop.f32.mrb[0].mxu0
          %v1862 = vpop.f32.mrb[0].mxu0
          %1863 = vdwg.mxu0
          %v1864 = vadd.f32 %v1777, %v1817
          %v1865 = vadd.f32 %v1778, %v1819
          %v1866 = vadd.f32 %v1779, %v1858
          %v1867 = vadd.f32 %v1780, %v1860
          %v1868 = vxor.u32 %v1864, 2147483648
          %v1869 = vmul.f32 %v1868, 1.442695
          %v1870 = vpow.pop %v1869
          %v1871 = vadd.f32 %v1870, 1.0
          %v1872 = vrcp.pop %v1871
          %v1873 = vmul.f32 1.0, %v1872
          %v1874 = vxor.u32 %v1865, 2147483648
          %v1875 = vmul.f32 %v1874, 1.442695
          %v1876 = vpow.pop %v1875
          %v1877 = vadd.f32 %v1876, 1.0
          %v1878 = vrcp.pop %v1877
          %v1879 = vmul.f32 1.0, %v1878
          %v1880 = vtanh.pop %v1866
          %v1881 = vxor.u32 %v1867, 2147483648
          %v1882 = vmul.f32 %v1881, 1.442695
          %v1883 = vpow.pop %v1882
          %v1884 = vadd.f32 %v1883, 1.0
          %v1885 = vrcp.pop %v1884
          %v1886 = vmul.f32 1.0, %v1885
          %v1887 = vmul.f32 %v1879, %v1762
          %v1888 = vmul.f32 %v1873, %v1880
          %v1889 = vadd.f32 %v1887, %v1888
          %v1890 = vtanh.pop %v1889
          %v1891 = vmul.f32 %v1886, %v1890
          %s1892 = scalar_lea.vmem %s462, 48 [#allocation5]
          %v1893 = vld [vmem:[%s1892] sm:$0xff]
          %1895 = vset.pattern.permute.xlu0 0
          %1896 = vperm.xlu0 %1895, %v1893
          %v1897 = vpop.permute.xlu0 %1896
          %v1899 = vmul.f32 %v1891, %v1897
          %v1900 = vpack.c.bf16 %v1899, %v1899
          %s1901 = scalar_lea.vmem [#allocation3], 24
          %1902 = vst [vmem:[%s1901] sm:$0xf] %v1900
          %s1903 = scalar_lea.vmem [#allocation2], 224
          %v1904 = vld [vmem:[%s1903] sm:$0xff]
          %v1905 = vld [vmem:[%s1903 + $0x8] sm:$0xff]
          %v1906 = vld [vmem:[%s1903 + $0x10] sm:$0xff]
          %v1907 = vld [vmem:[%s1903 + $0x18] sm:$0xff]
          %v1908 = vpack.c.bf16 %v1891, %v1891
          %1909 = vmatprep.subr.bf16.mxu0 %v959
          %1910 = vmatpush1.bf16.msra.mxu0 %v958
          %1911 = vmatprep.subr.bf16.mxu0 %v963
          %1912 = vmatpush1.bf16.msra.mxu0 %v962
          %1913 = vmatprep.subr.bf16.mxu0 %v967
          %1914 = vmatpush1.bf16.msra.mxu0 %v966
          %1915 = vmatprep.subr.bf16.mxu0 %v971
          %1916 = vmatpush1.bf16.msra.mxu0 %v970
          %1917 = vmatprep.subr.bf16.mxu0 %v975
          %1918 = vmatpush1.bf16.msra.mxu0 %v974
          %1919 = vmatprep.subr.bf16.mxu0 %v979
          %1920 = vmatpush1.bf16.msra.mxu0 %v978
          %1921 = vmatprep.subr.bf16.mxu0 %v983
          %1922 = vmatpush1.bf16.msra.mxu0 %v982
          %1923 = vmatprep.subr.bf16.mxu0 %v987
          %1924 = vmatpush1.bf16.msra.mxu0 %v986
          %1925 = vmatprep.subr.bf16.mxu0 0
          %1926 = vmatpush1.bf16.msra.mxu0 0
          %1927 = vmatprep.subr.bf16.mxu0 0
          %1928 = vmatpush1.bf16.msra.mxu0 0
          %1929 = vmatprep.subr.bf16.mxu0 0
          %1930 = vmatpush1.bf16.msra.mxu0 0
          %1931 = vmatprep.subr.bf16.mxu0 0
          %1932 = vmatpush1.bf16.msra.mxu0 0
          %1933 = vmatprep.subr.bf16.mxu0 0
          %1934 = vmatpush1.bf16.msra.mxu0 0
          %1935 = vmatprep.subr.bf16.mxu0 0
          %1936 = vmatpush1.bf16.msra.mxu0 0
          %1937 = vmatprep.subr.bf16.mxu0 0
          %1938 = vmatpush1.bf16.msra.mxu0 0
          %1939 = vmatprep.subr.bf16.mxu0 0
          %1940 = vmatpush1.bf16.msra.mxu0 0
          %1941 = vmatprep.mubr.bf16.mxu0 0
          %1942 = vmatmul.mubr.bf16.gmra.mrb[0].mxu0 %v1908
          %v1943 = vpop.f32.mrb[0].mxu0
          %v1944 = vadd.f32 0.0, %v1943
          %v1945 = vpop.f32.mrb[0].mxu0
          %v1946 = vadd.f32 0.0, %v1945
          %v1947 = vpop.f32.mrb[0].mxu0
          %v1948 = vpop.f32.mrb[0].mxu0
          %1949 = vdwg.mxu0
          %1950 = vmatprep.subr.bf16.mxu0 %v961
          %1951 = vmatpush1.bf16.msra.mxu0 %v960
          %1952 = vmatprep.subr.bf16.mxu0 %v965
          %1953 = vmatpush1.bf16.msra.mxu0 %v964
          %1954 = vmatprep.subr.bf16.mxu0 %v969
          %1955 = vmatpush1.bf16.msra.mxu0 %v968
          %1956 = vmatprep.subr.bf16.mxu0 %v973
          %1957 = vmatpush1.bf16.msra.mxu0 %v972
          %1958 = vmatprep.subr.bf16.mxu0 %v977
          %1959 = vmatpush1.bf16.msra.mxu0 %v976
          %1960 = vmatprep.subr.bf16.mxu0 %v981
          %1961 = vmatpush1.bf16.msra.mxu0 %v980
          %1962 = vmatprep.subr.bf16.mxu0 %v985
          %1963 = vmatpush1.bf16.msra.mxu0 %v984
          %1964 = vmatprep.subr.bf16.mxu0 %v989
          %1965 = vmatpush1.bf16.msra.mxu0 %v988
          %1966 = vmatprep.subr.bf16.mxu0 0
          %1967 = vmatpush1.bf16.msra.mxu0 0
          %1968 = vmatprep.subr.bf16.mxu0 0
          %1969 = vmatpush1.bf16.msra.mxu0 0
          %1970 = vmatprep.subr.bf16.mxu0 0
          %1971 = vmatpush1.bf16.msra.mxu0 0
          %1972 = vmatprep.subr.bf16.mxu0 0
          %1973 = vmatpush1.bf16.msra.mxu0 0
          %1974 = vmatprep.subr.bf16.mxu0 0
          %1975 = vmatpush1.bf16.msra.mxu0 0
          %1976 = vmatprep.subr.bf16.mxu0 0
          %1977 = vmatpush1.bf16.msra.mxu0 0
          %1978 = vmatprep.subr.bf16.mxu0 0
          %1979 = vmatpush1.bf16.msra.mxu0 0
          %1980 = vmatprep.subr.bf16.mxu0 0
          %1981 = vmatpush1.bf16.msra.mxu0 0
          %1982 = vmatprep.mubr.bf16.mxu0 0
          %1983 = vmatmul.mubr.bf16.gmra.mrb[0].mxu0 %v1908
          %v1984 = vpop.f32.mrb[0].mxu0
          %v1985 = vadd.f32 0.0, %v1984
          %v1986 = vpop.f32.mrb[0].mxu0
          %v1987 = vadd.f32 0.0, %v1986
          %v1988 = vpop.f32.mrb[0].mxu0
          %v1989 = vpop.f32.mrb[0].mxu0
          %1990 = vdwg.mxu0
          %v1991 = vadd.f32 %v1904, %v1944
          %v1992 = vadd.f32 %v1905, %v1946
          %v1993 = vadd.f32 %v1906, %v1985
          %v1994 = vadd.f32 %v1907, %v1987
          %v1995 = vxor.u32 %v1991, 2147483648
          %v1996 = vmul.f32 %v1995, 1.442695
          %v1997 = vpow.pop %v1996
          %v1998 = vadd.f32 %v1997, 1.0
          %v1999 = vrcp.pop %v1998
          %v2000 = vmul.f32 1.0, %v1999
          %v2001 = vxor.u32 %v1992, 2147483648
          %v2002 = vmul.f32 %v2001, 1.442695
          %v2003 = vpow.pop %v2002
          %v2004 = vadd.f32 %v2003, 1.0
          %v2005 = vrcp.pop %v2004
          %v2006 = vmul.f32 1.0, %v2005
          %v2007 = vtanh.pop %v1993
          %v2008 = vxor.u32 %v1994, 2147483648
          %v2009 = vmul.f32 %v2008, 1.442695
          %v2010 = vpow.pop %v2009
          %v2011 = vadd.f32 %v2010, 1.0
          %v2012 = vrcp.pop %v2011
          %v2013 = vmul.f32 1.0, %v2012
          %v2014 = vmul.f32 %v2006, %v1889
          %v2015 = vmul.f32 %v2000, %v2007
          %v2016 = vadd.f32 %v2014, %v2015
          %v2017 = vtanh.pop %v2016
          %v2018 = vmul.f32 %v2013, %v2017
          %s2019 = scalar_lea.vmem %s462, 56 [#allocation5]
          %v2020 = vld [vmem:[%s2019] sm:$0xff]
          %2022 = vset.pattern.permute.xlu0 0
          %2023 = vperm.xlu0 %2022, %v2020
          %v2024 = vpop.permute.xlu0 %2023
          %v2026 = vmul.f32 %v2018, %v2024
          %v2027 = vpack.c.bf16 %v2026, %v2026
          %s2028 = scalar_lea.vmem [#allocation3], 28
          %2029 = vst [vmem:[%s2028] sm:$0xf] %v2027
          %s2030 = scalar_lea.vmem [#allocation2], 256
          %v2031 = vld [vmem:[%s2030] sm:$0xff]
          %v2032 = vld [vmem:[%s2030 + $0x8] sm:$0xff]
          %v2033 = vld [vmem:[%s2030 + $0x10] sm:$0xff]
          %v2034 = vld [vmem:[%s2030 + $0x18] sm:$0xff]
          %v2035 = vpack.c.bf16 %v2018, %v2018
          %2036 = vmatprep.subr.bf16.mxu0 %v959
          %2037 = vmatpush1.bf16.msra.mxu0 %v958
          %2038 = vmatprep.subr.bf16.mxu0 %v963
          %2039 = vmatpush1.bf16.msra.mxu0 %v962
          %2040 = vmatprep.subr.bf16.mxu0 %v967
          %2041 = vmatpush1.bf16.msra.mxu0 %v966
          %2042 = vmatprep.subr.bf16.mxu0 %v971
          %2043 = vmatpush1.bf16.msra.mxu0 %v970
          %2044 = vmatprep.subr.bf16.mxu0 %v975
          %2045 = vmatpush1.bf16.msra.mxu0 %v974
          %2046 = vmatprep.subr.bf16.mxu0 %v979
          %2047 = vmatpush1.bf16.msra.mxu0 %v978
          %2048 = vmatprep.subr.bf16.mxu0 %v983
          %2049 = vmatpush1.bf16.msra.mxu0 %v982
          %2050 = vmatprep.subr.bf16.mxu0 %v987
          %2051 = vmatpush1.bf16.msra.mxu0 %v986
          %2052 = vmatprep.subr.bf16.mxu0 0
          %2053 = vmatpush1.bf16.msra.mxu0 0
          %2054 = vmatprep.subr.bf16.mxu0 0
          %2055 = vmatpush1.bf16.msra.mxu0 0
          %2056 = vmatprep.subr.bf16.mxu0 0
          %2057 = vmatpush1.bf16.msra.mxu0 0
          %2058 = vmatprep.subr.bf16.mxu0 0
          %2059 = vmatpush1.bf16.msra.mxu0 0
          %2060 = vmatprep.subr.bf16.mxu0 0
          %2061 = vmatpush1.bf16.msra.mxu0 0
          %2062 = vmatprep.subr.bf16.mxu0 0
          %2063 = vmatpush1.bf16.msra.mxu0 0
          %2064 = vmatprep.subr.bf16.mxu0 0
          %2065 = vmatpush1.bf16.msra.mxu0 0
          %2066 = vmatprep.subr.bf16.mxu0 0
          %2067 = vmatpush1.bf16.msra.mxu0 0
          %2068 = vmatprep.mubr.bf16.mxu0 0
          %2069 = vmatmul.mubr.bf16.gmra.mrb[0].mxu0 %v2035
          %v2070 = vpop.f32.mrb[0].mxu0
          %v2071 = vadd.f32 0.0, %v2070
          %v2072 = vpop.f32.mrb[0].mxu0
          %v2073 = vadd.f32 0.0, %v2072
          %v2074 = vpop.f32.mrb[0].mxu0
          %v2075 = vpop.f32.mrb[0].mxu0
          %2076 = vdwg.mxu0
          %2077 = vmatprep.subr.bf16.mxu0 %v961
          %2078 = vmatpush1.bf16.msra.mxu0 %v960
          %2079 = vmatprep.subr.bf16.mxu0 %v965
          %2080 = vmatpush1.bf16.msra.mxu0 %v964
          %2081 = vmatprep.subr.bf16.mxu0 %v969
          %2082 = vmatpush1.bf16.msra.mxu0 %v968
          %2083 = vmatprep.subr.bf16.mxu0 %v973
          %2084 = vmatpush1.bf16.msra.mxu0 %v972
          %2085 = vmatprep.subr.bf16.mxu0 %v977
          %2086 = vmatpush1.bf16.msra.mxu0 %v976
          %2087 = vmatprep.subr.bf16.mxu0 %v981
          %2088 = vmatpush1.bf16.msra.mxu0 %v980
          %2089 = vmatprep.subr.bf16.mxu0 %v985
          %2090 = vmatpush1.bf16.msra.mxu0 %v984
          %2091 = vmatprep.subr.bf16.mxu0 %v989
          %2092 = vmatpush1.bf16.msra.mxu0 %v988
          %2093 = vmatprep.subr.bf16.mxu0 0
          %2094 = vmatpush1.bf16.msra.mxu0 0
          %2095 = vmatprep.subr.bf16.mxu0 0
          %2096 = vmatpush1.bf16.msra.mxu0 0
          %2097 = vmatprep.subr.bf16.mxu0 0
          %2098 = vmatpush1.bf16.msra.mxu0 0
          %2099 = vmatprep.subr.bf16.mxu0 0
          %2100 = vmatpush1.bf16.msra.mxu0 0
          %2101 = vmatprep.subr.bf16.mxu0 0
          %2102 = vmatpush1.bf16.msra.mxu0 0
          %2103 = vmatprep.subr.bf16.mxu0 0
          %2104 = vmatpush1.bf16.msra.mxu0 0
          %2105 = vmatprep.subr.bf16.mxu0 0
          %2106 = vmatpush1.bf16.msra.mxu0 0
          %2107 = vmatprep.subr.bf16.mxu0 0
          %2108 = vmatpush1.bf16.msra.mxu0 0
          %2109 = vmatprep.mubr.bf16.mxu0 0
          %2110 = vmatmul.mubr.bf16.gmra.mrb[0].mxu0 %v2035
          %v2111 = vpop.f32.mrb[0].mxu0
          %v2112 = vadd.f32 0.0, %v2111
          %v2113 = vpop.f32.mrb[0].mxu0
          %v2114 = vadd.f32 0.0, %v2113
          %v2115 = vpop.f32.mrb[0].mxu0
          %v2116 = vpop.f32.mrb[0].mxu0
          %2117 = vdwg.mxu0
          %v2118 = vadd.f32 %v2031, %v2071
          %v2119 = vadd.f32 %v2032, %v2073
          %v2120 = vadd.f32 %v2033, %v2112
          %v2121 = vadd.f32 %v2034, %v2114
          %v2122 = vxor.u32 %v2118, 2147483648
          %v2123 = vmul.f32 %v2122, 1.442695
          %v2124 = vpow.pop %v2123
          %v2125 = vadd.f32 %v2124, 1.0
          %v2126 = vrcp.pop %v2125
          %v2127 = vmul.f32 1.0, %v2126
          %v2128 = vxor.u32 %v2119, 2147483648
          %v2129 = vmul.f32 %v2128, 1.442695
          %v2130 = vpow.pop %v2129
          %v2131 = vadd.f32 %v2130, 1.0
          %v2132 = vrcp.pop %v2131
          %v2133 = vmul.f32 1.0, %v2132
          %v2134 = vtanh.pop %v2120
          %v2135 = vxor.u32 %v2121, 2147483648
          %v2136 = vmul.f32 %v2135, 1.442695
          %v2137 = vpow.pop %v2136
          %v2138 = vadd.f32 %v2137, 1.0
          %v2139 = vrcp.pop %v2138
          %v2140 = vmul.f32 1.0, %v2139
          %v2141 = vmul.f32 %v2133, %v2016
          %v2142 = vmul.f32 %v2127, %v2134
          %v2143 = vadd.f32 %v2141, %v2142
          %v2144 = vtanh.pop %v2143
          %v2145 = vmul.f32 %v2140, %v2144
          %s2146 = scalar_lea.vmem %s462, 64 [#allocation5]
          %v2147 = vld [vmem:[%s2146] sm:$0xff]
          %2149 = vset.pattern.permute.xlu0 0
          %2150 = vperm.xlu0 %2149, %v2147
          %v2151 = vpop.permute.xlu0 %2150
          %v2153 = vmul.f32 %v2145, %v2151
          %v2154 = vpack.c.bf16 %v2153, %v2153
          %s2155 = scalar_lea.vmem [#allocation3], 32
          %2156 = vst [vmem:[%s2155] sm:$0xf] %v2154
        $region140: #{tpu_custom_call.1} parent=115 // pred_fallthru
          _
        %v2157 = vld [vmem:[#allocation3] sm:$0xf]
        %v2158 = vld [vmem:[#allocation3 + $0x4] sm:$0xf]
        %v2159 = vld [vmem:[#allocation3 + $0x8] sm:$0xf]
        %v2160 = vld [vmem:[#allocation3 + $0xc] sm:$0xf]
        %v2161 = vld [vmem:[#allocation3 + $0x10] sm:$0xf]
        %v2162 = vld [vmem:[#allocation3 + $0x14] sm:$0xf]
        %v2163 = vld [vmem:[#allocation3 + $0x18] sm:$0xf]
        %v2164 = vld [vmem:[#allocation3 + $0x1c] sm:$0xf]
        %v2165 = vld [vmem:[#allocation3 + $0x20] sm:$0xf]
        %v2166 = vld [vmem:[%s478] sm:$0xf]
        %v2167 = vld [vmem:[%s478 + $0x4] sm:$0xf]
        %v2168 = vld [vmem:[%s478 + $0x8] sm:$0xf]
        %v2169 = vld [vmem:[%s478 + $0xc] sm:$0xf]
        %v2170 = vld [vmem:[%s478 + $0x10] sm:$0xf]
        %v2171 = vld [vmem:[%s478 + $0x14] sm:$0xf]
        %v2172 = vld [vmem:[%s478 + $0x18] sm:$0xf]
        %v2173 = vld [vmem:[%s478 + $0x1c] sm:$0xf]
        %v2174 = vld [vmem:[%s478 + $0x20] sm:$0xf]
        %v2175 = vld [vmem:[%s478 + $0x24] sm:$0xf]
        %v2176 = vld [vmem:[%s478 + $0x28] sm:$0xf]
        %v2177 = vld [vmem:[%s478 + $0x2c] sm:$0xf]
        %v2178 = vld [vmem:[%s478 + $0x30] sm:$0xf]
        %v2179 = vld [vmem:[%s478 + $0x34] sm:$0xf]
        %v2180 = vld [vmem:[%s478 + $0x38] sm:$0xf]
        %v2181 = vld [vmem:[%s478 + $0x3c] sm:$0xf]
        %v2182 = vld [vmem:[%s522] sm:$0x1]
        %v2184 = vlaneseq
        %v2185 = vshrl.u32 %v2184, 7
        %v2186 = vsub.s32 0, %v2185
        %v2187 = vrot.slane %v2182, %v2186
        %v2198 = vunpack.c.l.b16 %v2157
        %v2199 = vunpack.c.l.b16 %v2158
        %v2200 = vunpack.c.l.b16 %v2159
        %v2201 = vunpack.c.l.b16 %v2160
        %v2202 = vunpack.c.l.b16 %v2161
        %v2203 = vunpack.c.l.b16 %v2162
        %v2204 = vunpack.c.l.b16 %v2163
        %v2205 = vunpack.c.l.b16 %v2164
        %v2206 = vunpack.c.l.b16 %v2165
        %v2207 = vpack.c.b16 %v2199, %v2198
        %v2208 = vpack.c.b16 %v2201, %v2200
        %v2209 = vpack.c.b16 %v2203, %v2202
        %v2210 = vpack.c.b16 %v2205, %v2204
        %v2211 = vpack.c.b16 %v2206, %v2206
        %v2233 = vunpack.c.l.b16 %v2166
        %v2234 = vunpack.c.l.b16 %v2167
        %v2235 = vunpack.c.l.b16 %v2168
        %v2236 = vunpack.c.l.b16 %v2169
        %v2237 = vunpack.c.l.b16 %v2170
        %v2238 = vunpack.c.l.b16 %v2171
        %v2239 = vunpack.c.l.b16 %v2172
        %v2240 = vunpack.c.l.b16 %v2173
        %v2241 = vunpack.c.l.b16 %v2174
        %v2242 = vunpack.c.l.b16 %v2175
        %v2243 = vunpack.c.l.b16 %v2176
        %v2244 = vunpack.c.l.b16 %v2177
        %v2245 = vunpack.c.l.b16 %v2178
        %v2246 = vunpack.c.l.b16 %v2179
        %v2247 = vunpack.c.l.b16 %v2180
        %v2248 = vunpack.c.l.b16 %v2181
        %v2249 = vpack.c.b16 %v2234, %v2233
        %v2250 = vpack.c.b16 %v2236, %v2235
        %v2251 = vpack.c.b16 %v2238, %v2237
        %v2252 = vpack.c.b16 %v2240, %v2239
        %v2253 = vpack.c.b16 %v2242, %v2241
        %v2254 = vpack.c.b16 %v2244, %v2243
        %v2255 = vpack.c.b16 %v2246, %v2245
        %v2256 = vpack.c.b16 %v2248, %v2247
        %2265 = vmatprep.subr.bf16.mxu0 0
        %2266 = vmatpush1.bf16.msra.mxu0 %v2249
        %2267 = vmatprep.subr.bf16.mxu0 0
        %2268 = vmatpush1.bf16.msra.mxu0 %v2250
        %2269 = vmatprep.subr.bf16.mxu0 0
        %2270 = vmatpush1.bf16.msra.mxu0 %v2251
        %2271 = vmatprep.subr.bf16.mxu0 0
        %2272 = vmatpush1.bf16.msra.mxu0 %v2252
        %2273 = vmatprep.subr.bf16.mxu0 0
        %2274 = vmatpush1.bf16.msra.mxu0 %v2253
        %2275 = vmatprep.subr.bf16.mxu0 0
        %2276 = vmatpush1.bf16.msra.mxu0 %v2254
        %2277 = vmatprep.subr.bf16.mxu0 0
        %2278 = vmatpush1.bf16.msra.mxu0 %v2255
        %2279 = vmatprep.subr.bf16.mxu0 0
        %2280 = vmatpush1.bf16.msra.mxu0 %v2256
        %2281 = vmatprep.subr.bf16.mxu0 0
        %2282 = vmatpush1.bf16.msra.mxu0 0
        %2283 = vmatprep.subr.bf16.mxu0 0
        %2284 = vmatpush1.bf16.msra.mxu0 0
        %2285 = vmatprep.subr.bf16.mxu0 0
        %2286 = vmatpush1.bf16.msra.mxu0 0
        %2287 = vmatprep.subr.bf16.mxu0 0
        %2288 = vmatpush1.bf16.msra.mxu0 0
        %2289 = vmatprep.subr.bf16.mxu0 0
        %2290 = vmatpush1.bf16.msra.mxu0 0
        %2291 = vmatprep.subr.bf16.mxu0 0
        %2292 = vmatpush1.bf16.msra.mxu0 0
        %2293 = vmatprep.subr.bf16.mxu0 0
        %2294 = vmatpush1.bf16.msra.mxu0 0
        %2295 = vmatprep.subr.bf16.mxu0 0
        %2296 = vmatpush1.bf16.msra.mxu0 0
        %2297 = vmatprep.mubr.bf16.mxu0 0
        %2298 = vmatmul.mubr.bf16.gmra.mrb[0].mxu0 %v2207
        %v2299 = vpop.f32.mrb[0].mxu0
        %v2300 = vadd.f32 %v2187, %v2299
        %v2301 = vpop.f32.mrb[0].mxu0
        %v2302 = vpop.f32.mrb[0].mxu0
        %v2303 = vadd.f32 %v2187, %v2302
        %v2304 = vpop.f32.mrb[0].mxu0
        %2305 = vmatprep.mubr.bf16.mxu0 0
        %2306 = vmatmul.mubr.bf16.gmra.mrb[0].mxu0 %v2208
        %v2307 = vpop.f32.mrb[0].mxu0
        %v2308 = vadd.f32 %v2187, %v2307
        %v2309 = vpop.f32.mrb[0].mxu0
        %v2310 = vpop.f32.mrb[0].mxu0
        %v2311 = vadd.f32 %v2187, %v2310
        %v2312 = vpop.f32.mrb[0].mxu0
        %2313 = vmatprep.mubr.bf16.mxu0 0
        %2314 = vmatmul.mubr.bf16.gmra.mrb[0].mxu0 %v2209
        %v2315 = vpop.f32.mrb[0].mxu0
        %v2316 = vadd.f32 %v2187, %v2315
        %v2317 = vpop.f32.mrb[0].mxu0
        %v2318 = vpop.f32.mrb[0].mxu0
        %v2319 = vadd.f32 %v2187, %v2318
        %v2320 = vpop.f32.mrb[0].mxu0
        %2321 = vmatprep.mubr.bf16.mxu0 0
        %2322 = vmatmul.mubr.bf16.gmra.mrb[0].mxu0 %v2210
        %v2323 = vpop.f32.mrb[0].mxu0
        %v2324 = vadd.f32 %v2187, %v2323
        %v2325 = vpop.f32.mrb[0].mxu0
        %v2326 = vpop.f32.mrb[0].mxu0
        %v2327 = vadd.f32 %v2187, %v2326
        %v2328 = vpop.f32.mrb[0].mxu0
        %2329 = vmatprep.mubr.bf16.mxu0 0
        %2330 = vmatmul.mubr.bf16.gmra.mrb[0].mxu0 %v2211
        %v2331 = vpop.f32.mrb[0].mxu0
        %v2332 = vadd.f32 %v2187, %v2331
        %v2333 = vpop.f32.mrb[0].mxu0
        %v2334 = vpop.f32.mrb[0].mxu0
        %v2335 = vpop.f32.mrb[0].mxu0
        %2336 = vdwg.mxu0
        %2337 = vst [vmem:[%s519] sm:$0xff] %v2300
        %2338 = vst [vmem:[%s519 + $0x8] sm:$0xff] %v2303
        %2339 = vst [vmem:[%s519 + $0x10] sm:$0xff] %v2308
        %2340 = vst [vmem:[%s519 + $0x18] sm:$0xff] %v2311
        %2341 = vst [vmem:[%s519 + $0x20] sm:$0xff] %v2316
        %2342 = vst [vmem:[%s519 + $0x28] sm:$0xff] %v2319
        %2343 = vst [vmem:[%s519 + $0x30] sm:$0xff] %v2324
        %2344 = vst [vmem:[%s519 + $0x38] sm:$0xff] %v2327
        %2345 = vst [vmem:[%s519 + $0x40] sm:$0xff] %v2332
        %s2346 = sand.u32 %s212, 1
        %s2347 = scalar_lea.sflag [#allocation8], %s2346
        %s2348 = sand.u32 %s212, 1
        %s2349 = smul.addr %s2348, 72
        %s2350 = scalar_lea.vmem [#allocation12], %s2349
        // Predicated region
        $region141: #{tpu_custom_call.1} parent=115 // pred_check
          %p2351 = pneg %p222
        $region142: #{tpu_custom_call.1} parent=115 // pred_check_branch
          %2353 = sbr.rel (%p2351) target = $region144
        $region143: #{tpu_custom_call.1} parent=115 // pred_region
          %s2355 = ssub.s32 1152, 1152
          %2356 = vsyncadd %s2347, %s2355
          %s2357 = smul.addr %s27, 2
          %s2358 = sadd.s32 %s28, %s2357
          %s2359 = smul.addr %s2358, 128
          %s2360 = scalar_lea.hbm %s7, %s2359
          %s2361 = sshll.u32 %s2350, 4
          %s2362 = int_to_ptr.vmem [resolvable:$true] %s2361
          %2367 = dma.vmem_to_hbm [thread:$0]  %s2362, 1152, %s2360, %s2347, 128, 512, 8
        $region144: #{tpu_custom_call.1} parent=115 // pred_fallthru
          _
      $region116: #{tpu_custom_call.1} parent=5 // pred_fallthru
        _
      %p2368 = scmp.le.s32.totalorder 2, %s18
      // Predicated region
      $region145: #{tpu_custom_call.1} parent=5 // pred_check
        %p2369 = pneg %p2368
      $region146: #{tpu_custom_call.1} parent=5 // pred_check_branch
        %2371 = sbr.rel (%p2369) target = $region148
      $region147: #{tpu_custom_call.1} parent=5 // pred_region
        %s2372 = ssub.s32 %s18, 2
        // Predicated region
        $region149: #{tpu_custom_call.1} parent=147 // pred_check
          %p2373 = pneg %p228
        $region150: #{tpu_custom_call.1} parent=147 // pred_check_branch
          %2375 = sbr.rel (%p2373) target = $region152
        $region151: #{tpu_custom_call.1} parent=147 // pred_region
          %s2376 = sand.u32 %s213, 1
          %s2377 = scalar_lea.sflag [#allocation8], %s2376
          %s2378 = sand.u32 %s213, 1
          %s2379 = smul.addr %s2378, 72
          %s2380 = scalar_lea.vmem [#allocation12], %s2379
          %2381 = dma.done %s2377, 1152
        $region152: #{tpu_custom_call.1} parent=147 // pred_fallthru
          _
      $region148: #{tpu_custom_call.1} parent=5 // pred_fallthru
        _
    $region6: #{tpu_custom_call.1} parent=1 // loop_footer
      %s22 = sadd.s32 1, %s18
    $region7: #{tpu_custom_call.1} parent=1 // loop_footer_branch
      %17 = sbr.rel target = $region3
    $region8: #{tpu_custom_call.1} parent=1 // loop_exit
      _
    %2382 = vsyncpa [#allocation7], 1
    %s2383 = scalar_lea.sflag [#allocation7], 1
    %2384 = vsyncpa %s2383, 1
    %2385 = vsyncpa [#allocation10], 1
    %2386 = vsyncpa [#allocation8], 1
    %s2387 = scalar_lea.sflag [#allocation8], 1
    %2388 = vsyncpa %s2387, 1

</llo_original>
